<compile_context>
chip_gen: v7x
topology: tpu7x:2x2x1
jax: 0.10.0
libtpu: 0.0.40
codegen_flags: <defaults>
</compile_context>

<pallas_src>
import functools

import jax
import jax.numpy as jnp
from jax import lax
from jax.experimental import pallas as pl
from jax.experimental.pallas import tpu as pltpu

BN_EPS = 1e-5


# --------------------------------------------------------------------------------------
# Fused Pallas kernel: avgpool2x2 -> C3(cv1,cv2, Bottleneck(m_cv1,m_cv2)+res, cv3)
# --------------------------------------------------------------------------------------
def _fused_c3_kernel(x_ref, w12_ref, s12_ref, b12_ref,
                     wm1_ref, sm1_ref, bm1_ref,
                     wm2_ref, sm2_ref, bm2_ref,
                     w3a_ref, w3b_ref, s3_ref, b3_ref,
                     o_ref, pad_ref, *, Ho, Wo, c_, act, pool):
    M = Ho * Wo

    def silu(v):
        return v * (1.0 / (1.0 + jnp.exp(-v)))   # exact (keeps fp32 parity with reference)

    # ---- AvgPool2d(2,2) fused in: VPU pair-adds, no HBM round trip, no selector matmul.
    if pool:
        x5 = x_ref[0].astype(jnp.float32)                # (Ho, 2, W, Cin), W = 2*Wo
        r = x5[:, 0] + x5[:, 1]                          # H-pair sum      (Ho, W, Cin)
        rr = r.reshape(Ho, Wo, 2, r.shape[-1])           # split W -> (Wo, 2)
        xin = 0.25 * (rr[:, :, 0, :] + rr[:, :, 1, :])   # W-pair sum      (Ho, Wo, Cin)
    else:
        xin = x_ref[0].astype(jnp.float32)               # (Ho, Wo, Cin)
    xf = xin.reshape(M, xin.shape[-1])                   # (M, Cin)

    # ---- cv1 and cv2 merged into one matmul (weights concatenated along Cout).
    y12 = jnp.dot(xf, w12_ref[...], preferred_element_type=jnp.float32)
    y12 = y12 * s12_ref[...] + b12_ref[...]
    if act:
        y12 = silu(y12)
    y1 = y12[:, :c_]                                     # (M, c_)  -> bottleneck branch
    y2 = y12[:, c_:]                                     # (M, c_)  -> bypass branch

    # ---- Bottleneck cv1 (1x1 Conv->BN->SiLU).
    t1 = jnp.dot(y1, wm1_ref[...], preferred_element_type=jnp.float32)
    t1 = silu(t1 * sm1_ref[...] + bm1_ref[...])          # (M, c_)

    # ---- Bottleneck cv2 (3x3, SAME) on a zero-padded VMEM scratch; all taps stay in VMEM.
    pad_ref[...] = jnp.zeros_like(pad_ref)
    pad_ref[1:Ho + 1, 1:Wo + 1, :] = t1.reshape(Ho, Wo, c_)
    acc = jnp.zeros((M, c_), jnp.float32)
    for t in range(9):
        ky, kx = t // 3, t % 3
        tap = pad_ref[ky:ky + Ho, kx:kx + Wo, :]          # (Ho, Wo, c_)
        acc = acc + jnp.dot(tap.reshape(M, c_), wm2_ref[t],
                            preferred_element_type=jnp.float32)
    mb = silu(acc * sm2_ref[...] + bm2_ref[...]) + y1     # BN+SiLU, then residual add

    # ---- cv3 on cat([m, y2]) expressed as a split matmul (no materialized concat).
    o = (jnp.dot(mb, w3a_ref[...], preferred_element_type=jnp.float32)
         + jnp.dot(y2, w3b_ref[...], preferred_element_type=jnp.float32))
    o = o * s3_ref[...] + b3_ref[...]
    if act:
        o = silu(o)
    o_ref[0] = o.astype(o_ref.dtype)                      # (M, out_ch)


# --------------------------------------------------------------------------------------
# Parameter construction (PyTorch-layout weights) and BN folding
# --------------------------------------------------------------------------------------
def _init_conv_bn(key, cin, cout, k):
    kw, kg, kb, km, kv = jax.random.split(key, 5)
    w_pt = 0.3 * jax.random.normal(kw, (cout, cin, k, k), jnp.float32)   # (O, I, kh, kw)
    gamma = 1.0 + 0.1 * jax.random.normal(kg, (cout,), jnp.float32)
    beta = 0.1 * jax.random.normal(kb, (cout,), jnp.float32)
    mean = 0.1 * jax.random.normal(km, (cout,), jnp.float32)
    var = jnp.abs(jax.random.normal(kv, (cout,), jnp.float32)) + 0.5
    return dict(w=w_pt, gamma=gamma, beta=beta, mean=mean, var=var)


def _fold_bn(p):
    scale = p["gamma"] / jnp.sqrt(p["var"] + BN_EPS)
    bias = p["beta"] - p["mean"] * scale
    return scale[None, :], bias[None, :]


def _w1x1(p):
    return p["w"][:, :, 0, 0].T                                          # (Cin, Cout)


def _w3x3(p):
    cout, cin = p["w"].shape[0], p["w"].shape[1]
    return jnp.transpose(p["w"], (2, 3, 1, 0)).reshape(9, cin, cout)     # tap-major


# --------------------------------------------------------------------------------------
# Forward pass (single fused pallas_call) and pure-JAX reference
# --------------------------------------------------------------------------------------
def double_conv_c3_forward(x_nchw, params, *, stride=2, act=True):
    # NOTE: the PyTorch forward only works for stride > 1 (self.down otherwise undefined);
    # stride == 1 is supported here by simply skipping the pool.
    x = jnp.transpose(x_nchw, (0, 2, 3, 1)).astype(jnp.float32)          # NCHW -> NHWC
    N, H, W, Cin = x.shape
    pool = stride > 1
    if pool:
        assert H % 2 == 0 and W % 2 == 0, "AvgPool2d(2,2) path expects even H, W"
        Ho, Wo = H // 2, W // 2
        x_in = x.reshape(N, Ho, 2, W, Cin)          # free metadata reshape (splits H)
        x_spec = pl.BlockSpec((1, Ho, 2, W, Cin), lambda n: (n, 0, 0, 0, 0))
    else:
        Ho, Wo = H, W
        x_in = x
        x_spec = pl.BlockSpec((1, Ho, Wo, Cin), lambda n: (n, 0, 0, 0))
    M = Ho * Wo

    # Fold BN and pack weights (cv1/cv2 merged along Cout; cv3 split along Cin).
    s1, b1 = _fold_bn(params["cv1"])
    s2, b2 = _fold_bn(params["cv2"])
    w12 = jnp.concatenate([_w1x1(params["cv1"]), _w1x1(params["cv2"])], axis=1)
    s12 = jnp.concatenate([s1, s2], axis=1)
    b12 = jnp.concatenate([b1, b2], axis=1)
    wm1 = _w1x1(params["m_cv1"]); sm1, bm1 = _fold_bn(params["m_cv1"])
    wm2 = _w3x3(params["m_cv2"]); sm2, bm2 = _fold_bn(params["m_cv2"])
    w3 = _w1x1(params["cv3"]);    s3, b3 = _fold_bn(params["cv3"])
    c_ = wm1.shape[0]
    out_ch = w3.shape[1]
    w3a, w3b = w3[:c_], w3[c_:]

    kern = functools.partial(_fused_c3_kernel, Ho=Ho, Wo=Wo, c_=c_, act=act, pool=pool)
    const = lambda n: (0, 0)

    out = pl.pallas_call(
        kern,
        out_shape=jax.ShapeDtypeStruct((N, M, out_ch), x.dtype),
        grid=(N,),
        in_specs=[
            x_spec,
            pl.BlockSpec((Cin, 2 * c_), const),
            pl.BlockSpec((1, 2 * c_), const),
            pl.BlockSpec((1, 2 * c_), const),
            pl.BlockSpec((c_, c_), const),
            pl.BlockSpec((1, c_), const),
            pl.BlockSpec((1, c_), const),
            pl.BlockSpec((9, c_, c_), lambda n: (0, 0, 0)),
            pl.BlockSpec((1, c_), const),
            pl.BlockSpec((1, c_), const),
            pl.BlockSpec((c_, out_ch), const),
            pl.BlockSpec((c_, out_ch), const),
            pl.BlockSpec((1, out_ch), const),
            pl.BlockSpec((1, out_ch), const),
        ],
        out_specs=pl.BlockSpec((1, M, out_ch), lambda n: (n, 0, 0)),
        scratch_shapes=[pltpu.VMEM((Ho + 2, Wo + 2, c_), jnp.float32)],
        compiler_params=pltpu.CompilerParams(dimension_semantics=("parallel",)),
    )(x_in, w12, s12, b12, wm1, sm1, bm1, wm2, sm2, bm2, w3a, w3b, s3, b3)

    out = out.reshape(N, Ho, Wo, out_ch)
    return jnp.transpose(out, (0, 3, 1, 2))                              # back to NCHW


def _ref_conv_bn_act(x, p, act):
    w = jnp.transpose(p["w"], (2, 3, 1, 0))                              # HWIO
    y = lax.conv_general_dilated(x, w, (1, 1), "SAME",
                                 dimension_numbers=("NHWC", "HWIO", "NHWC"))
    scale = p["gamma"] / jnp.sqrt(p["var"] + BN_EPS)
    y = y * scale + (p["beta"] - p["mean"] * scale)
    return jax.nn.silu(y) if act else y


def reference_forward(x_nchw, params, stride, act):
    x = jnp.transpose(x_nchw, (0, 2, 3, 1))
    if stride > 1:
        N, H, W, C = x.shape
        x = x.reshape(N, H // 2, 2, W // 2, 2, C).mean(axis=(2, 4))
    y1 = _ref_conv_bn_act(x, params["cv1"], act)
    y2 = _ref_conv_bn_act(x, params["cv2"], act)
    b1 = _ref_conv_bn_act(y1, params["m_cv1"], True)
    b2 = _ref_conv_bn_act(b1, params["m_cv2"], True)
    m = y1 + b2
    out = _ref_conv_bn_act(jnp.concatenate([m, y2], axis=-1), params["cv3"], act)
    return jnp.transpose(out, (0, 3, 1, 2))


# --------------------------------------------------------------------------------------
if __name__ == "__main__":
    in_ch, out_ch, stride, act = 4, 8, 2, True
    c_ = out_ch // 2

    key = jax.random.PRNGKey(0)
    k_x, k1, k2, k3, k4, k5 = jax.random.split(key, 6)
    x = jax.random.normal(k_x, (2, in_ch, 16, 16), jnp.float32)          # NCHW like PyTorch

    params = {
        "cv1": _init_conv_bn(k1, in_ch, c_, 1),
        "cv2": _init_conv_bn(k2, in_ch, c_, 1),
        "cv3": _init_conv_bn(k3, 2 * c_, out_ch, 1),
        "m_cv1": _init_conv_bn(k4, c_, c_, 1),
        "m_cv2": _init_conv_bn(k5, c_, c_, 3),
    }

    out = jax.block_until_ready(double_conv_c3_forward(x, params, stride=stride, act=act))
    assert out.shape == (2, out_ch, 8, 8), out.shape

    ref = jax.block_until_ready(reference_forward(x, params, stride, act))
    err = float(jnp.max(jnp.abs(out - ref)))
    assert err < 2e-4, f"mismatch vs reference: max abs err = {err}"

    print("KERNEL_OK")
</pallas_src>

<mosaic_0001>
module attributes {stable_mosaic.version = 11 : i64} {
  func.func @_fused_c3_kernel(%arg0: i32, %arg1: memref<1x8x2x16x4xf32, #tpu.memory_space<vmem>>, %arg2: memref<4x8xf32, #tpu.memory_space<vmem>>, %arg3: memref<1x8xf32, #tpu.memory_space<vmem>>, %arg4: memref<1x8xf32, #tpu.memory_space<vmem>>, %arg5: memref<4x4xf32, #tpu.memory_space<vmem>>, %arg6: memref<1x4xf32, #tpu.memory_space<vmem>>, %arg7: memref<1x4xf32, #tpu.memory_space<vmem>>, %arg8: memref<9x4x4xf32, #tpu.memory_space<vmem>>, %arg9: memref<1x4xf32, #tpu.memory_space<vmem>>, %arg10: memref<1x4xf32, #tpu.memory_space<vmem>>, %arg11: memref<4x8xf32, #tpu.memory_space<vmem>>, %arg12: memref<4x8xf32, #tpu.memory_space<vmem>>, %arg13: memref<1x8xf32, #tpu.memory_space<vmem>>, %arg14: memref<1x8xf32, #tpu.memory_space<vmem>>, %arg15: memref<1x64x8xf32, #tpu.memory_space<vmem>>, %arg16: memref<10x10x4xf32, #tpu.memory_space<vmem>>) attributes {dimension_semantics = [#tpu.dimension_semantics<parallel>], iteration_bounds = array<i64: 2>, scalar_prefetch = 0 : i64, scratch_operands = 1 : i64, tpu.core_type = #tpu.core_type<tc>, window_params = [{transform_indices = @transform_0, window_bounds = array<i64: 1, 8, 2, 16, 4>}, {pipeline_mode = #tpu.pipeline_mode<synchronous>, transform_indices = @transform_1, window_bounds = array<i64: 4, 8>}, {pipeline_mode = #tpu.pipeline_mode<synchronous>, transform_indices = @transform_2, window_bounds = array<i64: 1, 8>}, {pipeline_mode = #tpu.pipeline_mode<synchronous>, transform_indices = @transform_3, window_bounds = array<i64: 1, 8>}, {pipeline_mode = #tpu.pipeline_mode<synchronous>, transform_indices = @transform_4, window_bounds = array<i64: 4, 4>}, {pipeline_mode = #tpu.pipeline_mode<synchronous>, transform_indices = @transform_5, window_bounds = array<i64: 1, 4>}, {pipeline_mode = #tpu.pipeline_mode<synchronous>, transform_indices = @transform_6, window_bounds = array<i64: 1, 4>}, {pipeline_mode = #tpu.pipeline_mode<synchronous>, transform_indices = @transform_7, window_bounds = array<i64: 9, 4, 4>}, {pipeline_mode = #tpu.pipeline_mode<synchronous>, transform_indices = @transform_8, window_bounds = array<i64: 1, 4>}, {pipeline_mode = #tpu.pipeline_mode<synchronous>, transform_indices = @transform_9, window_bounds = array<i64: 1, 4>}, {pipeline_mode = #tpu.pipeline_mode<synchronous>, transform_indices = @transform_10, window_bounds = array<i64: 4, 8>}, {pipeline_mode = #tpu.pipeline_mode<synchronous>, transform_indices = @transform_11, window_bounds = array<i64: 4, 8>}, {pipeline_mode = #tpu.pipeline_mode<synchronous>, transform_indices = @transform_12, window_bounds = array<i64: 1, 8>}, {pipeline_mode = #tpu.pipeline_mode<synchronous>, transform_indices = @transform_13, window_bounds = array<i64: 1, 8>}, {transform_indices = @transform_14, window_bounds = array<i64: 1, 64, 8>}]} {
    %c0 = arith.constant 0 : index
    %c0_0 = arith.constant 0 : index
    %c0_1 = arith.constant 0 : index
    %c0_2 = arith.constant 0 : index
    %c0_3 = arith.constant 0 : index
    %0 = vector.load %arg1[%c0, %c0_0, %c0_1, %c0_2, %c0_3] : memref<1x8x2x16x4xf32, #tpu.memory_space<vmem>>, vector<1x8x2x16x4xf32>
    %1 = vector.shape_cast %0 : vector<1x8x2x16x4xf32> to vector<8x2x16x4xf32>
    %2 = vector.extract_strided_slice %1 {offsets = [0, 0, 0, 0], sizes = [8, 1, 16, 4], strides = [1, 1, 1, 1]} : vector<8x2x16x4xf32> to vector<8x1x16x4xf32>
    %3 = vector.shape_cast %2 : vector<8x1x16x4xf32> to vector<8x16x4xf32>
    %4 = vector.extract_strided_slice %1 {offsets = [0, 1, 0, 0], sizes = [8, 1, 16, 4], strides = [1, 1, 1, 1]} : vector<8x2x16x4xf32> to vector<8x1x16x4xf32>
    %5 = vector.shape_cast %4 : vector<8x1x16x4xf32> to vector<8x16x4xf32>
    %6 = arith.addf %3, %5 : vector<8x16x4xf32>
    %7 = vector.shape_cast %6 : vector<8x16x4xf32> to vector<8x8x2x4xf32>
    %8 = vector.extract_strided_slice %7 {offsets = [0, 0, 0, 0], sizes = [8, 8, 1, 4], strides = [1, 1, 1, 1]} : vector<8x8x2x4xf32> to vector<8x8x1x4xf32>
    %9 = vector.shape_cast %8 : vector<8x8x1x4xf32> to vector<8x8x4xf32>
    %10 = vector.extract_strided_slice %7 {offsets = [0, 0, 1, 0], sizes = [8, 8, 1, 4], strides = [1, 1, 1, 1]} : vector<8x8x2x4xf32> to vector<8x8x1x4xf32>
    %11 = vector.shape_cast %10 : vector<8x8x1x4xf32> to vector<8x8x4xf32>
    %12 = arith.addf %9, %11 : vector<8x8x4xf32>
    %cst = arith.constant 2.500000e-01 : f32
    %13 = vector.broadcast %cst : f32 to vector<8x8x4xf32>
    %14 = arith.mulf %13, %12 : vector<8x8x4xf32>
    %15 = vector.shape_cast %14 : vector<8x8x4xf32> to vector<64x4xf32>
    %c0_4 = arith.constant 0 : index
    %c0_5 = arith.constant 0 : index
    %16 = vector.load %arg2[%c0_4, %c0_5] : memref<4x8xf32, #tpu.memory_space<vmem>>, vector<4x8xf32>
    %cst_6 = arith.constant dense<0.000000e+00> : vector<64x8xf32>
    %17 = tpu.matmul %15, %16, %cst_6 {dimension_numbers = #tpu.dot_dimension_numbers<[1], [0], [0], [1], [0, 0, 1, 1], [], []>} : vector<64x4xf32>, vector<4x8xf32>, vector<64x8xf32> -> vector<64x8xf32>
    %c0_7 = arith.constant 0 : index
    %c0_8 = arith.constant 0 : index
    %18 = vector.load %arg3[%c0_7, %c0_8] : memref<1x8xf32, #tpu.memory_space<vmem>>, vector<1x8xf32>
    %19 = vector.broadcast %18 : vector<1x8xf32> to vector<64x8xf32>
    %20 = arith.mulf %17, %19 : vector<64x8xf32>
    %c0_9 = arith.constant 0 : index
    %c0_10 = arith.constant 0 : index
    %21 = vector.load %arg4[%c0_9, %c0_10] : memref<1x8xf32, #tpu.memory_space<vmem>>, vector<1x8xf32>
    %22 = vector.broadcast %21 : vector<1x8xf32> to vector<64x8xf32>
    %23 = arith.addf %20, %22 : vector<64x8xf32>
    %cst_11 = arith.constant 0.000000e+00 : f32
    %24 = vector.broadcast %cst_11 : f32 to vector<64x8xf32>
    %25 = arith.subf %24, %23 : vector<64x8xf32>
    %26 = math.exp %25 : vector<64x8xf32>
    %cst_12 = arith.constant 1.000000e+00 : f32
    %27 = vector.broadcast %cst_12 : f32 to vector<64x8xf32>
    %28 = arith.addf %27, %26 : vector<64x8xf32>
    %cst_13 = arith.constant 1.000000e+00 : f32
    %29 = vector.broadcast %cst_13 : f32 to vector<64x8xf32>
    %30 = arith.divf %29, %28 : vector<64x8xf32>
    %31 = arith.mulf %23, %30 : vector<64x8xf32>
    %32 = vector.extract_strided_slice %31 {offsets = [0, 0], sizes = [64, 4], strides = [1, 1]} : vector<64x8xf32> to vector<64x4xf32>
    %33 = vector.extract_strided_slice %31 {offsets = [0, 4], sizes = [64, 4], strides = [1, 1]} : vector<64x8xf32> to vector<64x4xf32>
    %c0_14 = arith.constant 0 : index
    %c0_15 = arith.constant 0 : index
    %34 = vector.load %arg5[%c0_14, %c0_15] : memref<4x4xf32, #tpu.memory_space<vmem>>, vector<4x4xf32>
    %cst_16 = arith.constant dense<0.000000e+00> : vector<64x4xf32>
    %35 = tpu.matmul %32, %34, %cst_16 {dimension_numbers = #tpu.dot_dimension_numbers<[1], [0], [0], [1], [0, 0, 1, 1], [], []>} : vector<64x4xf32>, vector<4x4xf32>, vector<64x4xf32> -> vector<64x4xf32>
    %c0_17 = arith.constant 0 : index
    %c0_18 = arith.constant 0 : index
    %36 = vector.load %arg6[%c0_17, %c0_18] : memref<1x4xf32, #tpu.memory_space<vmem>>, vector<1x4xf32>
    %37 = vector.broadcast %36 : vector<1x4xf32> to vector<64x4xf32>
    %38 = arith.mulf %35, %37 : vector<64x4xf32>
    %c0_19 = arith.constant 0 : index
    %c0_20 = arith.constant 0 : index
    %39 = vector.load %arg7[%c0_19, %c0_20] : memref<1x4xf32, #tpu.memory_space<vmem>>, vector<1x4xf32>
    %40 = vector.broadcast %39 : vector<1x4xf32> to vector<64x4xf32>
    %41 = arith.addf %38, %40 : vector<64x4xf32>
    %cst_21 = arith.constant 0.000000e+00 : f32
    %42 = vector.broadcast %cst_21 : f32 to vector<64x4xf32>
    %43 = arith.subf %42, %41 : vector<64x4xf32>
    %44 = math.exp %43 : vector<64x4xf32>
    %cst_22 = arith.constant 1.000000e+00 : f32
    %45 = vector.broadcast %cst_22 : f32 to vector<64x4xf32>
    %46 = arith.addf %45, %44 : vector<64x4xf32>
    %cst_23 = arith.constant 1.000000e+00 : f32
    %47 = vector.broadcast %cst_23 : f32 to vector<64x4xf32>
    %48 = arith.divf %47, %46 : vector<64x4xf32>
    %49 = arith.mulf %41, %48 : vector<64x4xf32>
    %cst_24 = arith.constant 0.000000e+00 : f32
    %50 = vector.broadcast %cst_24 : f32 to vector<10x10x4xf32>
    %c0_25 = arith.constant 0 : index
    %c0_26 = arith.constant 0 : index
    %c0_27 = arith.constant 0 : index
    %51 = vector.load %arg16[%c0_25, %c0_26, %c0_27] : memref<10x10x4xf32, #tpu.memory_space<vmem>>, vector<10x10x4xf32>
    tpu.vector_store %arg16[%c0_25, %c0_26, %c0_27], %50 {strides = array<i32>} : memref<10x10x4xf32, #tpu.memory_space<vmem>>, vector<10x10x4xf32>,
    %52 = vector.shape_cast %49 : vector<64x4xf32> to vector<8x8x4xf32>
    %c1 = arith.constant 1 : index
    %c1_28 = arith.constant 1 : index
    %c0_29 = arith.constant 0 : index
    %53 = vector.load %arg16[%c1, %c1_28, %c0_29] : memref<10x10x4xf32, #tpu.memory_space<vmem>>, vector<8x8x4xf32>
    tpu.vector_store %arg16[%c1, %c1_28, %c0_29], %52 {strides = array<i32>} : memref<10x10x4xf32, #tpu.memory_space<vmem>>, vector<8x8x4xf32>,
    %cst_30 = arith.constant 0.000000e+00 : f32
    %54 = vector.broadcast %cst_30 : f32 to vector<64x4xf32>
    %c0_31 = arith.constant 0 : index
    %c0_32 = arith.constant 0 : index
    %c0_33 = arith.constant 0 : index
    %55 = vector.load %arg16[%c0_31, %c0_32, %c0_33] : memref<10x10x4xf32, #tpu.memory_space<vmem>>, vector<8x8x4xf32>
    %56 = vector.shape_cast %55 : vector<8x8x4xf32> to vector<64x4xf32>
    %c0_34 = arith.constant 0 : index
    %c0_35 = arith.constant 0 : index
    %c0_36 = arith.constant 0 : index
    %57 = vector.load %arg8[%c0_34, %c0_35, %c0_36] : memref<9x4x4xf32, #tpu.memory_space<vmem>>, vector<1x4x4xf32>
    %58 = vector.shape_cast %57 : vector<1x4x4xf32> to vector<4x4xf32>
    %cst_37 = arith.constant dense<0.000000e+00> : vector<64x4xf32>
    %59 = tpu.matmul %56, %58, %cst_37 {dimension_numbers = #tpu.dot_dimension_numbers<[1], [0], [0], [1], [0, 0, 1, 1], [], []>} : vector<64x4xf32>, vector<4x4xf32>, vector<64x4xf32> -> vector<64x4xf32>
    %60 = arith.addf %54, %59 : vector<64x4xf32>
    %c0_38 = arith.constant 0 : index
    %c1_39 = arith.constant 1 : index
    %c0_40 = arith.constant 0 : index
    %61 = vector.load %arg16[%c0_38, %c1_39, %c0_40] : memref<10x10x4xf32, #tpu.memory_space<vmem>>, vector<8x8x4xf32>
    %62 = vector.shape_cast %61 : vector<8x8x4xf32> to vector<64x4xf32>
    %c1_41 = arith.constant 1 : index
    %c0_42 = arith.constant 0 : index
    %c0_43 = arith.constant 0 : index
    %63 = vector.load %arg8[%c1_41, %c0_42, %c0_43] : memref<9x4x4xf32, #tpu.memory_space<vmem>>, vector<1x4x4xf32>
    %64 = vector.shape_cast %63 : vector<1x4x4xf32> to vector<4x4xf32>
    %cst_44 = arith.constant dense<0.000000e+00> : vector<64x4xf32>
    %65 = tpu.matmul %62, %64, %cst_44 {dimension_numbers = #tpu.dot_dimension_numbers<[1], [0], [0], [1], [0, 0, 1, 1], [], []>} : vector<64x4xf32>, vector<4x4xf32>, vector<64x4xf32> -> vector<64x4xf32>
    %66 = arith.addf %60, %65 : vector<64x4xf32>
    %c0_45 = arith.constant 0 : index
    %c2 = arith.constant 2 : index
    %c0_46 = arith.constant 0 : index
    %67 = vector.load %arg16[%c0_45, %c2, %c0_46] : memref<10x10x4xf32, #tpu.memory_space<vmem>>, vector<8x8x4xf32>
    %68 = vector.shape_cast %67 : vector<8x8x4xf32> to vector<64x4xf32>
    %c2_47 = arith.constant 2 : index
    %c0_48 = arith.constant 0 : index
    %c0_49 = arith.constant 0 : index
    %69 = vector.load %arg8[%c2_47, %c0_48, %c0_49] : memref<9x4x4xf32, #tpu.memory_space<vmem>>, vector<1x4x4xf32>
    %70 = vector.shape_cast %69 : vector<1x4x4xf32> to vector<4x4xf32>
    %cst_50 = arith.constant dense<0.000000e+00> : vector<64x4xf32>
    %71 = tpu.matmul %68, %70, %cst_50 {dimension_numbers = #tpu.dot_dimension_numbers<[1], [0], [0], [1], [0, 0, 1, 1], [], []>} : vector<64x4xf32>, vector<4x4xf32>, vector<64x4xf32> -> vector<64x4xf32>
    %72 = arith.addf %66, %71 : vector<64x4xf32>
    %c1_51 = arith.constant 1 : index
    %c0_52 = arith.constant 0 : index
    %c0_53 = arith.constant 0 : index
    %73 = vector.load %arg16[%c1_51, %c0_52, %c0_53] : memref<10x10x4xf32, #tpu.memory_space<vmem>>, vector<8x8x4xf32>
    %74 = vector.shape_cast %73 : vector<8x8x4xf32> to vector<64x4xf32>
    %c3 = arith.constant 3 : index
    %c0_54 = arith.constant 0 : index
    %c0_55 = arith.constant 0 : index
    %75 = vector.load %arg8[%c3, %c0_54, %c0_55] : memref<9x4x4xf32, #tpu.memory_space<vmem>>, vector<1x4x4xf32>
    %76 = vector.shape_cast %75 : vector<1x4x4xf32> to vector<4x4xf32>
    %cst_56 = arith.constant dense<0.000000e+00> : vector<64x4xf32>
    %77 = tpu.matmul %74, %76, %cst_56 {dimension_numbers = #tpu.dot_dimension_numbers<[1], [0], [0], [1], [0, 0, 1, 1], [], []>} : vector<64x4xf32>, vector<4x4xf32>, vector<64x4xf32> -> vector<64x4xf32>
    %78 = arith.addf %72, %77 : vector<64x4xf32>
    %c1_57 = arith.constant 1 : index
    %c1_58 = arith.constant 1 : index
    %c0_59 = arith.constant 0 : index
    %79 = vector.load %arg16[%c1_57, %c1_58, %c0_59] : memref<10x10x4xf32, #tpu.memory_space<vmem>>, vector<8x8x4xf32>
    %80 = vector.shape_cast %79 : vector<8x8x4xf32> to vector<64x4xf32>
    %c4 = arith.constant 4 : index
    %c0_60 = arith.constant 0 : index
    %c0_61 = arith.constant 0 : index
    %81 = vector.load %arg8[%c4, %c0_60, %c0_61] : memref<9x4x4xf32, #tpu.memory_space<vmem>>, vector<1x4x4xf32>
    %82 = vector.shape_cast %81 : vector<1x4x4xf32> to vector<4x4xf32>
    %cst_62 = arith.constant dense<0.000000e+00> : vector<64x4xf32>
    %83 = tpu.matmul %80, %82, %cst_62 {dimension_numbers = #tpu.dot_dimension_numbers<[1], [0], [0], [1], [0, 0, 1, 1], [], []>} : vector<64x4xf32>, vector<4x4xf32>, vector<64x4xf32> -> vector<64x4xf32>
    %84 = arith.addf %78, %83 : vector<64x4xf32>
    %c1_63 = arith.constant 1 : index
    %c2_64 = arith.constant 2 : index
    %c0_65 = arith.constant 0 : index
    %85 = vector.load %arg16[%c1_63, %c2_64, %c0_65] : memref<10x10x4xf32, #tpu.memory_space<vmem>>, vector<8x8x4xf32>
    %86 = vector.shape_cast %85 : vector<8x8x4xf32> to vector<64x4xf32>
    %c5 = arith.constant 5 : index
    %c0_66 = arith.constant 0 : index
    %c0_67 = arith.constant 0 : index
    %87 = vector.load %arg8[%c5, %c0_66, %c0_67] : memref<9x4x4xf32, #tpu.memory_space<vmem>>, vector<1x4x4xf32>
    %88 = vector.shape_cast %87 : vector<1x4x4xf32> to vector<4x4xf32>
    %cst_68 = arith.constant dense<0.000000e+00> : vector<64x4xf32>
    %89 = tpu.matmul %86, %88, %cst_68 {dimension_numbers = #tpu.dot_dimension_numbers<[1], [0], [0], [1], [0, 0, 1, 1], [], []>} : vector<64x4xf32>, vector<4x4xf32>, vector<64x4xf32> -> vector<64x4xf32>
    %90 = arith.addf %84, %89 : vector<64x4xf32>
    %c2_69 = arith.constant 2 : index
    %c0_70 = arith.constant 0 : index
    %c0_71 = arith.constant 0 : index
    %91 = vector.load %arg16[%c2_69, %c0_70, %c0_71] : memref<10x10x4xf32, #tpu.memory_space<vmem>>, vector<8x8x4xf32>
    %92 = vector.shape_cast %91 : vector<8x8x4xf32> to vector<64x4xf32>
    %c6 = arith.constant 6 : index
    %c0_72 = arith.constant 0 : index
    %c0_73 = arith.constant 0 : index
    %93 = vector.load %arg8[%c6, %c0_72, %c0_73] : memref<9x4x4xf32, #tpu.memory_space<vmem>>, vector<1x4x4xf32>
    %94 = vector.shape_cast %93 : vector<1x4x4xf32> to vector<4x4xf32>
    %cst_74 = arith.constant dense<0.000000e+00> : vector<64x4xf32>
    %95 = tpu.matmul %92, %94, %cst_74 {dimension_numbers = #tpu.dot_dimension_numbers<[1], [0], [0], [1], [0, 0, 1, 1], [], []>} : vector<64x4xf32>, vector<4x4xf32>, vector<64x4xf32> -> vector<64x4xf32>
    %96 = arith.addf %90, %95 : vector<64x4xf32>
    %c2_75 = arith.constant 2 : index
    %c1_76 = arith.constant 1 : index
    %c0_77 = arith.constant 0 : index
    %97 = vector.load %arg16[%c2_75, %c1_76, %c0_77] : memref<10x10x4xf32, #tpu.memory_space<vmem>>, vector<8x8x4xf32>
    %98 = vector.shape_cast %97 : vector<8x8x4xf32> to vector<64x4xf32>
    %c7 = arith.constant 7 : index
    %c0_78 = arith.constant 0 : index
    %c0_79 = arith.constant 0 : index
    %99 = vector.load %arg8[%c7, %c0_78, %c0_79] : memref<9x4x4xf32, #tpu.memory_space<vmem>>, vector<1x4x4xf32>
    %100 = vector.shape_cast %99 : vector<1x4x4xf32> to vector<4x4xf32>
    %cst_80 = arith.constant dense<0.000000e+00> : vector<64x4xf32>
    %101 = tpu.matmul %98, %100, %cst_80 {dimension_numbers = #tpu.dot_dimension_numbers<[1], [0], [0], [1], [0, 0, 1, 1], [], []>} : vector<64x4xf32>, vector<4x4xf32>, vector<64x4xf32> -> vector<64x4xf32>
    %102 = arith.addf %96, %101 : vector<64x4xf32>
    %c2_81 = arith.constant 2 : index
    %c2_82 = arith.constant 2 : index
    %c0_83 = arith.constant 0 : index
    %103 = vector.load %arg16[%c2_81, %c2_82, %c0_83] : memref<10x10x4xf32, #tpu.memory_space<vmem>>, vector<8x8x4xf32>
    %104 = vector.shape_cast %103 : vector<8x8x4xf32> to vector<64x4xf32>
    %c8 = arith.constant 8 : index
    %c0_84 = arith.constant 0 : index
    %c0_85 = arith.constant 0 : index
    %105 = vector.load %arg8[%c8, %c0_84, %c0_85] : memref<9x4x4xf32, #tpu.memory_space<vmem>>, vector<1x4x4xf32>
    %106 = vector.shape_cast %105 : vector<1x4x4xf32> to vector<4x4xf32>
    %cst_86 = arith.constant dense<0.000000e+00> : vector<64x4xf32>
    %107 = tpu.matmul %104, %106, %cst_86 {dimension_numbers = #tpu.dot_dimension_numbers<[1], [0], [0], [1], [0, 0, 1, 1], [], []>} : vector<64x4xf32>, vector<4x4xf32>, vector<64x4xf32> -> vector<64x4xf32>
    %108 = arith.addf %102, %107 : vector<64x4xf32>
    %c0_87 = arith.constant 0 : index
    %c0_88 = arith.constant 0 : index
    %109 = vector.load %arg9[%c0_87, %c0_88] : memref<1x4xf32, #tpu.memory_space<vmem>>, vector<1x4xf32>
    %110 = vector.broadcast %109 : vector<1x4xf32> to vector<64x4xf32>
    %111 = arith.mulf %108, %110 : vector<64x4xf32>
    %c0_89 = arith.constant 0 : index
    %c0_90 = arith.constant 0 : index
    %112 = vector.load %arg10[%c0_89, %c0_90] : memref<1x4xf32, #tpu.memory_space<vmem>>, vector<1x4xf32>
    %113 = vector.broadcast %112 : vector<1x4xf32> to vector<64x4xf32>
    %114 = arith.addf %111, %113 : vector<64x4xf32>
    %cst_91 = arith.constant 0.000000e+00 : f32
    %115 = vector.broadcast %cst_91 : f32 to vector<64x4xf32>
    %116 = arith.subf %115, %114 : vector<64x4xf32>
    %117 = math.exp %116 : vector<64x4xf32>
    %cst_92 = arith.constant 1.000000e+00 : f32
    %118 = vector.broadcast %cst_92 : f32 to vector<64x4xf32>
    %119 = arith.addf %118, %117 : vector<64x4xf32>
    %cst_93 = arith.constant 1.000000e+00 : f32
    %120 = vector.broadcast %cst_93 : f32 to vector<64x4xf32>
    %121 = arith.divf %120, %119 : vector<64x4xf32>
    %122 = arith.mulf %114, %121 : vector<64x4xf32>
    %123 = arith.addf %122, %32 : vector<64x4xf32>
    %c0_94 = arith.constant 0 : index
    %c0_95 = arith.constant 0 : index
    %124 = vector.load %arg11[%c0_94, %c0_95] : memref<4x8xf32, #tpu.memory_space<vmem>>, vector<4x8xf32>
    %cst_96 = arith.constant dense<0.000000e+00> : vector<64x8xf32>
    %125 = tpu.matmul %123, %124, %cst_96 {dimension_numbers = #tpu.dot_dimension_numbers<[1], [0], [0], [1], [0, 0, 1, 1], [], []>} : vector<64x4xf32>, vector<4x8xf32>, vector<64x8xf32> -> vector<64x8xf32>
    %c0_97 = arith.constant 0 : index
    %c0_98 = arith.constant 0 : index
    %126 = vector.load %arg12[%c0_97, %c0_98] : memref<4x8xf32, #tpu.memory_space<vmem>>, vector<4x8xf32>
    %cst_99 = arith.constant dense<0.000000e+00> : vector<64x8xf32>
    %127 = tpu.matmul %33, %126, %cst_99 {dimension_numbers = #tpu.dot_dimension_numbers<[1], [0], [0], [1], [0, 0, 1, 1], [], []>} : vector<64x4xf32>, vector<4x8xf32>, vector<64x8xf32> -> vector<64x8xf32>
    %128 = arith.addf %125, %127 : vector<64x8xf32>
    %c0_100 = arith.constant 0 : index
    %c0_101 = arith.constant 0 : index
    %129 = vector.load %arg13[%c0_100, %c0_101] : memref<1x8xf32, #tpu.memory_space<vmem>>, vector<1x8xf32>
    %130 = vector.broadcast %129 : vector<1x8xf32> to vector<64x8xf32>
    %131 = arith.mulf %128, %130 : vector<64x8xf32>
    %c0_102 = arith.constant 0 : index
    %c0_103 = arith.constant 0 : index
    %132 = vector.load %arg14[%c0_102, %c0_103] : memref<1x8xf32, #tpu.memory_space<vmem>>, vector<1x8xf32>
    %133 = vector.broadcast %132 : vector<1x8xf32> to vector<64x8xf32>
    %134 = arith.addf %131, %133 : vector<64x8xf32>
    %cst_104 = arith.constant 0.000000e+00 : f32
    %135 = vector.broadcast %cst_104 : f32 to vector<64x8xf32>
    %136 = arith.subf %135, %134 : vector<64x8xf32>
    %137 = math.exp %136 : vector<64x8xf32>
    %cst_105 = arith.constant 1.000000e+00 : f32
    %138 = vector.broadcast %cst_105 : f32 to vector<64x8xf32>
    %139 = arith.addf %138, %137 : vector<64x8xf32>
    %cst_106 = arith.constant 1.000000e+00 : f32
    %140 = vector.broadcast %cst_106 : f32 to vector<64x8xf32>
    %141 = arith.divf %140, %139 : vector<64x8xf32>
    %142 = arith.mulf %134, %141 : vector<64x8xf32>
    %c0_107 = arith.constant 0 : index
    %c0_108 = arith.constant 0 : index
    %c0_109 = arith.constant 0 : index
    %143 = vector.load %arg15[%c0_107, %c0_108, %c0_109] : memref<1x64x8xf32, #tpu.memory_space<vmem>>, vector<1x64x8xf32>
    %144 = vector.shape_cast %143 : vector<1x64x8xf32> to vector<64x8xf32>
    %145 = vector.shape_cast %142 : vector<64x8xf32> to vector<1x64x8xf32>
    tpu.vector_store %arg15[%c0_107, %c0_108, %c0_109], %145 {strides = array<i32>} : memref<1x64x8xf32, #tpu.memory_space<vmem>>, vector<1x64x8xf32>,
    return
  }
  func.func @transform_0(%arg0: i32) -> (i32, i32, i32, i32, i32) {
    %c0_i32 = arith.constant 0 : i32
    %c0_i32_0 = arith.constant 0 : i32
    %c0_i32_1 = arith.constant 0 : i32
    %c0_i32_2 = arith.constant 0 : i32
    %c0_i32_3 = arith.constant 0 : i32
    return %arg0, %c0_i32, %c0_i32_0, %c0_i32_1, %c0_i32_2 : i32, i32, i32, i32, i32
  }
  func.func @transform_1(%arg0: i32) -> (i32, i32) {
    %c0_i32 = arith.constant 0 : i32
    %c0_i32_0 = arith.constant 0 : i32
    %c0_i32_1 = arith.constant 0 : i32
    return %c0_i32, %c0_i32_0 : i32, i32
  }
  func.func @transform_2(%arg0: i32) -> (i32, i32) {
    %c0_i32 = arith.constant 0 : i32
    %c0_i32_0 = arith.constant 0 : i32
    %c0_i32_1 = arith.constant 0 : i32
    return %c0_i32, %c0_i32_0 : i32, i32
  }
  func.func @transform_3(%arg0: i32) -> (i32, i32) {
    %c0_i32 = arith.constant 0 : i32
    %c0_i32_0 = arith.constant 0 : i32
    %c0_i32_1 = arith.constant 0 : i32
    return %c0_i32, %c0_i32_0 : i32, i32
  }
  func.func @transform_4(%arg0: i32) -> (i32, i32) {
    %c0_i32 = arith.constant 0 : i32
    %c0_i32_0 = arith.constant 0 : i32
    %c0_i32_1 = arith.constant 0 : i32
    return %c0_i32, %c0_i32_0 : i32, i32
  }
  func.func @transform_5(%arg0: i32) -> (i32, i32) {
    %c0_i32 = arith.constant 0 : i32
    %c0_i32_0 = arith.constant 0 : i32
    %c0_i32_1 = arith.constant 0 : i32
    return %c0_i32, %c0_i32_0 : i32, i32
  }
  func.func @transform_6(%arg0: i32) -> (i32, i32) {
    %c0_i32 = arith.constant 0 : i32
    %c0_i32_0 = arith.constant 0 : i32
    %c0_i32_1 = arith.constant 0 : i32
    return %c0_i32, %c0_i32_0 : i32, i32
  }
  func.func @transform_7(%arg0: i32) -> (i32, i32, i32) {
    %c0_i32 = arith.constant 0 : i32
    %c0_i32_0 = arith.constant 0 : i32
    %c0_i32_1 = arith.constant 0 : i32
    %c0_i32_2 = arith.constant 0 : i32
    return %c0_i32, %c0_i32_0, %c0_i32_1 : i32, i32, i32
  }
  func.func @transform_8(%arg0: i32) -> (i32, i32) {
    %c0_i32 = arith.constant 0 : i32
    %c0_i32_0 = arith.constant 0 : i32
    %c0_i32_1 = arith.constant 0 : i32
    return %c0_i32, %c0_i32_0 : i32, i32
  }
  func.func @transform_9(%arg0: i32) -> (i32, i32) {
    %c0_i32 = arith.constant 0 : i32
    %c0_i32_0 = arith.constant 0 : i32
    %c0_i32_1 = arith.constant 0 : i32
    return %c0_i32, %c0_i32_0 : i32, i32
  }
  func.func @transform_10(%arg0: i32) -> (i32, i32) {
    %c0_i32 = arith.constant 0 : i32
    %c0_i32_0 = arith.constant 0 : i32
    %c0_i32_1 = arith.constant 0 : i32
    return %c0_i32, %c0_i32_0 : i32, i32
  }
  func.func @transform_11(%arg0: i32) -> (i32, i32) {
    %c0_i32 = arith.constant 0 : i32
    %c0_i32_0 = arith.constant 0 : i32
    %c0_i32_1 = arith.constant 0 : i32
    return %c0_i32, %c0_i32_0 : i32, i32
  }
  func.func @transform_12(%arg0: i32) -> (i32, i32) {
    %c0_i32 = arith.constant 0 : i32
    %c0_i32_0 = arith.constant 0 : i32
    %c0_i32_1 = arith.constant 0 : i32
    return %c0_i32, %c0_i32_0 : i32, i32
  }
  func.func @transform_13(%arg0: i32) -> (i32, i32) {
    %c0_i32 = arith.constant 0 : i32
    %c0_i32_0 = arith.constant 0 : i32
    %c0_i32_1 = arith.constant 0 : i32
    return %c0_i32, %c0_i32_0 : i32, i32
  }
  func.func @transform_14(%arg0: i32) -> (i32, i32, i32) {
    %c0_i32 = arith.constant 0 : i32
    %c0_i32_0 = arith.constant 0 : i32
    %c0_i32_1 = arith.constant 0 : i32
    return %arg0, %c0_i32, %c0_i32_0 : i32, i32, i32
  }
}

</mosaic_0001>

<llo_original>
// kernel: tpu_custom_call.1
$region0: #{tpu_custom_call.1}
  #allocation0 [shape = 'u32[]', space=smem, size = 0x4, offset = 0x4, fixed_abs, tag = 'smem constant byte address 0x4 - core index']
  #allocation1 [shape = 'u32[144,128]{1,0:T(1,128)}', space=vmem, size = 0x12000, scoped, tag = 'internal scratch']
  #allocation2 [shape = 'f32[10,10,4]{2,1,0:T(8,128)}', space=vmem, size = 0x14000, scoped, tag = 'scratch operand']
  %s0 = inlined_call_operand.vmem [shape: f32[2,8,2,16,4], index: 0, kind: input, shape index: {}]
  %s1 = inlined_call_operand.vmem [shape: f32[4,8], index: 1, kind: input, shape index: {}]
  %s2 = inlined_call_operand.vmem [shape: f32[1,8], index: 2, kind: input, shape index: {}]
  %s3 = inlined_call_operand.vmem [shape: f32[1,8], index: 3, kind: input, shape index: {}]
  %s4 = inlined_call_operand.vmem [shape: f32[4,4], index: 4, kind: input, shape index: {}]
  %s5 = inlined_call_operand.vmem [shape: f32[1,4], index: 5, kind: input, shape index: {}]
  %s6 = inlined_call_operand.vmem [shape: f32[1,4], index: 6, kind: input, shape index: {}]
  %s7 = inlined_call_operand.vmem [shape: f32[9,4,4], index: 7, kind: input, shape index: {}]
  %s8 = inlined_call_operand.vmem [shape: f32[1,4], index: 8, kind: input, shape index: {}]
  %s9 = inlined_call_operand.vmem [shape: f32[1,4], index: 9, kind: input, shape index: {}]
  %s10 = inlined_call_operand.vmem [shape: f32[4,8], index: 10, kind: input, shape index: {}]
  %s11 = inlined_call_operand.vmem [shape: f32[4,8], index: 11, kind: input, shape index: {}]
  %s12 = inlined_call_operand.vmem [shape: f32[1,8], index: 12, kind: input, shape index: {}]
  %s13 = inlined_call_operand.vmem [shape: f32[1,8], index: 13, kind: input, shape index: {}]
  %s14 = inlined_call_operand.vmem [shape: f32[2,64,8], index: 14, kind: output, shape index: {}]
  %s15 = sld [smem:[#allocation0]]
  $region89: #{tpu_custom_call.1} parent=0
    _
  %s17 = ssub.s32 1, %s15
  %s18 = scalar_select 0, %s17, %s15
  loop: start=0, step=1, limit=4
  $region2: #{tpu_custom_call.1} parent=0 // loop_pre_header
    _
  $region3: #{tpu_custom_call.1} parent=0 // loop_header
    %s20 = sphi 0, %s24
    %p21 = scmp.ge.s32.totalorder %s20, 4
    %s30 = sphi 0, %s32
    %s33 = sphi 0, %s30
    %s34 = sphi 0, %s33
    %s50 = sphi 0, %s34
    %s54 = sphi 0, %s54
    %s56 = sphi 0, %s54
    %s57 = sphi 0, %s56
    %s71 = sphi 0, %s57
    %s75 = sphi 0, %s75
    %s77 = sphi 0, %s75
    %s78 = sphi 0, %s77
    %s92 = sphi 0, %s78
    %s96 = sphi 0, %s96
    %s98 = sphi 0, %s96
    %s99 = sphi 0, %s98
    %s113 = sphi 0, %s99
    %s117 = sphi 0, %s117
    %s119 = sphi 0, %s117
    %s120 = sphi 0, %s119
    %s134 = sphi 0, %s120
    %s138 = sphi 0, %s138
    %s140 = sphi 0, %s138
    %s141 = sphi 0, %s140
    %s155 = sphi 0, %s141
    %s159 = sphi 0, %s159
    %s161 = sphi 0, %s159
    %s162 = sphi 0, %s161
    %s176 = sphi 0, %s162
    %s180 = sphi 0, %s180
    %s182 = sphi 0, %s180
    %s183 = sphi 0, %s182
    %s197 = sphi 0, %s183
    %s201 = sphi 0, %s201
    %s203 = sphi 0, %s201
    %s204 = sphi 0, %s203
    %s218 = sphi 0, %s204
    %s222 = sphi 0, %s222
    %s224 = sphi 0, %s222
    %s225 = sphi 0, %s224
    %s239 = sphi 0, %s225
    %s243 = sphi 0, %s243
    %s245 = sphi 0, %s243
    %s246 = sphi 0, %s245
    %s260 = sphi 0, %s246
    %s264 = sphi 0, %s264
    %s266 = sphi 0, %s264
    %s267 = sphi 0, %s266
    %s281 = sphi 0, %s267
    %s285 = sphi 0, %s285
    %s287 = sphi 0, %s285
    %s288 = sphi 0, %s287
    %s302 = sphi 0, %s288
    %s306 = sphi 0, %s306
    %s308 = sphi 0, %s306
    %s309 = sphi 0, %s308
    %s323 = sphi 0, %s309
    %s329 = sphi 0, %s331
    %s332 = sphi 0, %s329
    %s333 = sphi 0, %s332
    %s349 = sphi 0, %s333
  $region4: #{tpu_custom_call.1} parent=0 // loop_header_branch
    %23 = sbr.rel (%p21) target = $region8
  $region5: #{tpu_custom_call.1} parent=0 // loop_body
    %s25 = ssub.s32 %s20, 1
    %s26 = ssub.s32 %s20, 2
    %s27 = sadd.s32 %s20, 1
    %s28 = ssub.s32 %s20, %s27
    %p29 = scmp.eq.s32.totalorder %s28, 0
    %s31 = sadd.s32 %s30, 1
    %s32 = scalar_select %p29, %s30, %s31
    %p35 = pneg %p29
    %p36 = scmp.eq.s32.totalorder %s20, 1
    %p37 = por %p35, %p36
    %p38 = scmp.ne.s32.totalorder %s30, %s33
    %p39 = scmp.eq.s32.totalorder %s20, 0
    %p40 = por %p38, %p39
    %p41 = scmp.ne.s32.totalorder %s30, %s33
    %p42 = scmp.eq.s32.totalorder %s25, 1
    %p43 = por %p41, %p42
    %p44 = scmp.ne.s32.totalorder %s33, %s34
    %p45 = scmp.eq.s32.totalorder %s25, 0
    %p46 = por %p44, %p45
    %p47 = scmp.ne.s32.totalorder %s33, %s34
    %p48 = scmp.eq.s32.totalorder %s26, 1
    %p49 = por %p47, %p48
    %p51 = scmp.ne.s32.totalorder %s34, %s50
    %p52 = scmp.eq.s32.totalorder %s26, 0
    %p53 = por %p51, %p52
    %s55 = sadd.s32 %s54, 1
    %p58 = scmp.eq.s32.totalorder %s20, 1
    %p59 = scmp.ne.s32.totalorder %s54, %s56
    %p60 = scmp.eq.s32.totalorder %s20, 0
    %p61 = por %p59, %p60
    %p62 = scmp.ne.s32.totalorder %s54, %s56
    %p63 = scmp.eq.s32.totalorder %s25, 1
    %p64 = por %p62, %p63
    %p65 = scmp.ne.s32.totalorder %s56, %s57
    %p66 = scmp.eq.s32.totalorder %s25, 0
    %p67 = por %p65, %p66
    %p68 = scmp.ne.s32.totalorder %s56, %s57
    %p69 = scmp.eq.s32.totalorder %s26, 1
    %p70 = por %p68, %p69
    %p72 = scmp.ne.s32.totalorder %s57, %s71
    %p73 = scmp.eq.s32.totalorder %s26, 0
    %p74 = por %p72, %p73
    %s76 = sadd.s32 %s75, 1
    %p79 = scmp.eq.s32.totalorder %s20, 1
    %p80 = scmp.ne.s32.totalorder %s75, %s77
    %p81 = scmp.eq.s32.totalorder %s20, 0
    %p82 = por %p80, %p81
    %p83 = scmp.ne.s32.totalorder %s75, %s77
    %p84 = scmp.eq.s32.totalorder %s25, 1
    %p85 = por %p83, %p84
    %p86 = scmp.ne.s32.totalorder %s77, %s78
    %p87 = scmp.eq.s32.totalorder %s25, 0
    %p88 = por %p86, %p87
    %p89 = scmp.ne.s32.totalorder %s77, %s78
    %p90 = scmp.eq.s32.totalorder %s26, 1
    %p91 = por %p89, %p90
    %p93 = scmp.ne.s32.totalorder %s78, %s92
    %p94 = scmp.eq.s32.totalorder %s26, 0
    %p95 = por %p93, %p94
    %s97 = sadd.s32 %s96, 1
    %p100 = scmp.eq.s32.totalorder %s20, 1
    %p101 = scmp.ne.s32.totalorder %s96, %s98
    %p102 = scmp.eq.s32.totalorder %s20, 0
    %p103 = por %p101, %p102
    %p104 = scmp.ne.s32.totalorder %s96, %s98
    %p105 = scmp.eq.s32.totalorder %s25, 1
    %p106 = por %p104, %p105
    %p107 = scmp.ne.s32.totalorder %s98, %s99
    %p108 = scmp.eq.s32.totalorder %s25, 0
    %p109 = por %p107, %p108
    %p110 = scmp.ne.s32.totalorder %s98, %s99
    %p111 = scmp.eq.s32.totalorder %s26, 1
    %p112 = por %p110, %p111
    %p114 = scmp.ne.s32.totalorder %s99, %s113
    %p115 = scmp.eq.s32.totalorder %s26, 0
    %p116 = por %p114, %p115
    %s118 = sadd.s32 %s117, 1
    %p121 = scmp.eq.s32.totalorder %s20, 1
    %p122 = scmp.ne.s32.totalorder %s117, %s119
    %p123 = scmp.eq.s32.totalorder %s20, 0
    %p124 = por %p122, %p123
    %p125 = scmp.ne.s32.totalorder %s117, %s119
    %p126 = scmp.eq.s32.totalorder %s25, 1
    %p127 = por %p125, %p126
    %p128 = scmp.ne.s32.totalorder %s119, %s120
    %p129 = scmp.eq.s32.totalorder %s25, 0
    %p130 = por %p128, %p129
    %p131 = scmp.ne.s32.totalorder %s119, %s120
    %p132 = scmp.eq.s32.totalorder %s26, 1
    %p133 = por %p131, %p132
    %p135 = scmp.ne.s32.totalorder %s120, %s134
    %p136 = scmp.eq.s32.totalorder %s26, 0
    %p137 = por %p135, %p136
    %s139 = sadd.s32 %s138, 1
    %p142 = scmp.eq.s32.totalorder %s20, 1
    %p143 = scmp.ne.s32.totalorder %s138, %s140
    %p144 = scmp.eq.s32.totalorder %s20, 0
    %p145 = por %p143, %p144
    %p146 = scmp.ne.s32.totalorder %s138, %s140
    %p147 = scmp.eq.s32.totalorder %s25, 1
    %p148 = por %p146, %p147
    %p149 = scmp.ne.s32.totalorder %s140, %s141
    %p150 = scmp.eq.s32.totalorder %s25, 0
    %p151 = por %p149, %p150
    %p152 = scmp.ne.s32.totalorder %s140, %s141
    %p153 = scmp.eq.s32.totalorder %s26, 1
    %p154 = por %p152, %p153
    %p156 = scmp.ne.s32.totalorder %s141, %s155
    %p157 = scmp.eq.s32.totalorder %s26, 0
    %p158 = por %p156, %p157
    %s160 = sadd.s32 %s159, 1
    %p163 = scmp.eq.s32.totalorder %s20, 1
    %p164 = scmp.ne.s32.totalorder %s159, %s161
    %p165 = scmp.eq.s32.totalorder %s20, 0
    %p166 = por %p164, %p165
    %p167 = scmp.ne.s32.totalorder %s159, %s161
    %p168 = scmp.eq.s32.totalorder %s25, 1
    %p169 = por %p167, %p168
    %p170 = scmp.ne.s32.totalorder %s161, %s162
    %p171 = scmp.eq.s32.totalorder %s25, 0
    %p172 = por %p170, %p171
    %p173 = scmp.ne.s32.totalorder %s161, %s162
    %p174 = scmp.eq.s32.totalorder %s26, 1
    %p175 = por %p173, %p174
    %p177 = scmp.ne.s32.totalorder %s162, %s176
    %p178 = scmp.eq.s32.totalorder %s26, 0
    %p179 = por %p177, %p178
    %s181 = sadd.s32 %s180, 1
    %p184 = scmp.eq.s32.totalorder %s20, 1
    %p185 = scmp.ne.s32.totalorder %s180, %s182
    %p186 = scmp.eq.s32.totalorder %s20, 0
    %p187 = por %p185, %p186
    %p188 = scmp.ne.s32.totalorder %s180, %s182
    %p189 = scmp.eq.s32.totalorder %s25, 1
    %p190 = por %p188, %p189
    %p191 = scmp.ne.s32.totalorder %s182, %s183
    %p192 = scmp.eq.s32.totalorder %s25, 0
    %p193 = por %p191, %p192
    %p194 = scmp.ne.s32.totalorder %s182, %s183
    %p195 = scmp.eq.s32.totalorder %s26, 1
    %p196 = por %p194, %p195
    %p198 = scmp.ne.s32.totalorder %s183, %s197
    %p199 = scmp.eq.s32.totalorder %s26, 0
    %p200 = por %p198, %p199
    %s202 = sadd.s32 %s201, 1
    %p205 = scmp.eq.s32.totalorder %s20, 1
    %p206 = scmp.ne.s32.totalorder %s201, %s203
    %p207 = scmp.eq.s32.totalorder %s20, 0
    %p208 = por %p206, %p207
    %p209 = scmp.ne.s32.totalorder %s201, %s203
    %p210 = scmp.eq.s32.totalorder %s25, 1
    %p211 = por %p209, %p210
    %p212 = scmp.ne.s32.totalorder %s203, %s204
    %p213 = scmp.eq.s32.totalorder %s25, 0
    %p214 = por %p212, %p213
    %p215 = scmp.ne.s32.totalorder %s203, %s204
    %p216 = scmp.eq.s32.totalorder %s26, 1
    %p217 = por %p215, %p216
    %p219 = scmp.ne.s32.totalorder %s204, %s218
    %p220 = scmp.eq.s32.totalorder %s26, 0
    %p221 = por %p219, %p220
    %s223 = sadd.s32 %s222, 1
    %p226 = scmp.eq.s32.totalorder %s20, 1
    %p227 = scmp.ne.s32.totalorder %s222, %s224
    %p228 = scmp.eq.s32.totalorder %s20, 0
    %p229 = por %p227, %p228
    %p230 = scmp.ne.s32.totalorder %s222, %s224
    %p231 = scmp.eq.s32.totalorder %s25, 1
    %p232 = por %p230, %p231
    %p233 = scmp.ne.s32.totalorder %s224, %s225
    %p234 = scmp.eq.s32.totalorder %s25, 0
    %p235 = por %p233, %p234
    %p236 = scmp.ne.s32.totalorder %s224, %s225
    %p237 = scmp.eq.s32.totalorder %s26, 1
    %p238 = por %p236, %p237
    %p240 = scmp.ne.s32.totalorder %s225, %s239
    %p241 = scmp.eq.s32.totalorder %s26, 0
    %p242 = por %p240, %p241
    %s244 = sadd.s32 %s243, 1
    %p247 = scmp.eq.s32.totalorder %s20, 1
    %p248 = scmp.ne.s32.totalorder %s243, %s245
    %p249 = scmp.eq.s32.totalorder %s20, 0
    %p250 = por %p248, %p249
    %p251 = scmp.ne.s32.totalorder %s243, %s245
    %p252 = scmp.eq.s32.totalorder %s25, 1
    %p253 = por %p251, %p252
    %p254 = scmp.ne.s32.totalorder %s245, %s246
    %p255 = scmp.eq.s32.totalorder %s25, 0
    %p256 = por %p254, %p255
    %p257 = scmp.ne.s32.totalorder %s245, %s246
    %p258 = scmp.eq.s32.totalorder %s26, 1
    %p259 = por %p257, %p258
    %p261 = scmp.ne.s32.totalorder %s246, %s260
    %p262 = scmp.eq.s32.totalorder %s26, 0
    %p263 = por %p261, %p262
    %s265 = sadd.s32 %s264, 1
    %p268 = scmp.eq.s32.totalorder %s20, 1
    %p269 = scmp.ne.s32.totalorder %s264, %s266
    %p270 = scmp.eq.s32.totalorder %s20, 0
    %p271 = por %p269, %p270
    %p272 = scmp.ne.s32.totalorder %s264, %s266
    %p273 = scmp.eq.s32.totalorder %s25, 1
    %p274 = por %p272, %p273
    %p275 = scmp.ne.s32.totalorder %s266, %s267
    %p276 = scmp.eq.s32.totalorder %s25, 0
    %p277 = por %p275, %p276
    %p278 = scmp.ne.s32.totalorder %s266, %s267
    %p279 = scmp.eq.s32.totalorder %s26, 1
    %p280 = por %p278, %p279
    %p282 = scmp.ne.s32.totalorder %s267, %s281
    %p283 = scmp.eq.s32.totalorder %s26, 0
    %p284 = por %p282, %p283
    %s286 = sadd.s32 %s285, 1
    %p289 = scmp.eq.s32.totalorder %s20, 1
    %p290 = scmp.ne.s32.totalorder %s285, %s287
    %p291 = scmp.eq.s32.totalorder %s20, 0
    %p292 = por %p290, %p291
    %p293 = scmp.ne.s32.totalorder %s285, %s287
    %p294 = scmp.eq.s32.totalorder %s25, 1
    %p295 = por %p293, %p294
    %p296 = scmp.ne.s32.totalorder %s287, %s288
    %p297 = scmp.eq.s32.totalorder %s25, 0
    %p298 = por %p296, %p297
    %p299 = scmp.ne.s32.totalorder %s287, %s288
    %p300 = scmp.eq.s32.totalorder %s26, 1
    %p301 = por %p299, %p300
    %p303 = scmp.ne.s32.totalorder %s288, %s302
    %p304 = scmp.eq.s32.totalorder %s26, 0
    %p305 = por %p303, %p304
    %s307 = sadd.s32 %s306, 1
    %p310 = scmp.eq.s32.totalorder %s20, 1
    %p311 = scmp.ne.s32.totalorder %s306, %s308
    %p312 = scmp.eq.s32.totalorder %s20, 0
    %p313 = por %p311, %p312
    %p314 = scmp.ne.s32.totalorder %s306, %s308
    %p315 = scmp.eq.s32.totalorder %s25, 1
    %p316 = por %p314, %p315
    %p317 = scmp.ne.s32.totalorder %s308, %s309
    %p318 = scmp.eq.s32.totalorder %s25, 0
    %p319 = por %p317, %p318
    %p320 = scmp.ne.s32.totalorder %s308, %s309
    %p321 = scmp.eq.s32.totalorder %s26, 1
    %p322 = por %p320, %p321
    %p324 = scmp.ne.s32.totalorder %s309, %s323
    %p325 = scmp.eq.s32.totalorder %s26, 0
    %p326 = por %p324, %p325
    %s327 = ssub.s32 %s20, %s27
    %p328 = scmp.eq.s32.totalorder %s327, 0
    %s330 = sadd.s32 %s329, 1
    %s331 = scalar_select %p328, %s329, %s330
    %p334 = pneg %p328
    %p335 = scmp.eq.s32.totalorder %s20, 1
    %p336 = por %p334, %p335
    %p337 = scmp.ne.s32.totalorder %s329, %s332
    %p338 = scmp.eq.s32.totalorder %s20, 0
    %p339 = por %p337, %p338
    %p340 = scmp.ne.s32.totalorder %s329, %s332
    %p341 = scmp.eq.s32.totalorder %s25, 1
    %p342 = por %p340, %p341
    %p343 = scmp.ne.s32.totalorder %s332, %s333
    %p344 = scmp.eq.s32.totalorder %s25, 0
    %p345 = por %p343, %p344
    %p346 = scmp.ne.s32.totalorder %s332, %s333
    %p347 = scmp.eq.s32.totalorder %s26, 1
    %p348 = por %p346, %p347
    %p350 = scmp.ne.s32.totalorder %s333, %s349
    %p351 = scmp.eq.s32.totalorder %s26, 0
    %p352 = por %p350, %p351
    %p353 = scmp.le.s32.totalorder 1, %s20
    %p354 = scmp.lt.s32.totalorder %s20, 3
    %p355 = pnand %p353, %p354
    %p356 = pneg %p355
    // Predicated region
    $region9: #{tpu_custom_call.1} parent=5 // pred_check
      _
    $region10: #{tpu_custom_call.1} parent=5 // pred_check_branch
      %358 = sbr.rel (%p355) target = $region12
    $region11: #{tpu_custom_call.1} parent=5 // pred_region
      %s359 = ssub.s32 %s20, 1
      // Predicated region
      $region13: #{tpu_custom_call.1} parent=11 // pred_check
        %p360 = pneg %p67
      $region14: #{tpu_custom_call.1} parent=11 // pred_check_branch
        %362 = sbr.rel (%p360) target = $region16
      $region15: #{tpu_custom_call.1} parent=11 // pred_region
        _
      $region16: #{tpu_custom_call.1} parent=11 // pred_fallthru
        _
      // Predicated region
      $region17: #{tpu_custom_call.1} parent=11 // pred_check
        %p363 = pneg %p88
      $region18: #{tpu_custom_call.1} parent=11 // pred_check_branch
        %365 = sbr.rel (%p363) target = $region20
      $region19: #{tpu_custom_call.1} parent=11 // pred_region
        _
      $region20: #{tpu_custom_call.1} parent=11 // pred_fallthru
        _
      // Predicated region
      $region21: #{tpu_custom_call.1} parent=11 // pred_check
        %p366 = pneg %p109
      $region22: #{tpu_custom_call.1} parent=11 // pred_check_branch
        %368 = sbr.rel (%p366) target = $region24
      $region23: #{tpu_custom_call.1} parent=11 // pred_region
        _
      $region24: #{tpu_custom_call.1} parent=11 // pred_fallthru
        _
      // Predicated region
      $region25: #{tpu_custom_call.1} parent=11 // pred_check
        %p369 = pneg %p130
      $region26: #{tpu_custom_call.1} parent=11 // pred_check_branch
        %371 = sbr.rel (%p369) target = $region28
      $region27: #{tpu_custom_call.1} parent=11 // pred_region
        _
      $region28: #{tpu_custom_call.1} parent=11 // pred_fallthru
        _
      // Predicated region
      $region29: #{tpu_custom_call.1} parent=11 // pred_check
        %p372 = pneg %p151
      $region30: #{tpu_custom_call.1} parent=11 // pred_check_branch
        %374 = sbr.rel (%p372) target = $region32
      $region31: #{tpu_custom_call.1} parent=11 // pred_region
        _
      $region32: #{tpu_custom_call.1} parent=11 // pred_fallthru
        _
      // Predicated region
      $region33: #{tpu_custom_call.1} parent=11 // pred_check
        %p375 = pneg %p172
      $region34: #{tpu_custom_call.1} parent=11 // pred_check_branch
        %377 = sbr.rel (%p375) target = $region36
      $region35: #{tpu_custom_call.1} parent=11 // pred_region
        _
      $region36: #{tpu_custom_call.1} parent=11 // pred_fallthru
        _
      // Predicated region
      $region37: #{tpu_custom_call.1} parent=11 // pred_check
        %p378 = pneg %p193
      $region38: #{tpu_custom_call.1} parent=11 // pred_check_branch
        %380 = sbr.rel (%p378) target = $region40
      $region39: #{tpu_custom_call.1} parent=11 // pred_region
        _
      $region40: #{tpu_custom_call.1} parent=11 // pred_fallthru
        _
      // Predicated region
      $region41: #{tpu_custom_call.1} parent=11 // pred_check
        %p381 = pneg %p214
      $region42: #{tpu_custom_call.1} parent=11 // pred_check_branch
        %383 = sbr.rel (%p381) target = $region44
      $region43: #{tpu_custom_call.1} parent=11 // pred_region
        _
      $region44: #{tpu_custom_call.1} parent=11 // pred_fallthru
        _
      // Predicated region
      $region45: #{tpu_custom_call.1} parent=11 // pred_check
        %p384 = pneg %p235
      $region46: #{tpu_custom_call.1} parent=11 // pred_check_branch
        %386 = sbr.rel (%p384) target = $region48
      $region47: #{tpu_custom_call.1} parent=11 // pred_region
        _
      $region48: #{tpu_custom_call.1} parent=11 // pred_fallthru
        _
      // Predicated region
      $region49: #{tpu_custom_call.1} parent=11 // pred_check
        %p387 = pneg %p256
      $region50: #{tpu_custom_call.1} parent=11 // pred_check_branch
        %389 = sbr.rel (%p387) target = $region52
      $region51: #{tpu_custom_call.1} parent=11 // pred_region
        _
      $region52: #{tpu_custom_call.1} parent=11 // pred_fallthru
        _
      // Predicated region
      $region53: #{tpu_custom_call.1} parent=11 // pred_check
        %p390 = pneg %p277
      $region54: #{tpu_custom_call.1} parent=11 // pred_check_branch
        %392 = sbr.rel (%p390) target = $region56
      $region55: #{tpu_custom_call.1} parent=11 // pred_region
        _
      $region56: #{tpu_custom_call.1} parent=11 // pred_fallthru
        _
      // Predicated region
      $region57: #{tpu_custom_call.1} parent=11 // pred_check
        %p393 = pneg %p298
      $region58: #{tpu_custom_call.1} parent=11 // pred_check_branch
        %395 = sbr.rel (%p393) target = $region60
      $region59: #{tpu_custom_call.1} parent=11 // pred_region
        _
      $region60: #{tpu_custom_call.1} parent=11 // pred_fallthru
        _
      // Predicated region
      $region61: #{tpu_custom_call.1} parent=11 // pred_check
        %p396 = pneg %p319
      $region62: #{tpu_custom_call.1} parent=11 // pred_check_branch
        %398 = sbr.rel (%p396) target = $region64
      $region63: #{tpu_custom_call.1} parent=11 // pred_region
        _
      $region64: #{tpu_custom_call.1} parent=11 // pred_fallthru
        _
    $region12: #{tpu_custom_call.1} parent=5 // pred_fallthru
      _
    %p399 = scmp.lt.s32.totalorder %s20, 2
    // Predicated region
    $region65: #{tpu_custom_call.1} parent=5 // pred_check
      %p400 = pneg %p399
    $region66: #{tpu_custom_call.1} parent=5 // pred_check_branch
      %402 = sbr.rel (%p400) target = $region68
    $region67: #{tpu_custom_call.1} parent=5 // pred_region
      // Predicated region
      $region69: #{tpu_custom_call.1} parent=67 // pred_check
        %p403 = pneg %p40
      $region70: #{tpu_custom_call.1} parent=67 // pred_check_branch
        %405 = sbr.rel (%p403) target = $region72
      $region71: #{tpu_custom_call.1} parent=67 // pred_region
        %p406 = scmp.lt.s32.totalorder %s20, 1
        %s407 = scalar_select %p406, %s20, 1
        %s408 = smul.addr %s407, 32
        %s409 = smul.addr %s408, 8
        %s410 = scalar_lea.vmem %s0, %s409
      $region72: #{tpu_custom_call.1} parent=67 // pred_fallthru
        _
    $region68: #{tpu_custom_call.1} parent=5 // pred_fallthru
      _
    %p411 = scmp.le.s32.totalorder 1, %s20
    %p412 = scmp.lt.s32.totalorder %s20, 3
    %p413 = pnand %p411, %p412
    %p414 = pneg %p413
    // Predicated region
    $region73: #{tpu_custom_call.1} parent=5 // pred_check
      _
    $region74: #{tpu_custom_call.1} parent=5 // pred_check_branch
      %416 = sbr.rel (%p413) target = $region76
    $region75: #{tpu_custom_call.1} parent=5 // pred_region
      %s417 = ssub.s32 %s20, 1
      %p418 = scmp.lt.s32.totalorder %s25, 1
      %s419 = scalar_select %p418, %s25, 1
      %s420 = smul.addr %s419, 32
      %s421 = smul.addr %s420, 8
      %s422 = scalar_lea.vmem %s0, %s421
      %p423 = pneg %p46
      %p424 = pneg %p43
      %p425 = pneg %p67
      %p426 = pneg %p64
      %p427 = pneg %p88
      %p428 = pneg %p85
      %p429 = pneg %p109
      %p430 = pneg %p106
      %p431 = pneg %p130
      %p432 = pneg %p127
      %p433 = pneg %p151
      %p434 = pneg %p148
      %p435 = pneg %p172
      %p436 = pneg %p169
      %p437 = pneg %p193
      %p438 = pneg %p190
      %p439 = pneg %p214
      %p440 = pneg %p211
      %p441 = pneg %p235
      %p442 = pneg %p232
      %p443 = pneg %p256
      %p444 = pneg %p253
      %p445 = pneg %p277
      %p446 = pneg %p274
      %p447 = pneg %p298
      %p448 = pneg %p295
      %p449 = pneg %p319
      %p450 = pneg %p316
      %p451 = pneg %p345
      %p452 = pneg %p342
      %p453 = scmp.lt.s32.totalorder %s25, 1
      %s454 = scalar_select %p453, %s25, 1
      %s455 = smul.addr %s454, 8
      %s456 = smul.addr %s455, 8
      %s457 = scalar_lea.vmem %s14, %s456
      %p458 = scmp.lt.s32.totalorder %s25, 1
      %s459 = scalar_select %p458, %s25, 1
      %s460 = smul.addr %s459, 32
      %s461 = smul.addr %s460, 8
      %s462 = scalar_lea.vmem %s0, %s461
      %p463 = scmp.lt.s32.totalorder %s25, 1
      %s464 = scalar_select %p463, %s25, 1
      %s465 = smul.addr %s464, 8
      %s466 = smul.addr %s465, 8
      %s467 = scalar_lea.vmem %s14, %s466
      %v468 = vld [vmem:[%s462] sm:$0xff]
      %v469 = vld [vmem:[%s462 + $0x8] sm:$0xff]
      %v470 = vld [vmem:[%s462 + $0x10] sm:$0xff]
      %v471 = vld [vmem:[%s462 + $0x18] sm:$0xff]
      %v472 = vld [vmem:[%s462 + $0x20] sm:$0xff]
      %v473 = vld [vmem:[%s462 + $0x28] sm:$0xff]
      %v474 = vld [vmem:[%s462 + $0x30] sm:$0xff]
      %v475 = vld [vmem:[%s462 + $0x38] sm:$0xff]
      %v476 = vld [vmem:[%s462 + $0x40] sm:$0xff]
      %v477 = vld [vmem:[%s462 + $0x48] sm:$0xff]
      %v478 = vld [vmem:[%s462 + $0x50] sm:$0xff]
      %v479 = vld [vmem:[%s462 + $0x58] sm:$0xff]
      %v480 = vld [vmem:[%s462 + $0x60] sm:$0xff]
      %v481 = vld [vmem:[%s462 + $0x68] sm:$0xff]
      %v482 = vld [vmem:[%s462 + $0x70] sm:$0xff]
      %v483 = vld [vmem:[%s462 + $0x78] sm:$0xff]
      %v484 = vld [vmem:[%s462 + $0x80] sm:$0xff]
      %v485 = vld [vmem:[%s462 + $0x88] sm:$0xff]
      %v486 = vld [vmem:[%s462 + $0x90] sm:$0xff]
      %v487 = vld [vmem:[%s462 + $0x98] sm:$0xff]
      %v488 = vld [vmem:[%s462 + $0xa0] sm:$0xff]
      %v489 = vld [vmem:[%s462 + $0xa8] sm:$0xff]
      %v490 = vld [vmem:[%s462 + $0xb0] sm:$0xff]
      %v491 = vld [vmem:[%s462 + $0xb8] sm:$0xff]
      %v492 = vld [vmem:[%s462 + $0xc0] sm:$0xff]
      %v493 = vld [vmem:[%s462 + $0xc8] sm:$0xff]
      %v494 = vld [vmem:[%s462 + $0xd0] sm:$0xff]
      %v495 = vld [vmem:[%s462 + $0xd8] sm:$0xff]
      %v496 = vld [vmem:[%s462 + $0xe0] sm:$0xff]
      %v497 = vld [vmem:[%s462 + $0xe8] sm:$0xff]
      %v498 = vld [vmem:[%s462 + $0xf0] sm:$0xff]
      %v499 = vld [vmem:[%s462 + $0xf8] sm:$0xff]
      %v500 = vadd.f32 %v468, %v470
      %v501 = vadd.f32 %v469, %v471
      %v502 = vadd.f32 %v472, %v474
      %v503 = vadd.f32 %v473, %v475
      %v504 = vadd.f32 %v476, %v478
      %v505 = vadd.f32 %v477, %v479
      %v506 = vadd.f32 %v480, %v482
      %v507 = vadd.f32 %v481, %v483
      %v508 = vadd.f32 %v484, %v486
      %v509 = vadd.f32 %v485, %v487
      %v510 = vadd.f32 %v488, %v490
      %v511 = vadd.f32 %v489, %v491
      %v512 = vadd.f32 %v492, %v494
      %v513 = vadd.f32 %v493, %v495
      %v514 = vadd.f32 %v496, %v498
      %v515 = vadd.f32 %v497, %v499
      %v532 = vcombine.high %v500, %v500
      %v534 = vunpack.c.l.s4 1983009808
      %v535 = vunpack.c.0.s8 %v534
      %v536 = vlaneseq
      %v537 = vshrl.u32 %v536, 7
      %v538 = vsub.s32 %v535, %v537
      %v539 = vrot.slane %v500, %v538
      %v541 = vunpack.c.l.s4 1983009808
      %v542 = vunpack.c.0.s8 %v541
      %v543 = vlaneseq
      %v544 = vshrl.u32 %v543, 7
      %v545 = vsub.s32 %v542, %v544
      %v546 = vrot.slane %v532, %v545
      %v547 = vcombine.high %v539, %v539
      %v548 = vcombine.high %v546, %v546
      %v549 = vcombine.high %v501, %v501
      %v551 = vunpack.c.l.s4 1983009808
      %v552 = vunpack.c.0.s8 %v551
      %v553 = vlaneseq
      %v554 = vshrl.u32 %v553, 7
      %v555 = vsub.s32 %v552, %v554
      %v556 = vrot.slane %v501, %v555
      %v558 = vunpack.c.l.s4 1983009808
      %v559 = vunpack.c.0.s8 %v558
      %v560 = vlaneseq
      %v561 = vshrl.u32 %v560, 7
      %v562 = vsub.s32 %v559, %v561
      %v563 = vrot.slane %v549, %v562
      %v564 = vcombine.high %v556, %v556
      %v565 = vcombine.high %v563, %v563
      %v566 = vcombine.high %v502, %v502
      %v568 = vunpack.c.l.s4 1983009808
      %v569 = vunpack.c.0.s8 %v568
      %v570 = vlaneseq
      %v571 = vshrl.u32 %v570, 7
      %v572 = vsub.s32 %v569, %v571
      %v573 = vrot.slane %v502, %v572
      %v575 = vunpack.c.l.s4 1983009808
      %v576 = vunpack.c.0.s8 %v575
      %v577 = vlaneseq
      %v578 = vshrl.u32 %v577, 7
      %v579 = vsub.s32 %v576, %v578
      %v580 = vrot.slane %v566, %v579
      %v581 = vcombine.high %v573, %v573
      %v582 = vcombine.high %v580, %v580
      %v583 = vcombine.high %v503, %v503
      %v585 = vunpack.c.l.s4 1983009808
      %v586 = vunpack.c.0.s8 %v585
      %v587 = vlaneseq
      %v588 = vshrl.u32 %v587, 7
      %v589 = vsub.s32 %v586, %v588
      %v590 = vrot.slane %v503, %v589
      %v592 = vunpack.c.l.s4 1983009808
      %v593 = vunpack.c.0.s8 %v592
      %v594 = vlaneseq
      %v595 = vshrl.u32 %v594, 7
      %v596 = vsub.s32 %v593, %v595
      %v597 = vrot.slane %v583, %v596
      %v598 = vcombine.high %v590, %v590
      %v599 = vcombine.high %v597, %v597
      %v600 = vcombine.high %v504, %v504
      %v602 = vunpack.c.l.s4 1983009808
      %v603 = vunpack.c.0.s8 %v602
      %v604 = vlaneseq
      %v605 = vshrl.u32 %v604, 7
      %v606 = vsub.s32 %v603, %v605
      %v607 = vrot.slane %v504, %v606
      %v609 = vunpack.c.l.s4 1983009808
      %v610 = vunpack.c.0.s8 %v609
      %v611 = vlaneseq
      %v612 = vshrl.u32 %v611, 7
      %v613 = vsub.s32 %v610, %v612
      %v614 = vrot.slane %v600, %v613
      %v615 = vcombine.high %v607, %v607
      %v616 = vcombine.high %v614, %v614
      %v617 = vcombine.high %v505, %v505
      %v619 = vunpack.c.l.s4 1983009808
      %v620 = vunpack.c.0.s8 %v619
      %v621 = vlaneseq
      %v622 = vshrl.u32 %v621, 7
      %v623 = vsub.s32 %v620, %v622
      %v624 = vrot.slane %v505, %v623
      %v626 = vunpack.c.l.s4 1983009808
      %v627 = vunpack.c.0.s8 %v626
      %v628 = vlaneseq
      %v629 = vshrl.u32 %v628, 7
      %v630 = vsub.s32 %v627, %v629
      %v631 = vrot.slane %v617, %v630
      %v632 = vcombine.high %v624, %v624
      %v633 = vcombine.high %v631, %v631
      %v634 = vcombine.high %v506, %v506
      %v636 = vunpack.c.l.s4 1983009808
      %v637 = vunpack.c.0.s8 %v636
      %v638 = vlaneseq
      %v639 = vshrl.u32 %v638, 7
      %v640 = vsub.s32 %v637, %v639
      %v641 = vrot.slane %v506, %v640
      %v643 = vunpack.c.l.s4 1983009808
      %v644 = vunpack.c.0.s8 %v643
      %v645 = vlaneseq
      %v646 = vshrl.u32 %v645, 7
      %v647 = vsub.s32 %v644, %v646
      %v648 = vrot.slane %v634, %v647
      %v649 = vcombine.high %v641, %v641
      %v650 = vcombine.high %v648, %v648
      %v651 = vcombine.high %v507, %v507
      %v653 = vunpack.c.l.s4 1983009808
      %v654 = vunpack.c.0.s8 %v653
      %v655 = vlaneseq
      %v656 = vshrl.u32 %v655, 7
      %v657 = vsub.s32 %v654, %v656
      %v658 = vrot.slane %v507, %v657
      %v660 = vunpack.c.l.s4 1983009808
      %v661 = vunpack.c.0.s8 %v660
      %v662 = vlaneseq
      %v663 = vshrl.u32 %v662, 7
      %v664 = vsub.s32 %v661, %v663
      %v665 = vrot.slane %v651, %v664
      %v666 = vcombine.high %v658, %v658
      %v667 = vcombine.high %v665, %v665
      %v668 = vcombine.high %v508, %v508
      %v670 = vunpack.c.l.s4 1983009808
      %v671 = vunpack.c.0.s8 %v670
      %v672 = vlaneseq
      %v673 = vshrl.u32 %v672, 7
      %v674 = vsub.s32 %v671, %v673
      %v675 = vrot.slane %v508, %v674
      %v677 = vunpack.c.l.s4 1983009808
      %v678 = vunpack.c.0.s8 %v677
      %v679 = vlaneseq
      %v680 = vshrl.u32 %v679, 7
      %v681 = vsub.s32 %v678, %v680
      %v682 = vrot.slane %v668, %v681
      %v683 = vcombine.high %v675, %v675
      %v684 = vcombine.high %v682, %v682
      %v685 = vcombine.high %v509, %v509
      %v687 = vunpack.c.l.s4 1983009808
      %v688 = vunpack.c.0.s8 %v687
      %v689 = vlaneseq
      %v690 = vshrl.u32 %v689, 7
      %v691 = vsub.s32 %v688, %v690
      %v692 = vrot.slane %v509, %v691
      %v694 = vunpack.c.l.s4 1983009808
      %v695 = vunpack.c.0.s8 %v694
      %v696 = vlaneseq
      %v697 = vshrl.u32 %v696, 7
      %v698 = vsub.s32 %v695, %v697
      %v699 = vrot.slane %v685, %v698
      %v700 = vcombine.high %v692, %v692
      %v701 = vcombine.high %v699, %v699
      %v702 = vcombine.high %v510, %v510
      %v704 = vunpack.c.l.s4 1983009808
      %v705 = vunpack.c.0.s8 %v704
      %v706 = vlaneseq
      %v707 = vshrl.u32 %v706, 7
      %v708 = vsub.s32 %v705, %v707
      %v709 = vrot.slane %v510, %v708
      %v711 = vunpack.c.l.s4 1983009808
      %v712 = vunpack.c.0.s8 %v711
      %v713 = vlaneseq
      %v714 = vshrl.u32 %v713, 7
      %v715 = vsub.s32 %v712, %v714
      %v716 = vrot.slane %v702, %v715
      %v717 = vcombine.high %v709, %v709
      %v718 = vcombine.high %v716, %v716
      %v719 = vcombine.high %v511, %v511
      %v721 = vunpack.c.l.s4 1983009808
      %v722 = vunpack.c.0.s8 %v721
      %v723 = vlaneseq
      %v724 = vshrl.u32 %v723, 7
      %v725 = vsub.s32 %v722, %v724
      %v726 = vrot.slane %v511, %v725
      %v728 = vunpack.c.l.s4 1983009808
      %v729 = vunpack.c.0.s8 %v728
      %v730 = vlaneseq
      %v731 = vshrl.u32 %v730, 7
      %v732 = vsub.s32 %v729, %v731
      %v733 = vrot.slane %v719, %v732
      %v734 = vcombine.high %v726, %v726
      %v735 = vcombine.high %v733, %v733
      %v736 = vcombine.high %v512, %v512
      %v738 = vunpack.c.l.s4 1983009808
      %v739 = vunpack.c.0.s8 %v738
      %v740 = vlaneseq
      %v741 = vshrl.u32 %v740, 7
      %v742 = vsub.s32 %v739, %v741
      %v743 = vrot.slane %v512, %v742
      %v745 = vunpack.c.l.s4 1983009808
      %v746 = vunpack.c.0.s8 %v745
      %v747 = vlaneseq
      %v748 = vshrl.u32 %v747, 7
      %v749 = vsub.s32 %v746, %v748
      %v750 = vrot.slane %v736, %v749
      %v751 = vcombine.high %v743, %v743
      %v752 = vcombine.high %v750, %v750
      %v753 = vcombine.high %v513, %v513
      %v755 = vunpack.c.l.s4 1983009808
      %v756 = vunpack.c.0.s8 %v755
      %v757 = vlaneseq
      %v758 = vshrl.u32 %v757, 7
      %v759 = vsub.s32 %v756, %v758
      %v760 = vrot.slane %v513, %v759
      %v762 = vunpack.c.l.s4 1983009808
      %v763 = vunpack.c.0.s8 %v762
      %v764 = vlaneseq
      %v765 = vshrl.u32 %v764, 7
      %v766 = vsub.s32 %v763, %v765
      %v767 = vrot.slane %v753, %v766
      %v768 = vcombine.high %v760, %v760
      %v769 = vcombine.high %v767, %v767
      %v770 = vcombine.high %v514, %v514
      %v772 = vunpack.c.l.s4 1983009808
      %v773 = vunpack.c.0.s8 %v772
      %v774 = vlaneseq
      %v775 = vshrl.u32 %v774, 7
      %v776 = vsub.s32 %v773, %v775
      %v777 = vrot.slane %v514, %v776
      %v779 = vunpack.c.l.s4 1983009808
      %v780 = vunpack.c.0.s8 %v779
      %v781 = vlaneseq
      %v782 = vshrl.u32 %v781, 7
      %v783 = vsub.s32 %v780, %v782
      %v784 = vrot.slane %v770, %v783
      %v785 = vcombine.high %v777, %v777
      %v786 = vcombine.high %v784, %v784
      %v787 = vcombine.high %v515, %v515
      %v789 = vunpack.c.l.s4 1983009808
      %v790 = vunpack.c.0.s8 %v789
      %v791 = vlaneseq
      %v792 = vshrl.u32 %v791, 7
      %v793 = vsub.s32 %v790, %v792
      %v794 = vrot.slane %v515, %v793
      %v796 = vunpack.c.l.s4 1983009808
      %v797 = vunpack.c.0.s8 %v796
      %v798 = vlaneseq
      %v799 = vshrl.u32 %v798, 7
      %v800 = vsub.s32 %v797, %v799
      %v801 = vrot.slane %v787, %v800
      %v802 = vcombine.high %v794, %v794
      %v803 = vcombine.high %v801, %v801
      %v868 = vrot.slane %v539, 7
      %v869 = vrot.slane %v868, 2
      %v870 = vrot.slane %v547, 7
      %v871 = vrot.slane %v870, 2
      %v872 = vrot.slane %v546, 7
      %v873 = vrot.slane %v872, 2
      %v874 = vrot.slane %v548, 7
      %v875 = vrot.slane %v874, 2
      %v876 = vrot.slane %v556, 7
      %v877 = vrot.slane %v876, 2
      %v878 = vrot.slane %v564, 7
      %v879 = vrot.slane %v878, 2
      %v880 = vrot.slane %v563, 7
      %v881 = vrot.slane %v880, 2
      %v882 = vrot.slane %v565, 7
      %v883 = vrot.slane %v882, 2
      %v884 = vrot.slane %v573, 7
      %v885 = vrot.slane %v884, 2
      %v886 = vrot.slane %v581, 7
      %v887 = vrot.slane %v886, 2
      %v888 = vrot.slane %v580, 7
      %v889 = vrot.slane %v888, 2
      %v890 = vrot.slane %v582, 7
      %v891 = vrot.slane %v890, 2
      %v892 = vrot.slane %v590, 7
      %v893 = vrot.slane %v892, 2
      %v894 = vrot.slane %v598, 7
      %v895 = vrot.slane %v894, 2
      %v896 = vrot.slane %v597, 7
      %v897 = vrot.slane %v896, 2
      %v898 = vrot.slane %v599, 7
      %v899 = vrot.slane %v898, 2
      %v900 = vrot.slane %v607, 7
      %v901 = vrot.slane %v900, 2
      %v902 = vrot.slane %v615, 7
      %v903 = vrot.slane %v902, 2
      %v904 = vrot.slane %v614, 7
      %v905 = vrot.slane %v904, 2
      %v906 = vrot.slane %v616, 7
      %v907 = vrot.slane %v906, 2
      %v908 = vrot.slane %v624, 7
      %v909 = vrot.slane %v908, 2
      %v910 = vrot.slane %v632, 7
      %v911 = vrot.slane %v910, 2
      %v912 = vrot.slane %v631, 7
      %v913 = vrot.slane %v912, 2
      %v914 = vrot.slane %v633, 7
      %v915 = vrot.slane %v914, 2
      %v916 = vrot.slane %v641, 7
      %v917 = vrot.slane %v916, 2
      %v918 = vrot.slane %v649, 7
      %v919 = vrot.slane %v918, 2
      %v920 = vrot.slane %v648, 7
      %v921 = vrot.slane %v920, 2
      %v922 = vrot.slane %v650, 7
      %v923 = vrot.slane %v922, 2
      %v924 = vrot.slane %v658, 7
      %v925 = vrot.slane %v924, 2
      %v926 = vrot.slane %v666, 7
      %v927 = vrot.slane %v926, 2
      %v928 = vrot.slane %v665, 7
      %v929 = vrot.slane %v928, 2
      %v930 = vrot.slane %v667, 7
      %v931 = vrot.slane %v930, 2
      %v932 = vrot.slane %v675, 7
      %v933 = vrot.slane %v932, 2
      %v934 = vrot.slane %v683, 7
      %v935 = vrot.slane %v934, 2
      %v936 = vrot.slane %v682, 7
      %v937 = vrot.slane %v936, 2
      %v938 = vrot.slane %v684, 7
      %v939 = vrot.slane %v938, 2
      %v940 = vrot.slane %v692, 7
      %v941 = vrot.slane %v940, 2
      %v942 = vrot.slane %v700, 7
      %v943 = vrot.slane %v942, 2
      %v944 = vrot.slane %v699, 7
      %v945 = vrot.slane %v944, 2
      %v946 = vrot.slane %v701, 7
      %v947 = vrot.slane %v946, 2
      %v948 = vrot.slane %v709, 7
      %v949 = vrot.slane %v948, 2
      %v950 = vrot.slane %v717, 7
      %v951 = vrot.slane %v950, 2
      %v952 = vrot.slane %v716, 7
      %v953 = vrot.slane %v952, 2
      %v954 = vrot.slane %v718, 7
      %v955 = vrot.slane %v954, 2
      %v956 = vrot.slane %v726, 7
      %v957 = vrot.slane %v956, 2
      %v958 = vrot.slane %v734, 7
      %v959 = vrot.slane %v958, 2
      %v960 = vrot.slane %v733, 7
      %v961 = vrot.slane %v960, 2
      %v962 = vrot.slane %v735, 7
      %v963 = vrot.slane %v962, 2
      %v964 = vrot.slane %v743, 7
      %v965 = vrot.slane %v964, 2
      %v966 = vrot.slane %v751, 7
      %v967 = vrot.slane %v966, 2
      %v968 = vrot.slane %v750, 7
      %v969 = vrot.slane %v968, 2
      %v970 = vrot.slane %v752, 7
      %v971 = vrot.slane %v970, 2
      %v972 = vrot.slane %v760, 7
      %v973 = vrot.slane %v972, 2
      %v974 = vrot.slane %v768, 7
      %v975 = vrot.slane %v974, 2
      %v976 = vrot.slane %v767, 7
      %v977 = vrot.slane %v976, 2
      %v978 = vrot.slane %v769, 7
      %v979 = vrot.slane %v978, 2
      %v980 = vrot.slane %v777, 7
      %v981 = vrot.slane %v980, 2
      %v982 = vrot.slane %v785, 7
      %v983 = vrot.slane %v982, 2
      %v984 = vrot.slane %v784, 7
      %v985 = vrot.slane %v984, 2
      %v986 = vrot.slane %v786, 7
      %v987 = vrot.slane %v986, 2
      %v988 = vrot.slane %v794, 7
      %v989 = vrot.slane %v988, 2
      %v990 = vrot.slane %v802, 7
      %v991 = vrot.slane %v990, 2
      %v992 = vrot.slane %v801, 7
      %v993 = vrot.slane %v992, 2
      %v994 = vrot.slane %v803, 7
      %v995 = vrot.slane %v994, 2
      %v1060 = vadd.f32 %v539, %v869
      %v1061 = vadd.f32 %v547, %v871
      %v1062 = vadd.f32 %v546, %v873
      %v1063 = vadd.f32 %v548, %v875
      %v1064 = vadd.f32 %v556, %v877
      %v1065 = vadd.f32 %v564, %v879
      %v1066 = vadd.f32 %v563, %v881
      %v1067 = vadd.f32 %v565, %v883
      %v1068 = vadd.f32 %v573, %v885
      %v1069 = vadd.f32 %v581, %v887
      %v1070 = vadd.f32 %v580, %v889
      %v1071 = vadd.f32 %v582, %v891
      %v1072 = vadd.f32 %v590, %v893
      %v1073 = vadd.f32 %v598, %v895
      %v1074 = vadd.f32 %v597, %v897
      %v1075 = vadd.f32 %v599, %v899
      %v1076 = vadd.f32 %v607, %v901
      %v1077 = vadd.f32 %v615, %v903
      %v1078 = vadd.f32 %v614, %v905
      %v1079 = vadd.f32 %v616, %v907
      %v1080 = vadd.f32 %v624, %v909
      %v1081 = vadd.f32 %v632, %v911
      %v1082 = vadd.f32 %v631, %v913
      %v1083 = vadd.f32 %v633, %v915
      %v1084 = vadd.f32 %v641, %v917
      %v1085 = vadd.f32 %v649, %v919
      %v1086 = vadd.f32 %v648, %v921
      %v1087 = vadd.f32 %v650, %v923
      %v1088 = vadd.f32 %v658, %v925
      %v1089 = vadd.f32 %v666, %v927
      %v1090 = vadd.f32 %v665, %v929
      %v1091 = vadd.f32 %v667, %v931
      %v1092 = vadd.f32 %v675, %v933
      %v1093 = vadd.f32 %v683, %v935
      %v1094 = vadd.f32 %v682, %v937
      %v1095 = vadd.f32 %v684, %v939
      %v1096 = vadd.f32 %v692, %v941
      %v1097 = vadd.f32 %v700, %v943
      %v1098 = vadd.f32 %v699, %v945
      %v1099 = vadd.f32 %v701, %v947
      %v1100 = vadd.f32 %v709, %v949
      %v1101 = vadd.f32 %v717, %v951
      %v1102 = vadd.f32 %v716, %v953
      %v1103 = vadd.f32 %v718, %v955
      %v1104 = vadd.f32 %v726, %v957
      %v1105 = vadd.f32 %v734, %v959
      %v1106 = vadd.f32 %v733, %v961
      %v1107 = vadd.f32 %v735, %v963
      %v1108 = vadd.f32 %v743, %v965
      %v1109 = vadd.f32 %v751, %v967
      %v1110 = vadd.f32 %v750, %v969
      %v1111 = vadd.f32 %v752, %v971
      %v1112 = vadd.f32 %v760, %v973
      %v1113 = vadd.f32 %v768, %v975
      %v1114 = vadd.f32 %v767, %v977
      %v1115 = vadd.f32 %v769, %v979
      %v1116 = vadd.f32 %v777, %v981
      %v1117 = vadd.f32 %v785, %v983
      %v1118 = vadd.f32 %v784, %v985
      %v1119 = vadd.f32 %v786, %v987
      %v1120 = vadd.f32 %v794, %v989
      %v1121 = vadd.f32 %v802, %v991
      %v1122 = vadd.f32 %v801, %v993
      %v1123 = vadd.f32 %v803, %v995
      %v1124 = vmul.f32 %v1060, 0.25
      %v1125 = vmul.f32 %v1061, 0.25
      %v1126 = vmul.f32 %v1062, 0.25
      %v1127 = vmul.f32 %v1063, 0.25
      %v1128 = vmul.f32 %v1064, 0.25
      %v1129 = vmul.f32 %v1065, 0.25
      %v1130 = vmul.f32 %v1066, 0.25
      %v1131 = vmul.f32 %v1067, 0.25
      %v1132 = vmul.f32 %v1068, 0.25
      %v1133 = vmul.f32 %v1069, 0.25
      %v1134 = vmul.f32 %v1070, 0.25
      %v1135 = vmul.f32 %v1071, 0.25
      %v1136 = vmul.f32 %v1072, 0.25
      %v1137 = vmul.f32 %v1073, 0.25
      %v1138 = vmul.f32 %v1074, 0.25
      %v1139 = vmul.f32 %v1075, 0.25
      %v1140 = vmul.f32 %v1076, 0.25
      %v1141 = vmul.f32 %v1077, 0.25
      %v1142 = vmul.f32 %v1078, 0.25
      %v1143 = vmul.f32 %v1079, 0.25
      %v1144 = vmul.f32 %v1080, 0.25
      %v1145 = vmul.f32 %v1081, 0.25
      %v1146 = vmul.f32 %v1082, 0.25
      %v1147 = vmul.f32 %v1083, 0.25
      %v1148 = vmul.f32 %v1084, 0.25
      %v1149 = vmul.f32 %v1085, 0.25
      %v1150 = vmul.f32 %v1086, 0.25
      %v1151 = vmul.f32 %v1087, 0.25
      %v1152 = vmul.f32 %v1088, 0.25
      %v1153 = vmul.f32 %v1089, 0.25
      %v1154 = vmul.f32 %v1090, 0.25
      %v1155 = vmul.f32 %v1091, 0.25
      %v1156 = vmul.f32 %v1092, 0.25
      %v1157 = vmul.f32 %v1093, 0.25
      %v1158 = vmul.f32 %v1094, 0.25
      %v1159 = vmul.f32 %v1095, 0.25
      %v1160 = vmul.f32 %v1096, 0.25
      %v1161 = vmul.f32 %v1097, 0.25
      %v1162 = vmul.f32 %v1098, 0.25
      %v1163 = vmul.f32 %v1099, 0.25
      %v1164 = vmul.f32 %v1100, 0.25
      %v1165 = vmul.f32 %v1101, 0.25
      %v1166 = vmul.f32 %v1102, 0.25
      %v1167 = vmul.f32 %v1103, 0.25
      %v1168 = vmul.f32 %v1104, 0.25
      %v1169 = vmul.f32 %v1105, 0.25
      %v1170 = vmul.f32 %v1106, 0.25
      %v1171 = vmul.f32 %v1107, 0.25
      %v1172 = vmul.f32 %v1108, 0.25
      %v1173 = vmul.f32 %v1109, 0.25
      %v1174 = vmul.f32 %v1110, 0.25
      %v1175 = vmul.f32 %v1111, 0.25
      %v1176 = vmul.f32 %v1112, 0.25
      %v1177 = vmul.f32 %v1113, 0.25
      %v1178 = vmul.f32 %v1114, 0.25
      %v1179 = vmul.f32 %v1115, 0.25
      %v1180 = vmul.f32 %v1116, 0.25
      %v1181 = vmul.f32 %v1117, 0.25
      %v1182 = vmul.f32 %v1118, 0.25
      %v1183 = vmul.f32 %v1119, 0.25
      %v1184 = vmul.f32 %v1120, 0.25
      %v1185 = vmul.f32 %v1121, 0.25
      %v1186 = vmul.f32 %v1122, 0.25
      %v1187 = vmul.f32 %v1123, 0.25
      %v1188 = vld [vmem:[%s1] sm:$0xf]
      %v1253 = vlaneseq
      %v1254 = vshrl.u32 %v1253, 7
      %v1255 = vsub.s32 0, %v1254
      %v1256 = vrot.slane %v1124, %v1255
      %v1257 = vlaneseq
      %v1258 = vshrl.u32 %v1257, 7
      %v1259 = vsub.s32 0, %v1258
      %v1260 = vrot.slane %v1125, %v1259
      %v1261 = vlaneseq
      %v1262 = vshrl.u32 %v1261, 7
      %v1263 = vsub.s32 0, %v1262
      %v1264 = vrot.slane %v1126, %v1263
      %v1265 = vlaneseq
      %v1266 = vshrl.u32 %v1265, 7
      %v1267 = vsub.s32 0, %v1266
      %v1268 = vrot.slane %v1127, %v1267
      %v1269 = vlaneseq
      %v1270 = vshrl.u32 %v1269, 7
      %v1271 = vsub.s32 0, %v1270
      %v1272 = vrot.slane %v1128, %v1271
      %v1273 = vlaneseq
      %v1274 = vshrl.u32 %v1273, 7
      %v1275 = vsub.s32 0, %v1274
      %v1276 = vrot.slane %v1129, %v1275
      %v1277 = vlaneseq
      %v1278 = vshrl.u32 %v1277, 7
      %v1279 = vsub.s32 0, %v1278
      %v1280 = vrot.slane %v1130, %v1279
      %v1281 = vlaneseq
      %v1282 = vshrl.u32 %v1281, 7
      %v1283 = vsub.s32 0, %v1282
      %v1284 = vrot.slane %v1131, %v1283
      %v1285 = vlaneseq
      %v1286 = vshrl.u32 %v1285, 7
      %v1287 = vsub.s32 0, %v1286
      %v1288 = vrot.slane %v1132, %v1287
      %v1289 = vlaneseq
      %v1290 = vshrl.u32 %v1289, 7
      %v1291 = vsub.s32 0, %v1290
      %v1292 = vrot.slane %v1133, %v1291
      %v1293 = vlaneseq
      %v1294 = vshrl.u32 %v1293, 7
      %v1295 = vsub.s32 0, %v1294
      %v1296 = vrot.slane %v1134, %v1295
      %v1297 = vlaneseq
      %v1298 = vshrl.u32 %v1297, 7
      %v1299 = vsub.s32 0, %v1298
      %v1300 = vrot.slane %v1135, %v1299
      %v1301 = vlaneseq
      %v1302 = vshrl.u32 %v1301, 7
      %v1303 = vsub.s32 0, %v1302
      %v1304 = vrot.slane %v1136, %v1303
      %v1305 = vlaneseq
      %v1306 = vshrl.u32 %v1305, 7
      %v1307 = vsub.s32 0, %v1306
      %v1308 = vrot.slane %v1137, %v1307
      %v1309 = vlaneseq
      %v1310 = vshrl.u32 %v1309, 7
      %v1311 = vsub.s32 0, %v1310
      %v1312 = vrot.slane %v1138, %v1311
      %v1313 = vlaneseq
      %v1314 = vshrl.u32 %v1313, 7
      %v1315 = vsub.s32 0, %v1314
      %v1316 = vrot.slane %v1139, %v1315
      %v1317 = vlaneseq
      %v1318 = vshrl.u32 %v1317, 7
      %v1319 = vsub.s32 0, %v1318
      %v1320 = vrot.slane %v1140, %v1319
      %v1321 = vlaneseq
      %v1322 = vshrl.u32 %v1321, 7
      %v1323 = vsub.s32 0, %v1322
      %v1324 = vrot.slane %v1141, %v1323
      %v1325 = vlaneseq
      %v1326 = vshrl.u32 %v1325, 7
      %v1327 = vsub.s32 0, %v1326
      %v1328 = vrot.slane %v1142, %v1327
      %v1329 = vlaneseq
      %v1330 = vshrl.u32 %v1329, 7
      %v1331 = vsub.s32 0, %v1330
      %v1332 = vrot.slane %v1143, %v1331
      %v1333 = vlaneseq
      %v1334 = vshrl.u32 %v1333, 7
      %v1335 = vsub.s32 0, %v1334
      %v1336 = vrot.slane %v1144, %v1335
      %v1337 = vlaneseq
      %v1338 = vshrl.u32 %v1337, 7
      %v1339 = vsub.s32 0, %v1338
      %v1340 = vrot.slane %v1145, %v1339
      %v1341 = vlaneseq
      %v1342 = vshrl.u32 %v1341, 7
      %v1343 = vsub.s32 0, %v1342
      %v1344 = vrot.slane %v1146, %v1343
      %v1345 = vlaneseq
      %v1346 = vshrl.u32 %v1345, 7
      %v1347 = vsub.s32 0, %v1346
      %v1348 = vrot.slane %v1147, %v1347
      %v1349 = vlaneseq
      %v1350 = vshrl.u32 %v1349, 7
      %v1351 = vsub.s32 0, %v1350
      %v1352 = vrot.slane %v1148, %v1351
      %v1353 = vlaneseq
      %v1354 = vshrl.u32 %v1353, 7
      %v1355 = vsub.s32 0, %v1354
      %v1356 = vrot.slane %v1149, %v1355
      %v1357 = vlaneseq
      %v1358 = vshrl.u32 %v1357, 7
      %v1359 = vsub.s32 0, %v1358
      %v1360 = vrot.slane %v1150, %v1359
      %v1361 = vlaneseq
      %v1362 = vshrl.u32 %v1361, 7
      %v1363 = vsub.s32 0, %v1362
      %v1364 = vrot.slane %v1151, %v1363
      %v1365 = vlaneseq
      %v1366 = vshrl.u32 %v1365, 7
      %v1367 = vsub.s32 0, %v1366
      %v1368 = vrot.slane %v1152, %v1367
      %v1369 = vlaneseq
      %v1370 = vshrl.u32 %v1369, 7
      %v1371 = vsub.s32 0, %v1370
      %v1372 = vrot.slane %v1153, %v1371
      %v1373 = vlaneseq
      %v1374 = vshrl.u32 %v1373, 7
      %v1375 = vsub.s32 0, %v1374
      %v1376 = vrot.slane %v1154, %v1375
      %v1377 = vlaneseq
      %v1378 = vshrl.u32 %v1377, 7
      %v1379 = vsub.s32 0, %v1378
      %v1380 = vrot.slane %v1155, %v1379
      %v1381 = vlaneseq
      %v1382 = vshrl.u32 %v1381, 7
      %v1383 = vsub.s32 0, %v1382
      %v1384 = vrot.slane %v1156, %v1383
      %v1385 = vlaneseq
      %v1386 = vshrl.u32 %v1385, 7
      %v1387 = vsub.s32 0, %v1386
      %v1388 = vrot.slane %v1157, %v1387
      %v1389 = vlaneseq
      %v1390 = vshrl.u32 %v1389, 7
      %v1391 = vsub.s32 0, %v1390
      %v1392 = vrot.slane %v1158, %v1391
      %v1393 = vlaneseq
      %v1394 = vshrl.u32 %v1393, 7
      %v1395 = vsub.s32 0, %v1394
      %v1396 = vrot.slane %v1159, %v1395
      %v1397 = vlaneseq
      %v1398 = vshrl.u32 %v1397, 7
      %v1399 = vsub.s32 0, %v1398
      %v1400 = vrot.slane %v1160, %v1399
      %v1401 = vlaneseq
      %v1402 = vshrl.u32 %v1401, 7
      %v1403 = vsub.s32 0, %v1402
      %v1404 = vrot.slane %v1161, %v1403
      %v1405 = vlaneseq
      %v1406 = vshrl.u32 %v1405, 7
      %v1407 = vsub.s32 0, %v1406
      %v1408 = vrot.slane %v1162, %v1407
      %v1409 = vlaneseq
      %v1410 = vshrl.u32 %v1409, 7
      %v1411 = vsub.s32 0, %v1410
      %v1412 = vrot.slane %v1163, %v1411
      %v1413 = vlaneseq
      %v1414 = vshrl.u32 %v1413, 7
      %v1415 = vsub.s32 0, %v1414
      %v1416 = vrot.slane %v1164, %v1415
      %v1417 = vlaneseq
      %v1418 = vshrl.u32 %v1417, 7
      %v1419 = vsub.s32 0, %v1418
      %v1420 = vrot.slane %v1165, %v1419
      %v1421 = vlaneseq
      %v1422 = vshrl.u32 %v1421, 7
      %v1423 = vsub.s32 0, %v1422
      %v1424 = vrot.slane %v1166, %v1423
      %v1425 = vlaneseq
      %v1426 = vshrl.u32 %v1425, 7
      %v1427 = vsub.s32 0, %v1426
      %v1428 = vrot.slane %v1167, %v1427
      %v1429 = vlaneseq
      %v1430 = vshrl.u32 %v1429, 7
      %v1431 = vsub.s32 0, %v1430
      %v1432 = vrot.slane %v1168, %v1431
      %v1433 = vlaneseq
      %v1434 = vshrl.u32 %v1433, 7
      %v1435 = vsub.s32 0, %v1434
      %v1436 = vrot.slane %v1169, %v1435
      %v1437 = vlaneseq
      %v1438 = vshrl.u32 %v1437, 7
      %v1439 = vsub.s32 0, %v1438
      %v1440 = vrot.slane %v1170, %v1439
      %v1441 = vlaneseq
      %v1442 = vshrl.u32 %v1441, 7
      %v1443 = vsub.s32 0, %v1442
      %v1444 = vrot.slane %v1171, %v1443
      %v1445 = vlaneseq
      %v1446 = vshrl.u32 %v1445, 7
      %v1447 = vsub.s32 0, %v1446
      %v1448 = vrot.slane %v1172, %v1447
      %v1449 = vlaneseq
      %v1450 = vshrl.u32 %v1449, 7
      %v1451 = vsub.s32 0, %v1450
      %v1452 = vrot.slane %v1173, %v1451
      %v1453 = vlaneseq
      %v1454 = vshrl.u32 %v1453, 7
      %v1455 = vsub.s32 0, %v1454
      %v1456 = vrot.slane %v1174, %v1455
      %v1457 = vlaneseq
      %v1458 = vshrl.u32 %v1457, 7
      %v1459 = vsub.s32 0, %v1458
      %v1460 = vrot.slane %v1175, %v1459
      %v1461 = vlaneseq
      %v1462 = vshrl.u32 %v1461, 7
      %v1463 = vsub.s32 0, %v1462
      %v1464 = vrot.slane %v1176, %v1463
      %v1465 = vlaneseq
      %v1466 = vshrl.u32 %v1465, 7
      %v1467 = vsub.s32 0, %v1466
      %v1468 = vrot.slane %v1177, %v1467
      %v1469 = vlaneseq
      %v1470 = vshrl.u32 %v1469, 7
      %v1471 = vsub.s32 0, %v1470
      %v1472 = vrot.slane %v1178, %v1471
      %v1473 = vlaneseq
      %v1474 = vshrl.u32 %v1473, 7
      %v1475 = vsub.s32 0, %v1474
      %v1476 = vrot.slane %v1179, %v1475
      %v1477 = vlaneseq
      %v1478 = vshrl.u32 %v1477, 7
      %v1479 = vsub.s32 0, %v1478
      %v1480 = vrot.slane %v1180, %v1479
      %v1481 = vlaneseq
      %v1482 = vshrl.u32 %v1481, 7
      %v1483 = vsub.s32 0, %v1482
      %v1484 = vrot.slane %v1181, %v1483
      %v1485 = vlaneseq
      %v1486 = vshrl.u32 %v1485, 7
      %v1487 = vsub.s32 0, %v1486
      %v1488 = vrot.slane %v1182, %v1487
      %v1489 = vlaneseq
      %v1490 = vshrl.u32 %v1489, 7
      %v1491 = vsub.s32 0, %v1490
      %v1492 = vrot.slane %v1183, %v1491
      %v1493 = vlaneseq
      %v1494 = vshrl.u32 %v1493, 7
      %v1495 = vsub.s32 0, %v1494
      %v1496 = vrot.slane %v1184, %v1495
      %v1497 = vlaneseq
      %v1498 = vshrl.u32 %v1497, 7
      %v1499 = vsub.s32 0, %v1498
      %v1500 = vrot.slane %v1185, %v1499
      %v1501 = vlaneseq
      %v1502 = vshrl.u32 %v1501, 7
      %v1503 = vsub.s32 0, %v1502
      %v1504 = vrot.slane %v1186, %v1503
      %v1505 = vlaneseq
      %v1506 = vshrl.u32 %v1505, 7
      %v1507 = vsub.s32 0, %v1506
      %v1508 = vrot.slane %v1187, %v1507
      %vm1509 = vcmask 1041409
      %v1510 = vsel %vm1509, %v1260, %v1256
      %vm1511 = vcmask 1042434
      %v1512 = vsel %vm1511, %v1264, %v1510
      %vm1513 = vcmask 1043459
      %v1514 = vsel %vm1513, %v1268, %v1512
      %vm1515 = vcmask 1044484
      %v1516 = vsel %vm1515, %v1272, %v1514
      %vm1517 = vcmask 1045509
      %v1518 = vsel %vm1517, %v1276, %v1516
      %vm1519 = vcmask 1046534
      %v1520 = vsel %vm1519, %v1280, %v1518
      %vm1521 = vcmask 1047559
      %v1522 = vsel %vm1521, %v1284, %v1520
      %v1523 = vsel %vm1509, %v1292, %v1288
      %v1524 = vsel %vm1511, %v1296, %v1523
      %v1525 = vsel %vm1513, %v1300, %v1524
      %v1526 = vsel %vm1515, %v1304, %v1525
      %v1527 = vsel %vm1517, %v1308, %v1526
      %v1528 = vsel %vm1519, %v1312, %v1527
      %v1529 = vsel %vm1521, %v1316, %v1528
      %v1530 = vsel %vm1509, %v1324, %v1320
      %v1531 = vsel %vm1511, %v1328, %v1530
      %v1532 = vsel %vm1513, %v1332, %v1531
      %v1533 = vsel %vm1515, %v1336, %v1532
      %v1534 = vsel %vm1517, %v1340, %v1533
      %v1535 = vsel %vm1519, %v1344, %v1534
      %v1536 = vsel %vm1521, %v1348, %v1535
      %v1537 = vsel %vm1509, %v1356, %v1352
      %v1538 = vsel %vm1511, %v1360, %v1537
      %v1539 = vsel %vm1513, %v1364, %v1538
      %v1540 = vsel %vm1515, %v1368, %v1539
      %v1541 = vsel %vm1517, %v1372, %v1540
      %v1542 = vsel %vm1519, %v1376, %v1541
      %v1543 = vsel %vm1521, %v1380, %v1542
      %v1544 = vsel %vm1509, %v1388, %v1384
      %v1545 = vsel %vm1511, %v1392, %v1544
      %v1546 = vsel %vm1513, %v1396, %v1545
      %v1547 = vsel %vm1515, %v1400, %v1546
      %v1548 = vsel %vm1517, %v1404, %v1547
      %v1549 = vsel %vm1519, %v1408, %v1548
      %v1550 = vsel %vm1521, %v1412, %v1549
      %v1551 = vsel %vm1509, %v1420, %v1416
      %v1552 = vsel %vm1511, %v1424, %v1551
      %v1553 = vsel %vm1513, %v1428, %v1552
      %v1554 = vsel %vm1515, %v1432, %v1553
      %v1555 = vsel %vm1517, %v1436, %v1554
      %v1556 = vsel %vm1519, %v1440, %v1555
      %v1557 = vsel %vm1521, %v1444, %v1556
      %v1558 = vsel %vm1509, %v1452, %v1448
      %v1559 = vsel %vm1511, %v1456, %v1558
      %v1560 = vsel %vm1513, %v1460, %v1559
      %v1561 = vsel %vm1515, %v1464, %v1560
      %v1562 = vsel %vm1517, %v1468, %v1561
      %v1563 = vsel %vm1519, %v1472, %v1562
      %v1564 = vsel %vm1521, %v1476, %v1563
      %v1565 = vsel %vm1509, %v1484, %v1480
      %v1566 = vsel %vm1511, %v1488, %v1565
      %v1567 = vsel %vm1513, %v1492, %v1566
      %v1568 = vsel %vm1515, %v1496, %v1567
      %v1569 = vsel %vm1517, %v1500, %v1568
      %v1570 = vsel %vm1519, %v1504, %v1569
      %v1571 = vsel %vm1521, %v1508, %v1570
      %vm1572 = vcmask 31744
      %v1573 = vsel %vm1572, %v1522, 0
      %v1575 = vsel %vm1572, %v1529, 0
      %v1577 = vsel %vm1572, %v1536, 0
      %v1579 = vsel %vm1572, %v1543, 0
      %v1581 = vsel %vm1572, %v1550, 0
      %v1583 = vsel %vm1572, %v1557, 0
      %v1585 = vsel %vm1572, %v1564, 0
      %v1587 = vsel %vm1572, %v1571, 0
      %vm1589 = vcmask 1043456
      %v1591 = vsel %vm1589, %v1188, 0
      %1593 = vmatprep.subr.mxu0 0.0
      %1594 = vmatpush1.msra.mxu0 %v1591
      %1595 = vmatprep.subr.mxu0 0.0
      %1596 = vmatpush1.msra.mxu0 0.0
      %1597 = vmatprep.subr.mxu0 0.0
      %1598 = vmatpush1.msra.mxu0 0.0
      %1599 = vmatprep.subr.mxu0 0.0
      %1600 = vmatpush1.msra.mxu0 0.0
      %1601 = vmatprep.subr.mxu0 0.0
      %1602 = vmatpush1.msra.mxu0 0.0
      %1603 = vmatprep.subr.mxu0 0.0
      %1604 = vmatpush1.msra.mxu0 0.0
      %1605 = vmatprep.subr.mxu0 0.0
      %1606 = vmatpush1.msra.mxu0 0.0
      %1607 = vmatprep.subr.mxu0 0.0
      %1608 = vmatpush1.msra.mxu0 0.0
      %1609 = vmatprep.subr.mxu0 0.0
      %1610 = vmatpush1.msra.mxu0 0.0
      %1611 = vmatprep.subr.mxu0 0.0
      %1612 = vmatpush1.msra.mxu0 0.0
      %1613 = vmatprep.subr.mxu0 0.0
      %1614 = vmatpush1.msra.mxu0 0.0
      %1615 = vmatprep.subr.mxu0 0.0
      %1616 = vmatpush1.msra.mxu0 0.0
      %1617 = vmatprep.subr.mxu0 0.0
      %1618 = vmatpush1.msra.mxu0 0.0
      %1619 = vmatprep.subr.mxu0 0.0
      %1620 = vmatpush1.msra.mxu0 0.0
      %1621 = vmatprep.subr.mxu0 0.0
      %1622 = vmatpush1.msra.mxu0 0.0
      %1623 = vmatprep.subr.mxu0 0.0
      %1624 = vmatpush1.msra.mxu0 0.0
      %1625 = vmatprep.subr.mxu0 0.0
      %1626 = vmatpush1.msra.mxu0 0.0
      %1627 = vmatprep.subr.mxu0 0.0
      %1628 = vmatpush1.msra.mxu0 0.0
      %1629 = vmatprep.subr.mxu0 0.0
      %1630 = vmatpush1.msra.mxu0 0.0
      %1631 = vmatprep.subr.mxu0 0.0
      %1632 = vmatpush1.msra.mxu0 0.0
      %1633 = vmatprep.subr.mxu0 0.0
      %1634 = vmatpush1.msra.mxu0 0.0
      %1635 = vmatprep.subr.mxu0 0.0
      %1636 = vmatpush1.msra.mxu0 0.0
      %1637 = vmatprep.subr.mxu0 0.0
      %1638 = vmatpush1.msra.mxu0 0.0
      %1639 = vmatprep.subr.mxu0 0.0
      %1640 = vmatpush1.msra.mxu0 0.0
      %1641 = vmatprep.subr.mxu0 0.0
      %1642 = vmatpush1.msra.mxu0 0.0
      %1643 = vmatprep.subr.mxu0 0.0
      %1644 = vmatpush1.msra.mxu0 0.0
      %1645 = vmatprep.subr.mxu0 0.0
      %1646 = vmatpush1.msra.mxu0 0.0
      %1647 = vmatprep.subr.mxu0 0.0
      %1648 = vmatpush1.msra.mxu0 0.0
      %1649 = vmatprep.subr.mxu0 0.0
      %1650 = vmatpush1.msra.mxu0 0.0
      %1651 = vmatprep.subr.mxu0 0.0
      %1652 = vmatpush1.msra.mxu0 0.0
      %1653 = vmatprep.subr.mxu0 0.0
      %1654 = vmatpush1.msra.mxu0 0.0
      %1655 = vmatprep.subr.mxu0 0.0
      %1656 = vmatpush1.msra.mxu0 0.0
      %1657 = vmatprep.mubr.f32.mxu0 0.0
      %1658 = vmatmul.mubr.f32.gmra.mrb[0].mxu0 %v1573
      %v1659 = vpop.f32.mrb[0].mxu0
      %v1660 = vadd.f32 0.0, %v1659
      %v1661 = vpop.f32.mrb[0].mxu0
      %1662 = vmatprep.mubr.f32.mxu0 0.0
      %1663 = vmatmul.mubr.f32.gmra.mrb[0].mxu0 %v1575
      %v1664 = vpop.f32.mrb[0].mxu0
      %v1665 = vadd.f32 0.0, %v1664
      %v1666 = vpop.f32.mrb[0].mxu0
      %1667 = vmatprep.mubr.f32.mxu0 0.0
      %1668 = vmatmul.mubr.f32.gmra.mrb[0].mxu0 %v1577
      %v1669 = vpop.f32.mrb[0].mxu0
      %v1670 = vadd.f32 0.0, %v1669
      %v1671 = vpop.f32.mrb[0].mxu0
      %1672 = vmatprep.mubr.f32.mxu0 0.0
      %1673 = vmatmul.mubr.f32.gmra.mrb[0].mxu0 %v1579
      %v1674 = vpop.f32.mrb[0].mxu0
      %v1675 = vadd.f32 0.0, %v1674
      %v1676 = vpop.f32.mrb[0].mxu0
      %1677 = vmatprep.mubr.f32.mxu0 0.0
      %1678 = vmatmul.mubr.f32.gmra.mrb[0].mxu0 %v1581
      %v1679 = vpop.f32.mrb[0].mxu0
      %v1680 = vadd.f32 0.0, %v1679
      %v1681 = vpop.f32.mrb[0].mxu0
      %1682 = vmatprep.mubr.f32.mxu0 0.0
      %1683 = vmatmul.mubr.f32.gmra.mrb[0].mxu0 %v1583
      %v1684 = vpop.f32.mrb[0].mxu0
      %v1685 = vadd.f32 0.0, %v1684
      %v1686 = vpop.f32.mrb[0].mxu0
      %1687 = vmatprep.mubr.f32.mxu0 0.0
      %1688 = vmatmul.mubr.f32.gmra.mrb[0].mxu0 %v1585
      %v1689 = vpop.f32.mrb[0].mxu0
      %v1690 = vadd.f32 0.0, %v1689
      %v1691 = vpop.f32.mrb[0].mxu0
      %1692 = vmatprep.mubr.f32.mxu0 0.0
      %1693 = vmatmul.mubr.f32.gmra.mrb[0].mxu0 %v1587
      %v1694 = vpop.f32.mrb[0].mxu0
      %v1695 = vadd.f32 0.0, %v1694
      %v1696 = vpop.f32.mrb[0].mxu0
      %1697 = vdwg.mxu0
      %v1698 = vld [vmem:[%s2] sm:$0x1]
      %v1700 = vlaneseq
      %v1701 = vshrl.u32 %v1700, 7
      %v1702 = vsub.s32 0, %v1701
      %v1703 = vrot.slane %v1698, %v1702
      %v1705 = vmul.f32 %v1660, %v1703
      %v1706 = vmul.f32 %v1665, %v1703
      %v1707 = vmul.f32 %v1670, %v1703
      %v1708 = vmul.f32 %v1675, %v1703
      %v1709 = vmul.f32 %v1680, %v1703
      %v1710 = vmul.f32 %v1685, %v1703
      %v1711 = vmul.f32 %v1690, %v1703
      %v1712 = vmul.f32 %v1695, %v1703
      %v1713 = vld [vmem:[%s3] sm:$0x1]
      %v1715 = vlaneseq
      %v1716 = vshrl.u32 %v1715, 7
      %v1717 = vsub.s32 0, %v1716
      %v1718 = vrot.slane %v1713, %v1717
      %v1720 = vadd.f32 %v1705, %v1718
      %v1721 = vadd.f32 %v1706, %v1718
      %v1722 = vadd.f32 %v1707, %v1718
      %v1723 = vadd.f32 %v1708, %v1718
      %v1724 = vadd.f32 %v1709, %v1718
      %v1725 = vadd.f32 %v1710, %v1718
      %v1726 = vadd.f32 %v1711, %v1718
      %v1727 = vadd.f32 %v1712, %v1718
      %v1728 = vsub.f32 0.0, %v1720
      %v1729 = vsub.f32 0.0, %v1721
      %v1730 = vsub.f32 0.0, %v1722
      %v1731 = vsub.f32 0.0, %v1723
      %v1732 = vsub.f32 0.0, %v1724
      %v1733 = vsub.f32 0.0, %v1725
      %v1734 = vsub.f32 0.0, %v1726
      %v1735 = vsub.f32 0.0, %v1727
      %v1736 = vmul.f32 %v1728, 1.442695
      %v1737 = vpow.pop %v1736
      %v1738 = vmul.f32 %v1729, 1.442695
      %v1739 = vpow.pop %v1738
      %v1740 = vmul.f32 %v1730, 1.442695
      %v1741 = vpow.pop %v1740
      %v1742 = vmul.f32 %v1731, 1.442695
      %v1743 = vpow.pop %v1742
      %v1744 = vmul.f32 %v1732, 1.442695
      %v1745 = vpow.pop %v1744
      %v1746 = vmul.f32 %v1733, 1.442695
      %v1747 = vpow.pop %v1746
      %v1748 = vmul.f32 %v1734, 1.442695
      %v1749 = vpow.pop %v1748
      %v1750 = vmul.f32 %v1735, 1.442695
      %v1751 = vpow.pop %v1750
      %v1752 = vadd.f32 %v1737, 1.0
      %v1753 = vadd.f32 %v1739, 1.0
      %v1754 = vadd.f32 %v1741, 1.0
      %v1755 = vadd.f32 %v1743, 1.0
      %v1756 = vadd.f32 %v1745, 1.0
      %v1757 = vadd.f32 %v1747, 1.0
      %v1758 = vadd.f32 %v1749, 1.0
      %v1759 = vadd.f32 %v1751, 1.0
      %v1760 = vrcp.pop %v1752
      %v1761 = vmul.f32 1.0, %v1760
      %v1762 = vrcp.pop %v1753
      %v1763 = vmul.f32 1.0, %v1762
      %v1764 = vrcp.pop %v1754
      %v1765 = vmul.f32 1.0, %v1764
      %v1766 = vrcp.pop %v1755
      %v1767 = vmul.f32 1.0, %v1766
      %v1768 = vrcp.pop %v1756
      %v1769 = vmul.f32 1.0, %v1768
      %v1770 = vrcp.pop %v1757
      %v1771 = vmul.f32 1.0, %v1770
      %v1772 = vrcp.pop %v1758
      %v1773 = vmul.f32 1.0, %v1772
      %v1774 = vrcp.pop %v1759
      %v1775 = vmul.f32 1.0, %v1774
      %v1776 = vmul.f32 %v1720, %v1761
      %v1777 = vmul.f32 %v1721, %v1763
      %v1778 = vmul.f32 %v1722, %v1765
      %v1779 = vmul.f32 %v1723, %v1767
      %v1780 = vmul.f32 %v1724, %v1769
      %v1781 = vmul.f32 %v1725, %v1771
      %v1782 = vmul.f32 %v1726, %v1773
      %v1783 = vmul.f32 %v1727, %v1775
      %v1784 = vld [vmem:[%s4] sm:$0xf]
      %v1786 = vsel %vm1572, %v1776, 0
      %v1789 = vsel %vm1572, %v1777, 0
      %v1792 = vsel %vm1572, %v1778, 0
      %v1795 = vsel %vm1572, %v1779, 0
      %v1798 = vsel %vm1572, %v1780, 0
      %v1801 = vsel %vm1572, %v1781, 0
      %v1804 = vsel %vm1572, %v1782, 0
      %v1807 = vsel %vm1572, %v1783, 0
      %v1810 = vsel %vm1589, %v1784, 0
      %1812 = vmatprep.subr.mxu0 0.0
      %1813 = vmatpush1.msra.mxu0 %v1810
      %1814 = vmatprep.subr.mxu0 0.0
      %1815 = vmatpush1.msra.mxu0 0.0
      %1816 = vmatprep.subr.mxu0 0.0
      %1817 = vmatpush1.msra.mxu0 0.0
      %1818 = vmatprep.subr.mxu0 0.0
      %1819 = vmatpush1.msra.mxu0 0.0
      %1820 = vmatprep.subr.mxu0 0.0
      %1821 = vmatpush1.msra.mxu0 0.0
      %1822 = vmatprep.subr.mxu0 0.0
      %1823 = vmatpush1.msra.mxu0 0.0
      %1824 = vmatprep.subr.mxu0 0.0
      %1825 = vmatpush1.msra.mxu0 0.0
      %1826 = vmatprep.subr.mxu0 0.0
      %1827 = vmatpush1.msra.mxu0 0.0
      %1828 = vmatprep.subr.mxu0 0.0
      %1829 = vmatpush1.msra.mxu0 0.0
      %1830 = vmatprep.subr.mxu0 0.0
      %1831 = vmatpush1.msra.mxu0 0.0
      %1832 = vmatprep.subr.mxu0 0.0
      %1833 = vmatpush1.msra.mxu0 0.0
      %1834 = vmatprep.subr.mxu0 0.0
      %1835 = vmatpush1.msra.mxu0 0.0
      %1836 = vmatprep.subr.mxu0 0.0
      %1837 = vmatpush1.msra.mxu0 0.0
      %1838 = vmatprep.subr.mxu0 0.0
      %1839 = vmatpush1.msra.mxu0 0.0
      %1840 = vmatprep.subr.mxu0 0.0
      %1841 = vmatpush1.msra.mxu0 0.0
      %1842 = vmatprep.subr.mxu0 0.0
      %1843 = vmatpush1.msra.mxu0 0.0
      %1844 = vmatprep.subr.mxu0 0.0
      %1845 = vmatpush1.msra.mxu0 0.0
      %1846 = vmatprep.subr.mxu0 0.0
      %1847 = vmatpush1.msra.mxu0 0.0
      %1848 = vmatprep.subr.mxu0 0.0
      %1849 = vmatpush1.msra.mxu0 0.0
      %1850 = vmatprep.subr.mxu0 0.0
      %1851 = vmatpush1.msra.mxu0 0.0
      %1852 = vmatprep.subr.mxu0 0.0
      %1853 = vmatpush1.msra.mxu0 0.0
      %1854 = vmatprep.subr.mxu0 0.0
      %1855 = vmatpush1.msra.mxu0 0.0
      %1856 = vmatprep.subr.mxu0 0.0
      %1857 = vmatpush1.msra.mxu0 0.0
      %1858 = vmatprep.subr.mxu0 0.0
      %1859 = vmatpush1.msra.mxu0 0.0
      %1860 = vmatprep.subr.mxu0 0.0
      %1861 = vmatpush1.msra.mxu0 0.0
      %1862 = vmatprep.subr.mxu0 0.0
      %1863 = vmatpush1.msra.mxu0 0.0
      %1864 = vmatprep.subr.mxu0 0.0
      %1865 = vmatpush1.msra.mxu0 0.0
      %1866 = vmatprep.subr.mxu0 0.0
      %1867 = vmatpush1.msra.mxu0 0.0
      %1868 = vmatprep.subr.mxu0 0.0
      %1869 = vmatpush1.msra.mxu0 0.0
      %1870 = vmatprep.subr.mxu0 0.0
      %1871 = vmatpush1.msra.mxu0 0.0
      %1872 = vmatprep.subr.mxu0 0.0
      %1873 = vmatpush1.msra.mxu0 0.0
      %1874 = vmatprep.subr.mxu0 0.0
      %1875 = vmatpush1.msra.mxu0 0.0
      %1876 = vmatprep.mubr.f32.mxu0 0.0
      %1877 = vmatmul.mubr.f32.gmra.mrb[0].mxu0 %v1786
      %v1878 = vpop.f32.mrb[0].mxu0
      %v1879 = vadd.f32 0.0, %v1878
      %v1880 = vpop.f32.mrb[0].mxu0
      %1881 = vmatprep.mubr.f32.mxu0 0.0
      %1882 = vmatmul.mubr.f32.gmra.mrb[0].mxu0 %v1789
      %v1883 = vpop.f32.mrb[0].mxu0
      %v1884 = vadd.f32 0.0, %v1883
      %v1885 = vpop.f32.mrb[0].mxu0
      %1886 = vmatprep.mubr.f32.mxu0 0.0
      %1887 = vmatmul.mubr.f32.gmra.mrb[0].mxu0 %v1792
      %v1888 = vpop.f32.mrb[0].mxu0
      %v1889 = vadd.f32 0.0, %v1888
      %v1890 = vpop.f32.mrb[0].mxu0
      %1891 = vmatprep.mubr.f32.mxu0 0.0
      %1892 = vmatmul.mubr.f32.gmra.mrb[0].mxu0 %v1795
      %v1893 = vpop.f32.mrb[0].mxu0
      %v1894 = vadd.f32 0.0, %v1893
      %v1895 = vpop.f32.mrb[0].mxu0
      %1896 = vmatprep.mubr.f32.mxu0 0.0
      %1897 = vmatmul.mubr.f32.gmra.mrb[0].mxu0 %v1798
      %v1898 = vpop.f32.mrb[0].mxu0
      %v1899 = vadd.f32 0.0, %v1898
      %v1900 = vpop.f32.mrb[0].mxu0
      %1901 = vmatprep.mubr.f32.mxu0 0.0
      %1902 = vmatmul.mubr.f32.gmra.mrb[0].mxu0 %v1801
      %v1903 = vpop.f32.mrb[0].mxu0
      %v1904 = vadd.f32 0.0, %v1903
      %v1905 = vpop.f32.mrb[0].mxu0
      %1906 = vmatprep.mubr.f32.mxu0 0.0
      %1907 = vmatmul.mubr.f32.gmra.mrb[0].mxu0 %v1804
      %v1908 = vpop.f32.mrb[0].mxu0
      %v1909 = vadd.f32 0.0, %v1908
      %v1910 = vpop.f32.mrb[0].mxu0
      %1911 = vmatprep.mubr.f32.mxu0 0.0
      %1912 = vmatmul.mubr.f32.gmra.mrb[0].mxu0 %v1807
      %v1913 = vpop.f32.mrb[0].mxu0
      %v1914 = vadd.f32 0.0, %v1913
      %v1915 = vpop.f32.mrb[0].mxu0
      %1916 = vdwg.mxu0
      %v1917 = vld [vmem:[%s5] sm:$0x1]
      %v1919 = vlaneseq
      %v1920 = vshrl.u32 %v1919, 7
      %v1921 = vsub.s32 0, %v1920
      %v1922 = vrot.slane %v1917, %v1921
      %v1924 = vmul.f32 %v1879, %v1922
      %v1925 = vmul.f32 %v1884, %v1922
      %v1926 = vmul.f32 %v1889, %v1922
      %v1927 = vmul.f32 %v1894, %v1922
      %v1928 = vmul.f32 %v1899, %v1922
      %v1929 = vmul.f32 %v1904, %v1922
      %v1930 = vmul.f32 %v1909, %v1922
      %v1931 = vmul.f32 %v1914, %v1922
      %v1932 = vld [vmem:[%s6] sm:$0x1]
      %v1934 = vlaneseq
      %v1935 = vshrl.u32 %v1934, 7
      %v1936 = vsub.s32 0, %v1935
      %v1937 = vrot.slane %v1932, %v1936
      %v1939 = vadd.f32 %v1924, %v1937
      %v1940 = vadd.f32 %v1925, %v1937
      %v1941 = vadd.f32 %v1926, %v1937
      %v1942 = vadd.f32 %v1927, %v1937
      %v1943 = vadd.f32 %v1928, %v1937
      %v1944 = vadd.f32 %v1929, %v1937
      %v1945 = vadd.f32 %v1930, %v1937
      %v1946 = vadd.f32 %v1931, %v1937
      %v1947 = vsub.f32 0.0, %v1939
      %v1948 = vsub.f32 0.0, %v1940
      %v1949 = vsub.f32 0.0, %v1941
      %v1950 = vsub.f32 0.0, %v1942
      %v1951 = vsub.f32 0.0, %v1943
      %v1952 = vsub.f32 0.0, %v1944
      %v1953 = vsub.f32 0.0, %v1945
      %v1954 = vsub.f32 0.0, %v1946
      %v1955 = vmul.f32 %v1947, 1.442695
      %v1956 = vpow.pop %v1955
      %v1957 = vmul.f32 %v1948, 1.442695
      %v1958 = vpow.pop %v1957
      %v1959 = vmul.f32 %v1949, 1.442695
      %v1960 = vpow.pop %v1959
      %v1961 = vmul.f32 %v1950, 1.442695
      %v1962 = vpow.pop %v1961
      %v1963 = vmul.f32 %v1951, 1.442695
      %v1964 = vpow.pop %v1963
      %v1965 = vmul.f32 %v1952, 1.442695
      %v1966 = vpow.pop %v1965
      %v1967 = vmul.f32 %v1953, 1.442695
      %v1968 = vpow.pop %v1967
      %v1969 = vmul.f32 %v1954, 1.442695
      %v1970 = vpow.pop %v1969
      %v1971 = vadd.f32 %v1956, 1.0
      %v1972 = vadd.f32 %v1958, 1.0
      %v1973 = vadd.f32 %v1960, 1.0
      %v1974 = vadd.f32 %v1962, 1.0
      %v1975 = vadd.f32 %v1964, 1.0
      %v1976 = vadd.f32 %v1966, 1.0
      %v1977 = vadd.f32 %v1968, 1.0
      %v1978 = vadd.f32 %v1970, 1.0
      %v1979 = vrcp.pop %v1971
      %v1980 = vmul.f32 1.0, %v1979
      %v1981 = vrcp.pop %v1972
      %v1982 = vmul.f32 1.0, %v1981
      %v1983 = vrcp.pop %v1973
      %v1984 = vmul.f32 1.0, %v1983
      %v1985 = vrcp.pop %v1974
      %v1986 = vmul.f32 1.0, %v1985
      %v1987 = vrcp.pop %v1975
      %v1988 = vmul.f32 1.0, %v1987
      %v1989 = vrcp.pop %v1976
      %v1990 = vmul.f32 1.0, %v1989
      %v1991 = vrcp.pop %v1977
      %v1992 = vmul.f32 1.0, %v1991
      %v1993 = vrcp.pop %v1978
      %v1994 = vmul.f32 1.0, %v1993
      %v1995 = vmul.f32 %v1939, %v1980
      %v1996 = vmul.f32 %v1940, %v1982
      %v1997 = vmul.f32 %v1941, %v1984
      %v1998 = vmul.f32 %v1942, %v1986
      %v1999 = vmul.f32 %v1943, %v1988
      %v2000 = vmul.f32 %v1944, %v1990
      %v2001 = vmul.f32 %v1945, %v1992
      %v2002 = vmul.f32 %v1946, %v1994
      %2003 = vst.msk [vmem:[#allocation2] sm:$0xff] %vm1572, 0.0
      %vm2004 = vcmask 25600
      %2005 = vst.msk [vmem:[#allocation2 + $0x8] sm:$0x3] %vm2004, 0.0
      %2006 = vst.msk [vmem:[#allocation2 + $0x10] sm:$0xff] %vm1572, 0.0
      %2007 = vst.msk [vmem:[#allocation2 + $0x18] sm:$0x3] %vm2004, 0.0
      %2008 = vst.msk [vmem:[#allocation2 + $0x20] sm:$0xff] %vm1572, 0.0
      %2009 = vst.msk [vmem:[#allocation2 + $0x28] sm:$0x3] %vm2004, 0.0
      %2010 = vst.msk [vmem:[#allocation2 + $0x30] sm:$0xff] %vm1572, 0.0
      %2011 = vst.msk [vmem:[#allocation2 + $0x38] sm:$0x3] %vm2004, 0.0
      %2012 = vst.msk [vmem:[#allocation2 + $0x40] sm:$0xff] %vm1572, 0.0
      %2013 = vst.msk [vmem:[#allocation2 + $0x48] sm:$0x3] %vm2004, 0.0
      %2014 = vst.msk [vmem:[#allocation2 + $0x50] sm:$0xff] %vm1572, 0.0
      %2015 = vst.msk [vmem:[#allocation2 + $0x58] sm:$0x3] %vm2004, 0.0
      %2016 = vst.msk [vmem:[#allocation2 + $0x60] sm:$0xff] %vm1572, 0.0
      %2017 = vst.msk [vmem:[#allocation2 + $0x68] sm:$0x3] %vm2004, 0.0
      %2018 = vst.msk [vmem:[#allocation2 + $0x70] sm:$0xff] %vm1572, 0.0
      %2019 = vst.msk [vmem:[#allocation2 + $0x78] sm:$0x3] %vm2004, 0.0
      %2020 = vst.msk [vmem:[#allocation2 + $0x80] sm:$0xff] %vm1572, 0.0
      %2021 = vst.msk [vmem:[#allocation2 + $0x88] sm:$0x3] %vm2004, 0.0
      %2022 = vst.msk [vmem:[#allocation2 + $0x90] sm:$0xff] %vm1572, 0.0
      %2023 = vst.msk [vmem:[#allocation2 + $0x98] sm:$0x3] %vm2004, 0.0
      %s2024 = scalar_lea.vmem [#allocation2], 16
      %2025 = vst.msk [vmem:[%s2024 + $0x1] sm:$0xff] %vm1572, %v1995
      %2026 = vst.msk [vmem:[%s2024 + $0x11] sm:$0xff] %vm1572, %v1996
      %2027 = vst.msk [vmem:[%s2024 + $0x21] sm:$0xff] %vm1572, %v1997
      %2028 = vst.msk [vmem:[%s2024 + $0x31] sm:$0xff] %vm1572, %v1998
      %2029 = vst.msk [vmem:[%s2024 + $0x41] sm:$0xff] %vm1572, %v1999
      %2030 = vst.msk [vmem:[%s2024 + $0x51] sm:$0xff] %vm1572, %v2000
      %2031 = vst.msk [vmem:[%s2024 + $0x61] sm:$0xff] %vm1572, %v2001
      %2032 = vst.msk [vmem:[%s2024 + $0x71] sm:$0xff] %vm1572, %v2002
      %v2033 = vld [vmem:[#allocation2] sm:$0xff]
      %v2034 = vld [vmem:[#allocation2 + $0x10] sm:$0xff]
      %v2035 = vld [vmem:[#allocation2 + $0x20] sm:$0xff]
      %v2036 = vld [vmem:[#allocation2 + $0x30] sm:$0xff]
      %v2037 = vld [vmem:[#allocation2 + $0x40] sm:$0xff]
      %v2038 = vld [vmem:[#allocation2 + $0x50] sm:$0xff]
      %v2039 = vld [vmem:[#allocation2 + $0x60] sm:$0xff]
      %v2040 = vld [vmem:[#allocation2 + $0x70] sm:$0xff]
      %v2041 = vld [vmem:[%s7] sm:$0xf]
      %v2042 = vld [vmem:[#allocation2 + $0x1] sm:$0xff]
      %v2043 = vld [vmem:[#allocation2 + $0x11] sm:$0xff]
      %v2044 = vld [vmem:[#allocation2 + $0x21] sm:$0xff]
      %v2045 = vld [vmem:[#allocation2 + $0x31] sm:$0xff]
      %v2046 = vld [vmem:[#allocation2 + $0x41] sm:$0xff]
      %v2047 = vld [vmem:[#allocation2 + $0x51] sm:$0xff]
      %v2048 = vld [vmem:[#allocation2 + $0x61] sm:$0xff]
      %v2049 = vld [vmem:[#allocation2 + $0x71] sm:$0xff]
      %s2050 = scalar_lea.vmem %s7, 4
      %v2051 = vld [vmem:[%s2050] sm:$0xf]
      %v2053 = vsel %vm1572, %v2042, 0
      %v2056 = vsel %vm1572, %v2043, 0
      %v2059 = vsel %vm1572, %v2044, 0
      %v2062 = vsel %vm1572, %v2045, 0
      %v2065 = vsel %vm1572, %v2046, 0
      %v2068 = vsel %vm1572, %v2047, 0
      %v2071 = vsel %vm1572, %v2048, 0
      %v2074 = vsel %vm1572, %v2049, 0
      %v2077 = vsel %vm1589, %v2051, 0
      %2079 = vmatprep.subr.mxu0 0.0
      %2080 = vmatpush1.msra.mxu0 %v2077
      %2081 = vmatprep.subr.mxu0 0.0
      %2082 = vmatpush1.msra.mxu0 0.0
      %2083 = vmatprep.subr.mxu0 0.0
      %2084 = vmatpush1.msra.mxu0 0.0
      %2085 = vmatprep.subr.mxu0 0.0
      %2086 = vmatpush1.msra.mxu0 0.0
      %2087 = vmatprep.subr.mxu0 0.0
      %2088 = vmatpush1.msra.mxu0 0.0
      %2089 = vmatprep.subr.mxu0 0.0
      %2090 = vmatpush1.msra.mxu0 0.0
      %2091 = vmatprep.subr.mxu0 0.0
      %2092 = vmatpush1.msra.mxu0 0.0
      %2093 = vmatprep.subr.mxu0 0.0
      %2094 = vmatpush1.msra.mxu0 0.0
      %2095 = vmatprep.subr.mxu0 0.0
      %2096 = vmatpush1.msra.mxu0 0.0
      %2097 = vmatprep.subr.mxu0 0.0
      %2098 = vmatpush1.msra.mxu0 0.0
      %2099 = vmatprep.subr.mxu0 0.0
      %2100 = vmatpush1.msra.mxu0 0.0
      %2101 = vmatprep.subr.mxu0 0.0
      %2102 = vmatpush1.msra.mxu0 0.0
      %2103 = vmatprep.subr.mxu0 0.0
      %2104 = vmatpush1.msra.mxu0 0.0
      %2105 = vmatprep.subr.mxu0 0.0
      %2106 = vmatpush1.msra.mxu0 0.0
      %2107 = vmatprep.subr.mxu0 0.0
      %2108 = vmatpush1.msra.mxu0 0.0
      %2109 = vmatprep.subr.mxu0 0.0
      %2110 = vmatpush1.msra.mxu0 0.0
      %2111 = vmatprep.subr.mxu0 0.0
      %2112 = vmatpush1.msra.mxu0 0.0
      %2113 = vmatprep.subr.mxu0 0.0
      %2114 = vmatpush1.msra.mxu0 0.0
      %2115 = vmatprep.subr.mxu0 0.0
      %2116 = vmatpush1.msra.mxu0 0.0
      %2117 = vmatprep.subr.mxu0 0.0
      %2118 = vmatpush1.msra.mxu0 0.0
      %2119 = vmatprep.subr.mxu0 0.0
      %2120 = vmatpush1.msra.mxu0 0.0
      %2121 = vmatprep.subr.mxu0 0.0
      %2122 = vmatpush1.msra.mxu0 0.0
      %2123 = vmatprep.subr.mxu0 0.0
      %2124 = vmatpush1.msra.mxu0 0.0
      %2125 = vmatprep.subr.mxu0 0.0
      %2126 = vmatpush1.msra.mxu0 0.0
      %2127 = vmatprep.subr.mxu0 0.0
      %2128 = vmatpush1.msra.mxu0 0.0
      %2129 = vmatprep.subr.mxu0 0.0
      %2130 = vmatpush1.msra.mxu0 0.0
      %2131 = vmatprep.subr.mxu0 0.0
      %2132 = vmatpush1.msra.mxu0 0.0
      %2133 = vmatprep.subr.mxu0 0.0
      %2134 = vmatpush1.msra.mxu0 0.0
      %2135 = vmatprep.subr.mxu0 0.0
      %2136 = vmatpush1.msra.mxu0 0.0
      %2137 = vmatprep.subr.mxu0 0.0
      %2138 = vmatpush1.msra.mxu0 0.0
      %2139 = vmatprep.subr.mxu0 0.0
      %2140 = vmatpush1.msra.mxu0 0.0
      %2141 = vmatprep.subr.mxu0 0.0
      %2142 = vmatpush1.msra.mxu0 0.0
      %2143 = vmatprep.mubr.f32.mxu0 0.0
      %2144 = vmatmul.mubr.f32.gmra.mrb[0].mxu0 %v2053
      %v2145 = vpop.f32.mrb[0].mxu0
      %v2146 = vadd.f32 0.0, %v2145
      %v2147 = vpop.f32.mrb[0].mxu0
      %2148 = vmatprep.mubr.f32.mxu0 0.0
      %2149 = vmatmul.mubr.f32.gmra.mrb[0].mxu0 %v2056
      %v2150 = vpop.f32.mrb[0].mxu0
      %v2151 = vadd.f32 0.0, %v2150
      %v2152 = vpop.f32.mrb[0].mxu0
      %2153 = vmatprep.mubr.f32.mxu0 0.0
      %2154 = vmatmul.mubr.f32.gmra.mrb[0].mxu0 %v2059
      %v2155 = vpop.f32.mrb[0].mxu0
      %v2156 = vadd.f32 0.0, %v2155
      %v2157 = vpop.f32.mrb[0].mxu0
      %2158 = vmatprep.mubr.f32.mxu0 0.0
      %2159 = vmatmul.mubr.f32.gmra.mrb[0].mxu0 %v2062
      %v2160 = vpop.f32.mrb[0].mxu0
      %v2161 = vadd.f32 0.0, %v2160
      %v2162 = vpop.f32.mrb[0].mxu0
      %2163 = vmatprep.mubr.f32.mxu0 0.0
      %2164 = vmatmul.mubr.f32.gmra.mrb[0].mxu0 %v2065
      %v2165 = vpop.f32.mrb[0].mxu0
      %v2166 = vadd.f32 0.0, %v2165
      %v2167 = vpop.f32.mrb[0].mxu0
      %2168 = vmatprep.mubr.f32.mxu0 0.0
      %2169 = vmatmul.mubr.f32.gmra.mrb[0].mxu0 %v2068
      %v2170 = vpop.f32.mrb[0].mxu0
      %v2171 = vadd.f32 0.0, %v2170
      %v2172 = vpop.f32.mrb[0].mxu0
      %2173 = vmatprep.mubr.f32.mxu0 0.0
      %2174 = vmatmul.mubr.f32.gmra.mrb[0].mxu0 %v2071
      %v2175 = vpop.f32.mrb[0].mxu0
      %v2176 = vadd.f32 0.0, %v2175
      %v2177 = vpop.f32.mrb[0].mxu0
      %2178 = vmatprep.mubr.f32.mxu0 0.0
      %2179 = vmatmul.mubr.f32.gmra.mrb[0].mxu0 %v2074
      %v2180 = vpop.f32.mrb[0].mxu0
      %v2181 = vadd.f32 0.0, %v2180
      %v2182 = vpop.f32.mrb[0].mxu0
      %2183 = vdwg.mxu0
      %v2185 = vsel %vm1572, %v2033, 0
      %v2188 = vsel %vm1572, %v2034, 0
      %v2191 = vsel %vm1572, %v2035, 0
      %v2194 = vsel %vm1572, %v2036, 0
      %v2197 = vsel %vm1572, %v2037, 0
      %v2200 = vsel %vm1572, %v2038, 0
      %v2203 = vsel %vm1572, %v2039, 0
      %v2206 = vsel %vm1572, %v2040, 0
      %v2209 = vsel %vm1589, %v2041, 0
      %2211 = vmatprep.subr.mxu0 0.0
      %2212 = vmatpush1.msra.mxu0 %v2209
      %2213 = vmatprep.subr.mxu0 0.0
      %2214 = vmatpush1.msra.mxu0 0.0
      %2215 = vmatprep.subr.mxu0 0.0
      %2216 = vmatpush1.msra.mxu0 0.0
      %2217 = vmatprep.subr.mxu0 0.0
      %2218 = vmatpush1.msra.mxu0 0.0
      %2219 = vmatprep.subr.mxu0 0.0
      %2220 = vmatpush1.msra.mxu0 0.0
      %2221 = vmatprep.subr.mxu0 0.0
      %2222 = vmatpush1.msra.mxu0 0.0
      %2223 = vmatprep.subr.mxu0 0.0
      %2224 = vmatpush1.msra.mxu0 0.0
      %2225 = vmatprep.subr.mxu0 0.0
      %2226 = vmatpush1.msra.mxu0 0.0
      %2227 = vmatprep.subr.mxu0 0.0
      %2228 = vmatpush1.msra.mxu0 0.0
      %2229 = vmatprep.subr.mxu0 0.0
      %2230 = vmatpush1.msra.mxu0 0.0
      %2231 = vmatprep.subr.mxu0 0.0
      %2232 = vmatpush1.msra.mxu0 0.0
      %2233 = vmatprep.subr.mxu0 0.0
      %2234 = vmatpush1.msra.mxu0 0.0
      %2235 = vmatprep.subr.mxu0 0.0
      %2236 = vmatpush1.msra.mxu0 0.0
      %2237 = vmatprep.subr.mxu0 0.0
      %2238 = vmatpush1.msra.mxu0 0.0
      %2239 = vmatprep.subr.mxu0 0.0
      %2240 = vmatpush1.msra.mxu0 0.0
      %2241 = vmatprep.subr.mxu0 0.0
      %2242 = vmatpush1.msra.mxu0 0.0
      %2243 = vmatprep.subr.mxu0 0.0
      %2244 = vmatpush1.msra.mxu0 0.0
      %2245 = vmatprep.subr.mxu0 0.0
      %2246 = vmatpush1.msra.mxu0 0.0
      %2247 = vmatprep.subr.mxu0 0.0
      %2248 = vmatpush1.msra.mxu0 0.0
      %2249 = vmatprep.subr.mxu0 0.0
      %2250 = vmatpush1.msra.mxu0 0.0
      %2251 = vmatprep.subr.mxu0 0.0
      %2252 = vmatpush1.msra.mxu0 0.0
      %2253 = vmatprep.subr.mxu0 0.0
      %2254 = vmatpush1.msra.mxu0 0.0
      %2255 = vmatprep.subr.mxu0 0.0
      %2256 = vmatpush1.msra.mxu0 0.0
      %2257 = vmatprep.subr.mxu0 0.0
      %2258 = vmatpush1.msra.mxu0 0.0
      %2259 = vmatprep.subr.mxu0 0.0
      %2260 = vmatpush1.msra.mxu0 0.0
      %2261 = vmatprep.subr.mxu0 0.0
      %2262 = vmatpush1.msra.mxu0 0.0
      %2263 = vmatprep.subr.mxu0 0.0
      %2264 = vmatpush1.msra.mxu0 0.0
      %2265 = vmatprep.subr.mxu0 0.0
      %2266 = vmatpush1.msra.mxu0 0.0
      %2267 = vmatprep.subr.mxu0 0.0
      %2268 = vmatpush1.msra.mxu0 0.0
      %2269 = vmatprep.subr.mxu0 0.0
      %2270 = vmatpush1.msra.mxu0 0.0
      %2271 = vmatprep.subr.mxu0 0.0
      %2272 = vmatpush1.msra.mxu0 0.0
      %2273 = vmatprep.subr.mxu0 0.0
      %2274 = vmatpush1.msra.mxu0 0.0
      %2275 = vmatprep.mubr.f32.mxu0 0.0
      %2276 = vmatmul.mubr.f32.gmra.mrb[0].mxu0 %v2185
      %v2277 = vpop.f32.mrb[0].mxu0
      %v2278 = vadd.f32 %v2146, %v2277
      %v2279 = vpop.f32.mrb[0].mxu0
      %2280 = vmatprep.mubr.f32.mxu0 0.0
      %2281 = vmatmul.mubr.f32.gmra.mrb[0].mxu0 %v2188
      %v2282 = vpop.f32.mrb[0].mxu0
      %v2283 = vadd.f32 %v2151, %v2282
      %v2284 = vpop.f32.mrb[0].mxu0
      %2285 = vmatprep.mubr.f32.mxu0 0.0
      %2286 = vmatmul.mubr.f32.gmra.mrb[0].mxu0 %v2191
      %v2287 = vpop.f32.mrb[0].mxu0
      %v2288 = vadd.f32 %v2156, %v2287
      %v2289 = vpop.f32.mrb[0].mxu0
      %2290 = vmatprep.mubr.f32.mxu0 0.0
      %2291 = vmatmul.mubr.f32.gmra.mrb[0].mxu0 %v2194
      %v2292 = vpop.f32.mrb[0].mxu0
      %v2293 = vadd.f32 %v2161, %v2292
      %v2294 = vpop.f32.mrb[0].mxu0
      %2295 = vmatprep.mubr.f32.mxu0 0.0
      %2296 = vmatmul.mubr.f32.gmra.mrb[0].mxu0 %v2197
      %v2297 = vpop.f32.mrb[0].mxu0
      %v2298 = vadd.f32 %v2166, %v2297
      %v2299 = vpop.f32.mrb[0].mxu0
      %2300 = vmatprep.mubr.f32.mxu0 0.0
      %2301 = vmatmul.mubr.f32.gmra.mrb[0].mxu0 %v2200
      %v2302 = vpop.f32.mrb[0].mxu0
      %v2303 = vadd.f32 %v2171, %v2302
      %v2304 = vpop.f32.mrb[0].mxu0
      %2305 = vmatprep.mubr.f32.mxu0 0.0
      %2306 = vmatmul.mubr.f32.gmra.mrb[0].mxu0 %v2203
      %v2307 = vpop.f32.mrb[0].mxu0
      %v2308 = vadd.f32 %v2176, %v2307
      %v2309 = vpop.f32.mrb[0].mxu0
      %2310 = vmatprep.mubr.f32.mxu0 0.0
      %2311 = vmatmul.mubr.f32.gmra.mrb[0].mxu0 %v2206
      %v2312 = vpop.f32.mrb[0].mxu0
      %v2313 = vadd.f32 %v2181, %v2312
      %v2314 = vpop.f32.mrb[0].mxu0
      %2315 = vdwg.mxu0
      %v2316 = vld [vmem:[#allocation2 + $0x2] sm:$0xff]
      %v2317 = vld [vmem:[#allocation2 + $0x12] sm:$0xff]
      %v2318 = vld [vmem:[#allocation2 + $0x22] sm:$0xff]
      %v2319 = vld [vmem:[#allocation2 + $0x32] sm:$0xff]
      %v2320 = vld [vmem:[#allocation2 + $0x42] sm:$0xff]
      %v2321 = vld [vmem:[#allocation2 + $0x52] sm:$0xff]
      %v2322 = vld [vmem:[#allocation2 + $0x62] sm:$0xff]
      %v2323 = vld [vmem:[#allocation2 + $0x72] sm:$0xff]
      %s2324 = scalar_lea.vmem %s7, 8
      %v2325 = vld [vmem:[%s2324] sm:$0xf]
      %v2327 = vsel %vm1572, %v2316, 0
      %v2330 = vsel %vm1572, %v2317, 0
      %v2333 = vsel %vm1572, %v2318, 0
      %v2336 = vsel %vm1572, %v2319, 0
      %v2339 = vsel %vm1572, %v2320, 0
      %v2342 = vsel %vm1572, %v2321, 0
      %v2345 = vsel %vm1572, %v2322, 0
      %v2348 = vsel %vm1572, %v2323, 0
      %v2351 = vsel %vm1589, %v2325, 0
      %2353 = vmatprep.subr.mxu0 0.0
      %2354 = vmatpush1.msra.mxu0 %v2351
      %2355 = vmatprep.subr.mxu0 0.0
      %2356 = vmatpush1.msra.mxu0 0.0
      %2357 = vmatprep.subr.mxu0 0.0
      %2358 = vmatpush1.msra.mxu0 0.0
      %2359 = vmatprep.subr.mxu0 0.0
      %2360 = vmatpush1.msra.mxu0 0.0
      %2361 = vmatprep.subr.mxu0 0.0
      %2362 = vmatpush1.msra.mxu0 0.0
      %2363 = vmatprep.subr.mxu0 0.0
      %2364 = vmatpush1.msra.mxu0 0.0
      %2365 = vmatprep.subr.mxu0 0.0
      %2366 = vmatpush1.msra.mxu0 0.0
      %2367 = vmatprep.subr.mxu0 0.0
      %2368 = vmatpush1.msra.mxu0 0.0
      %2369 = vmatprep.subr.mxu0 0.0
      %2370 = vmatpush1.msra.mxu0 0.0
      %2371 = vmatprep.subr.mxu0 0.0
      %2372 = vmatpush1.msra.mxu0 0.0
      %2373 = vmatprep.subr.mxu0 0.0
      %2374 = vmatpush1.msra.mxu0 0.0
      %2375 = vmatprep.subr.mxu0 0.0
      %2376 = vmatpush1.msra.mxu0 0.0
      %2377 = vmatprep.subr.mxu0 0.0
      %2378 = vmatpush1.msra.mxu0 0.0
      %2379 = vmatprep.subr.mxu0 0.0
      %2380 = vmatpush1.msra.mxu0 0.0
      %2381 = vmatprep.subr.mxu0 0.0
      %2382 = vmatpush1.msra.mxu0 0.0
      %2383 = vmatprep.subr.mxu0 0.0
      %2384 = vmatpush1.msra.mxu0 0.0
      %2385 = vmatprep.subr.mxu0 0.0
      %2386 = vmatpush1.msra.mxu0 0.0
      %2387 = vmatprep.subr.mxu0 0.0
      %2388 = vmatpush1.msra.mxu0 0.0
      %2389 = vmatprep.subr.mxu0 0.0
      %2390 = vmatpush1.msra.mxu0 0.0
      %2391 = vmatprep.subr.mxu0 0.0
      %2392 = vmatpush1.msra.mxu0 0.0
      %2393 = vmatprep.subr.mxu0 0.0
      %2394 = vmatpush1.msra.mxu0 0.0
      %2395 = vmatprep.subr.mxu0 0.0
      %2396 = vmatpush1.msra.mxu0 0.0
      %2397 = vmatprep.subr.mxu0 0.0
      %2398 = vmatpush1.msra.mxu0 0.0
      %2399 = vmatprep.subr.mxu0 0.0
      %2400 = vmatpush1.msra.mxu0 0.0
      %2401 = vmatprep.subr.mxu0 0.0
      %2402 = vmatpush1.msra.mxu0 0.0
      %2403 = vmatprep.subr.mxu0 0.0
      %2404 = vmatpush1.msra.mxu0 0.0
      %2405 = vmatprep.subr.mxu0 0.0
      %2406 = vmatpush1.msra.mxu0 0.0
      %2407 = vmatprep.subr.mxu0 0.0
      %2408 = vmatpush1.msra.mxu0 0.0
      %2409 = vmatprep.subr.mxu0 0.0
      %2410 = vmatpush1.msra.mxu0 0.0
      %2411 = vmatprep.subr.mxu0 0.0
      %2412 = vmatpush1.msra.mxu0 0.0
      %2413 = vmatprep.subr.mxu0 0.0
      %2414 = vmatpush1.msra.mxu0 0.0
      %2415 = vmatprep.subr.mxu0 0.0
      %2416 = vmatpush1.msra.mxu0 0.0
      %2417 = vmatprep.mubr.f32.mxu0 0.0
      %2418 = vmatmul.mubr.f32.gmra.mrb[0].mxu0 %v2327
      %v2419 = vpop.f32.mrb[0].mxu0
      %v2420 = vadd.f32 0.0, %v2419
      %v2421 = vpop.f32.mrb[0].mxu0
      %2422 = vmatprep.mubr.f32.mxu0 0.0
      %2423 = vmatmul.mubr.f32.gmra.mrb[0].mxu0 %v2330
      %v2424 = vpop.f32.mrb[0].mxu0
      %v2425 = vadd.f32 0.0, %v2424
      %v2426 = vpop.f32.mrb[0].mxu0
      %2427 = vmatprep.mubr.f32.mxu0 0.0
      %2428 = vmatmul.mubr.f32.gmra.mrb[0].mxu0 %v2333
      %v2429 = vpop.f32.mrb[0].mxu0
      %v2430 = vadd.f32 0.0, %v2429
      %v2431 = vpop.f32.mrb[0].mxu0
      %2432 = vmatprep.mubr.f32.mxu0 0.0
      %2433 = vmatmul.mubr.f32.gmra.mrb[0].mxu0 %v2336
      %v2434 = vpop.f32.mrb[0].mxu0
      %v2435 = vadd.f32 0.0, %v2434
      %v2436 = vpop.f32.mrb[0].mxu0
      %2437 = vmatprep.mubr.f32.mxu0 0.0
      %2438 = vmatmul.mubr.f32.gmra.mrb[0].mxu0 %v2339
      %v2439 = vpop.f32.mrb[0].mxu0
      %v2440 = vadd.f32 0.0, %v2439
      %v2441 = vpop.f32.mrb[0].mxu0
      %2442 = vmatprep.mubr.f32.mxu0 0.0
      %2443 = vmatmul.mubr.f32.gmra.mrb[0].mxu0 %v2342
      %v2444 = vpop.f32.mrb[0].mxu0
      %v2445 = vadd.f32 0.0, %v2444
      %v2446 = vpop.f32.mrb[0].mxu0
      %2447 = vmatprep.mubr.f32.mxu0 0.0
      %2448 = vmatmul.mubr.f32.gmra.mrb[0].mxu0 %v2345
      %v2449 = vpop.f32.mrb[0].mxu0
      %v2450 = vadd.f32 0.0, %v2449
      %v2451 = vpop.f32.mrb[0].mxu0
      %2452 = vmatprep.mubr.f32.mxu0 0.0
      %2453 = vmatmul.mubr.f32.gmra.mrb[0].mxu0 %v2348
      %v2454 = vpop.f32.mrb[0].mxu0
      %v2455 = vadd.f32 0.0, %v2454
      %v2456 = vpop.f32.mrb[0].mxu0
      %2457 = vdwg.mxu0
      %v2458 = vadd.f32 %v2278, %v2420
      %v2459 = vadd.f32 %v2283, %v2425
      %v2460 = vadd.f32 %v2288, %v2430
      %v2461 = vadd.f32 %v2293, %v2435
      %v2462 = vadd.f32 %v2298, %v2440
      %v2463 = vadd.f32 %v2303, %v2445
      %v2464 = vadd.f32 %v2308, %v2450
      %v2465 = vadd.f32 %v2313, %v2455
      %v2466 = vld [vmem:[%s2024] sm:$0xff]
      %v2467 = vld [vmem:[%s2024 + $0x10] sm:$0xff]
      %v2468 = vld [vmem:[%s2024 + $0x20] sm:$0xff]
      %v2469 = vld [vmem:[%s2024 + $0x30] sm:$0xff]
      %v2470 = vld [vmem:[%s2024 + $0x40] sm:$0xff]
      %v2471 = vld [vmem:[%s2024 + $0x50] sm:$0xff]
      %v2472 = vld [vmem:[%s2024 + $0x60] sm:$0xff]
      %v2473 = vld [vmem:[%s2024 + $0x70] sm:$0xff]
      %s2474 = scalar_lea.vmem %s7, 12
      %v2475 = vld [vmem:[%s2474] sm:$0xf]
      %v2477 = vsel %vm1572, %v2466, 0
      %v2480 = vsel %vm1572, %v2467, 0
      %v2483 = vsel %vm1572, %v2468, 0
      %v2486 = vsel %vm1572, %v2469, 0
      %v2489 = vsel %vm1572, %v2470, 0
      %v2492 = vsel %vm1572, %v2471, 0
      %v2495 = vsel %vm1572, %v2472, 0
      %v2498 = vsel %vm1572, %v2473, 0
      %v2501 = vsel %vm1589, %v2475, 0
      %2503 = vmatprep.subr.mxu0 0.0
      %2504 = vmatpush1.msra.mxu0 %v2501
      %2505 = vmatprep.subr.mxu0 0.0
      %2506 = vmatpush1.msra.mxu0 0.0
      %2507 = vmatprep.subr.mxu0 0.0
      %2508 = vmatpush1.msra.mxu0 0.0
      %2509 = vmatprep.subr.mxu0 0.0
      %2510 = vmatpush1.msra.mxu0 0.0
      %2511 = vmatprep.subr.mxu0 0.0
      %2512 = vmatpush1.msra.mxu0 0.0
      %2513 = vmatprep.subr.mxu0 0.0
      %2514 = vmatpush1.msra.mxu0 0.0
      %2515 = vmatprep.subr.mxu0 0.0
      %2516 = vmatpush1.msra.mxu0 0.0
      %2517 = vmatprep.subr.mxu0 0.0
      %2518 = vmatpush1.msra.mxu0 0.0
      %2519 = vmatprep.subr.mxu0 0.0
      %2520 = vmatpush1.msra.mxu0 0.0
      %2521 = vmatprep.subr.mxu0 0.0
      %2522 = vmatpush1.msra.mxu0 0.0
      %2523 = vmatprep.subr.mxu0 0.0
      %2524 = vmatpush1.msra.mxu0 0.0
      %2525 = vmatprep.subr.mxu0 0.0
      %2526 = vmatpush1.msra.mxu0 0.0
      %2527 = vmatprep.subr.mxu0 0.0
      %2528 = vmatpush1.msra.mxu0 0.0
      %2529 = vmatprep.subr.mxu0 0.0
      %2530 = vmatpush1.msra.mxu0 0.0
      %2531 = vmatprep.subr.mxu0 0.0
      %2532 = vmatpush1.msra.mxu0 0.0
      %2533 = vmatprep.subr.mxu0 0.0
      %2534 = vmatpush1.msra.mxu0 0.0
      %2535 = vmatprep.subr.mxu0 0.0
      %2536 = vmatpush1.msra.mxu0 0.0
      %2537 = vmatprep.subr.mxu0 0.0
      %2538 = vmatpush1.msra.mxu0 0.0
      %2539 = vmatprep.subr.mxu0 0.0
      %2540 = vmatpush1.msra.mxu0 0.0
      %2541 = vmatprep.subr.mxu0 0.0
      %2542 = vmatpush1.msra.mxu0 0.0
      %2543 = vmatprep.subr.mxu0 0.0
      %2544 = vmatpush1.msra.mxu0 0.0
      %2545 = vmatprep.subr.mxu0 0.0
      %2546 = vmatpush1.msra.mxu0 0.0
      %2547 = vmatprep.subr.mxu0 0.0
      %2548 = vmatpush1.msra.mxu0 0.0
      %2549 = vmatprep.subr.mxu0 0.0
      %2550 = vmatpush1.msra.mxu0 0.0
      %2551 = vmatprep.subr.mxu0 0.0
      %2552 = vmatpush1.msra.mxu0 0.0
      %2553 = vmatprep.subr.mxu0 0.0
      %2554 = vmatpush1.msra.mxu0 0.0
      %2555 = vmatprep.subr.mxu0 0.0
      %2556 = vmatpush1.msra.mxu0 0.0
      %2557 = vmatprep.subr.mxu0 0.0
      %2558 = vmatpush1.msra.mxu0 0.0
      %2559 = vmatprep.subr.mxu0 0.0
      %2560 = vmatpush1.msra.mxu0 0.0
      %2561 = vmatprep.subr.mxu0 0.0
      %2562 = vmatpush1.msra.mxu0 0.0
      %2563 = vmatprep.subr.mxu0 0.0
      %2564 = vmatpush1.msra.mxu0 0.0
      %2565 = vmatprep.subr.mxu0 0.0
      %2566 = vmatpush1.msra.mxu0 0.0
      %2567 = vmatprep.mubr.f32.mxu0 0.0
      %2568 = vmatmul.mubr.f32.gmra.mrb[0].mxu0 %v2477
      %v2569 = vpop.f32.mrb[0].mxu0
      %v2570 = vadd.f32 0.0, %v2569
      %v2571 = vpop.f32.mrb[0].mxu0
      %2572 = vmatprep.mubr.f32.mxu0 0.0
      %2573 = vmatmul.mubr.f32.gmra.mrb[0].mxu0 %v2480
      %v2574 = vpop.f32.mrb[0].mxu0
      %v2575 = vadd.f32 0.0, %v2574
      %v2576 = vpop.f32.mrb[0].mxu0
      %2577 = vmatprep.mubr.f32.mxu0 0.0
      %2578 = vmatmul.mubr.f32.gmra.mrb[0].mxu0 %v2483
      %v2579 = vpop.f32.mrb[0].mxu0
      %v2580 = vadd.f32 0.0, %v2579
      %v2581 = vpop.f32.mrb[0].mxu0
      %2582 = vmatprep.mubr.f32.mxu0 0.0
      %2583 = vmatmul.mubr.f32.gmra.mrb[0].mxu0 %v2486
      %v2584 = vpop.f32.mrb[0].mxu0
      %v2585 = vadd.f32 0.0, %v2584
      %v2586 = vpop.f32.mrb[0].mxu0
      %2587 = vmatprep.mubr.f32.mxu0 0.0
      %2588 = vmatmul.mubr.f32.gmra.mrb[0].mxu0 %v2489
      %v2589 = vpop.f32.mrb[0].mxu0
      %v2590 = vadd.f32 0.0, %v2589
      %v2591 = vpop.f32.mrb[0].mxu0
      %2592 = vmatprep.mubr.f32.mxu0 0.0
      %2593 = vmatmul.mubr.f32.gmra.mrb[0].mxu0 %v2492
      %v2594 = vpop.f32.mrb[0].mxu0
      %v2595 = vadd.f32 0.0, %v2594
      %v2596 = vpop.f32.mrb[0].mxu0
      %2597 = vmatprep.mubr.f32.mxu0 0.0
      %2598 = vmatmul.mubr.f32.gmra.mrb[0].mxu0 %v2495
      %v2599 = vpop.f32.mrb[0].mxu0
      %v2600 = vadd.f32 0.0, %v2599
      %v2601 = vpop.f32.mrb[0].mxu0
      %2602 = vmatprep.mubr.f32.mxu0 0.0
      %2603 = vmatmul.mubr.f32.gmra.mrb[0].mxu0 %v2498
      %v2604 = vpop.f32.mrb[0].mxu0
      %v2605 = vadd.f32 0.0, %v2604
      %v2606 = vpop.f32.mrb[0].mxu0
      %2607 = vdwg.mxu0
      %v2608 = vadd.f32 %v2458, %v2570
      %v2609 = vadd.f32 %v2459, %v2575
      %v2610 = vadd.f32 %v2460, %v2580
      %v2611 = vadd.f32 %v2461, %v2585
      %v2612 = vadd.f32 %v2462, %v2590
      %v2613 = vadd.f32 %v2463, %v2595
      %v2614 = vadd.f32 %v2464, %v2600
      %v2615 = vadd.f32 %v2465, %v2605
      %v2616 = vld [vmem:[%s2024 + $0x1] sm:$0xff]
      %v2617 = vld [vmem:[%s2024 + $0x11] sm:$0xff]
      %v2618 = vld [vmem:[%s2024 + $0x21] sm:$0xff]
      %v2619 = vld [vmem:[%s2024 + $0x31] sm:$0xff]
      %v2620 = vld [vmem:[%s2024 + $0x41] sm:$0xff]
      %v2621 = vld [vmem:[%s2024 + $0x51] sm:$0xff]
      %v2622 = vld [vmem:[%s2024 + $0x61] sm:$0xff]
      %v2623 = vld [vmem:[%s2024 + $0x71] sm:$0xff]
      %s2624 = scalar_lea.vmem %s7, 16
      %v2625 = vld [vmem:[%s2624] sm:$0xf]
      %v2627 = vsel %vm1572, %v2616, 0
      %v2630 = vsel %vm1572, %v2617, 0
      %v2633 = vsel %vm1572, %v2618, 0
      %v2636 = vsel %vm1572, %v2619, 0
      %v2639 = vsel %vm1572, %v2620, 0
      %v2642 = vsel %vm1572, %v2621, 0
      %v2645 = vsel %vm1572, %v2622, 0
      %v2648 = vsel %vm1572, %v2623, 0
      %v2651 = vsel %vm1589, %v2625, 0
      %2653 = vmatprep.subr.mxu0 0.0
      %2654 = vmatpush1.msra.mxu0 %v2651
      %2655 = vmatprep.subr.mxu0 0.0
      %2656 = vmatpush1.msra.mxu0 0.0
      %2657 = vmatprep.subr.mxu0 0.0
      %2658 = vmatpush1.msra.mxu0 0.0
      %2659 = vmatprep.subr.mxu0 0.0
      %2660 = vmatpush1.msra.mxu0 0.0
      %2661 = vmatprep.subr.mxu0 0.0
      %2662 = vmatpush1.msra.mxu0 0.0
      %2663 = vmatprep.subr.mxu0 0.0
      %2664 = vmatpush1.msra.mxu0 0.0
      %2665 = vmatprep.subr.mxu0 0.0
      %2666 = vmatpush1.msra.mxu0 0.0
      %2667 = vmatprep.subr.mxu0 0.0
      %2668 = vmatpush1.msra.mxu0 0.0
      %2669 = vmatprep.subr.mxu0 0.0
      %2670 = vmatpush1.msra.mxu0 0.0
      %2671 = vmatprep.subr.mxu0 0.0
      %2672 = vmatpush1.msra.mxu0 0.0
      %2673 = vmatprep.subr.mxu0 0.0
      %2674 = vmatpush1.msra.mxu0 0.0
      %2675 = vmatprep.subr.mxu0 0.0
      %2676 = vmatpush1.msra.mxu0 0.0
      %2677 = vmatprep.subr.mxu0 0.0
      %2678 = vmatpush1.msra.mxu0 0.0
      %2679 = vmatprep.subr.mxu0 0.0
      %2680 = vmatpush1.msra.mxu0 0.0
      %2681 = vmatprep.subr.mxu0 0.0
      %2682 = vmatpush1.msra.mxu0 0.0
      %2683 = vmatprep.subr.mxu0 0.0
      %2684 = vmatpush1.msra.mxu0 0.0
      %2685 = vmatprep.subr.mxu0 0.0
      %2686 = vmatpush1.msra.mxu0 0.0
      %2687 = vmatprep.subr.mxu0 0.0
      %2688 = vmatpush1.msra.mxu0 0.0
      %2689 = vmatprep.subr.mxu0 0.0
      %2690 = vmatpush1.msra.mxu0 0.0
      %2691 = vmatprep.subr.mxu0 0.0
      %2692 = vmatpush1.msra.mxu0 0.0
      %2693 = vmatprep.subr.mxu0 0.0
      %2694 = vmatpush1.msra.mxu0 0.0
      %2695 = vmatprep.subr.mxu0 0.0
      %2696 = vmatpush1.msra.mxu0 0.0
      %2697 = vmatprep.subr.mxu0 0.0
      %2698 = vmatpush1.msra.mxu0 0.0
      %2699 = vmatprep.subr.mxu0 0.0
      %2700 = vmatpush1.msra.mxu0 0.0
      %2701 = vmatprep.subr.mxu0 0.0
      %2702 = vmatpush1.msra.mxu0 0.0
      %2703 = vmatprep.subr.mxu0 0.0
      %2704 = vmatpush1.msra.mxu0 0.0
      %2705 = vmatprep.subr.mxu0 0.0
      %2706 = vmatpush1.msra.mxu0 0.0
      %2707 = vmatprep.subr.mxu0 0.0
      %2708 = vmatpush1.msra.mxu0 0.0
      %2709 = vmatprep.subr.mxu0 0.0
      %2710 = vmatpush1.msra.mxu0 0.0
      %2711 = vmatprep.subr.mxu0 0.0
      %2712 = vmatpush1.msra.mxu0 0.0
      %2713 = vmatprep.subr.mxu0 0.0
      %2714 = vmatpush1.msra.mxu0 0.0
      %2715 = vmatprep.subr.mxu0 0.0
      %2716 = vmatpush1.msra.mxu0 0.0
      %2717 = vmatprep.mubr.f32.mxu0 0.0
      %2718 = vmatmul.mubr.f32.gmra.mrb[0].mxu0 %v2627
      %v2719 = vpop.f32.mrb[0].mxu0
      %v2720 = vadd.f32 0.0, %v2719
      %v2721 = vpop.f32.mrb[0].mxu0
      %2722 = vmatprep.mubr.f32.mxu0 0.0
      %2723 = vmatmul.mubr.f32.gmra.mrb[0].mxu0 %v2630
      %v2724 = vpop.f32.mrb[0].mxu0
      %v2725 = vadd.f32 0.0, %v2724
      %v2726 = vpop.f32.mrb[0].mxu0
      %2727 = vmatprep.mubr.f32.mxu0 0.0
      %2728 = vmatmul.mubr.f32.gmra.mrb[0].mxu0 %v2633
      %v2729 = vpop.f32.mrb[0].mxu0
      %v2730 = vadd.f32 0.0, %v2729
      %v2731 = vpop.f32.mrb[0].mxu0
      %2732 = vmatprep.mubr.f32.mxu0 0.0
      %2733 = vmatmul.mubr.f32.gmra.mrb[0].mxu0 %v2636
      %v2734 = vpop.f32.mrb[0].mxu0
      %v2735 = vadd.f32 0.0, %v2734
      %v2736 = vpop.f32.mrb[0].mxu0
      %2737 = vmatprep.mubr.f32.mxu0 0.0
      %2738 = vmatmul.mubr.f32.gmra.mrb[0].mxu0 %v2639
      %v2739 = vpop.f32.mrb[0].mxu0
      %v2740 = vadd.f32 0.0, %v2739
      %v2741 = vpop.f32.mrb[0].mxu0
      %2742 = vmatprep.mubr.f32.mxu0 0.0
      %2743 = vmatmul.mubr.f32.gmra.mrb[0].mxu0 %v2642
      %v2744 = vpop.f32.mrb[0].mxu0
      %v2745 = vadd.f32 0.0, %v2744
      %v2746 = vpop.f32.mrb[0].mxu0
      %2747 = vmatprep.mubr.f32.mxu0 0.0
      %2748 = vmatmul.mubr.f32.gmra.mrb[0].mxu0 %v2645
      %v2749 = vpop.f32.mrb[0].mxu0
      %v2750 = vadd.f32 0.0, %v2749
      %v2751 = vpop.f32.mrb[0].mxu0
      %2752 = vmatprep.mubr.f32.mxu0 0.0
      %2753 = vmatmul.mubr.f32.gmra.mrb[0].mxu0 %v2648
      %v2754 = vpop.f32.mrb[0].mxu0
      %v2755 = vadd.f32 0.0, %v2754
      %v2756 = vpop.f32.mrb[0].mxu0
      %2757 = vdwg.mxu0
      %v2758 = vadd.f32 %v2608, %v2720
      %v2759 = vadd.f32 %v2609, %v2725
      %v2760 = vadd.f32 %v2610, %v2730
      %v2761 = vadd.f32 %v2611, %v2735
      %v2762 = vadd.f32 %v2612, %v2740
      %v2763 = vadd.f32 %v2613, %v2745
      %v2764 = vadd.f32 %v2614, %v2750
      %v2765 = vadd.f32 %v2615, %v2755
      %v2766 = vld [vmem:[%s2024 + $0x2] sm:$0xff]
      %v2767 = vld [vmem:[%s2024 + $0x12] sm:$0xff]
      %v2768 = vld [vmem:[%s2024 + $0x22] sm:$0xff]
      %v2769 = vld [vmem:[%s2024 + $0x32] sm:$0xff]
      %v2770 = vld [vmem:[%s2024 + $0x42] sm:$0xff]
      %v2771 = vld [vmem:[%s2024 + $0x52] sm:$0xff]
      %v2772 = vld [vmem:[%s2024 + $0x62] sm:$0xff]
      %v2773 = vld [vmem:[%s2024 + $0x72] sm:$0xff]
      %s2774 = scalar_lea.vmem %s7, 20
      %v2775 = vld [vmem:[%s2774] sm:$0xf]
      %v2777 = vsel %vm1572, %v2766, 0
      %v2780 = vsel %vm1572, %v2767, 0
      %v2783 = vsel %vm1572, %v2768, 0
      %v2786 = vsel %vm1572, %v2769, 0
      %v2789 = vsel %vm1572, %v2770, 0
      %v2792 = vsel %vm1572, %v2771, 0
      %v2795 = vsel %vm1572, %v2772, 0
      %v2798 = vsel %vm1572, %v2773, 0
      %v2801 = vsel %vm1589, %v2775, 0
      %2803 = vmatprep.subr.mxu0 0.0
      %2804 = vmatpush1.msra.mxu0 %v2801
      %2805 = vmatprep.subr.mxu0 0.0
      %2806 = vmatpush1.msra.mxu0 0.0
      %2807 = vmatprep.subr.mxu0 0.0
      %2808 = vmatpush1.msra.mxu0 0.0
      %2809 = vmatprep.subr.mxu0 0.0
      %2810 = vmatpush1.msra.mxu0 0.0
      %2811 = vmatprep.subr.mxu0 0.0
      %2812 = vmatpush1.msra.mxu0 0.0
      %2813 = vmatprep.subr.mxu0 0.0
      %2814 = vmatpush1.msra.mxu0 0.0
      %2815 = vmatprep.subr.mxu0 0.0
      %2816 = vmatpush1.msra.mxu0 0.0
      %2817 = vmatprep.subr.mxu0 0.0
      %2818 = vmatpush1.msra.mxu0 0.0
      %2819 = vmatprep.subr.mxu0 0.0
      %2820 = vmatpush1.msra.mxu0 0.0
      %2821 = vmatprep.subr.mxu0 0.0
      %2822 = vmatpush1.msra.mxu0 0.0
      %2823 = vmatprep.subr.mxu0 0.0
      %2824 = vmatpush1.msra.mxu0 0.0
      %2825 = vmatprep.subr.mxu0 0.0
      %2826 = vmatpush1.msra.mxu0 0.0
      %2827 = vmatprep.subr.mxu0 0.0
      %2828 = vmatpush1.msra.mxu0 0.0
      %2829 = vmatprep.subr.mxu0 0.0
      %2830 = vmatpush1.msra.mxu0 0.0
      %2831 = vmatprep.subr.mxu0 0.0
      %2832 = vmatpush1.msra.mxu0 0.0
      %2833 = vmatprep.subr.mxu0 0.0
      %2834 = vmatpush1.msra.mxu0 0.0
      %2835 = vmatprep.subr.mxu0 0.0
      %2836 = vmatpush1.msra.mxu0 0.0
      %2837 = vmatprep.subr.mxu0 0.0
      %2838 = vmatpush1.msra.mxu0 0.0
      %2839 = vmatprep.subr.mxu0 0.0
      %2840 = vmatpush1.msra.mxu0 0.0
      %2841 = vmatprep.subr.mxu0 0.0
      %2842 = vmatpush1.msra.mxu0 0.0
      %2843 = vmatprep.subr.mxu0 0.0
      %2844 = vmatpush1.msra.mxu0 0.0
      %2845 = vmatprep.subr.mxu0 0.0
      %2846 = vmatpush1.msra.mxu0 0.0
      %2847 = vmatprep.subr.mxu0 0.0
      %2848 = vmatpush1.msra.mxu0 0.0
      %2849 = vmatprep.subr.mxu0 0.0
      %2850 = vmatpush1.msra.mxu0 0.0
      %2851 = vmatprep.subr.mxu0 0.0
      %2852 = vmatpush1.msra.mxu0 0.0
      %2853 = vmatprep.subr.mxu0 0.0
      %2854 = vmatpush1.msra.mxu0 0.0
      %2855 = vmatprep.subr.mxu0 0.0
      %2856 = vmatpush1.msra.mxu0 0.0
      %2857 = vmatprep.subr.mxu0 0.0
      %2858 = vmatpush1.msra.mxu0 0.0
      %2859 = vmatprep.subr.mxu0 0.0
      %2860 = vmatpush1.msra.mxu0 0.0
      %2861 = vmatprep.subr.mxu0 0.0
      %2862 = vmatpush1.msra.mxu0 0.0
      %2863 = vmatprep.subr.mxu0 0.0
      %2864 = vmatpush1.msra.mxu0 0.0
      %2865 = vmatprep.subr.mxu0 0.0
      %2866 = vmatpush1.msra.mxu0 0.0
      %2867 = vmatprep.mubr.f32.mxu0 0.0
      %2868 = vmatmul.mubr.f32.gmra.mrb[0].mxu0 %v2777
      %v2869 = vpop.f32.mrb[0].mxu0
      %v2870 = vadd.f32 0.0, %v2869
      %v2871 = vpop.f32.mrb[0].mxu0
      %2872 = vmatprep.mubr.f32.mxu0 0.0
      %2873 = vmatmul.mubr.f32.gmra.mrb[0].mxu0 %v2780
      %v2874 = vpop.f32.mrb[0].mxu0
      %v2875 = vadd.f32 0.0, %v2874
      %v2876 = vpop.f32.mrb[0].mxu0
      %2877 = vmatprep.mubr.f32.mxu0 0.0
      %2878 = vmatmul.mubr.f32.gmra.mrb[0].mxu0 %v2783
      %v2879 = vpop.f32.mrb[0].mxu0
      %v2880 = vadd.f32 0.0, %v2879
      %v2881 = vpop.f32.mrb[0].mxu0
      %2882 = vmatprep.mubr.f32.mxu0 0.0
      %2883 = vmatmul.mubr.f32.gmra.mrb[0].mxu0 %v2786
      %v2884 = vpop.f32.mrb[0].mxu0
      %v2885 = vadd.f32 0.0, %v2884
      %v2886 = vpop.f32.mrb[0].mxu0
      %2887 = vmatprep.mubr.f32.mxu0 0.0
      %2888 = vmatmul.mubr.f32.gmra.mrb[0].mxu0 %v2789
      %v2889 = vpop.f32.mrb[0].mxu0
      %v2890 = vadd.f32 0.0, %v2889
      %v2891 = vpop.f32.mrb[0].mxu0
      %2892 = vmatprep.mubr.f32.mxu0 0.0
      %2893 = vmatmul.mubr.f32.gmra.mrb[0].mxu0 %v2792
      %v2894 = vpop.f32.mrb[0].mxu0
      %v2895 = vadd.f32 0.0, %v2894
      %v2896 = vpop.f32.mrb[0].mxu0
      %2897 = vmatprep.mubr.f32.mxu0 0.0
      %2898 = vmatmul.mubr.f32.gmra.mrb[0].mxu0 %v2795
      %v2899 = vpop.f32.mrb[0].mxu0
      %v2900 = vadd.f32 0.0, %v2899
      %v2901 = vpop.f32.mrb[0].mxu0
      %2902 = vmatprep.mubr.f32.mxu0 0.0
      %2903 = vmatmul.mubr.f32.gmra.mrb[0].mxu0 %v2798
      %v2904 = vpop.f32.mrb[0].mxu0
      %v2905 = vadd.f32 0.0, %v2904
      %v2906 = vpop.f32.mrb[0].mxu0
      %2907 = vdwg.mxu0
      %v2908 = vadd.f32 %v2758, %v2870
      %v2909 = vadd.f32 %v2759, %v2875
      %v2910 = vadd.f32 %v2760, %v2880
      %v2911 = vadd.f32 %v2761, %v2885
      %v2912 = vadd.f32 %v2762, %v2890
      %v2913 = vadd.f32 %v2763, %v2895
      %v2914 = vadd.f32 %v2764, %v2900
      %v2915 = vadd.f32 %v2765, %v2905
      %s2916 = scalar_lea.vmem [#allocation2], 32
      %v2917 = vld [vmem:[%s2916] sm:$0xff]
      %v2918 = vld [vmem:[%s2916 + $0x10] sm:$0xff]
      %v2919 = vld [vmem:[%s2916 + $0x20] sm:$0xff]
      %v2920 = vld [vmem:[%s2916 + $0x30] sm:$0xff]
      %v2921 = vld [vmem:[%s2916 + $0x40] sm:$0xff]
      %v2922 = vld [vmem:[%s2916 + $0x50] sm:$0xff]
      %v2923 = vld [vmem:[%s2916 + $0x60] sm:$0xff]
      %v2924 = vld [vmem:[%s2916 + $0x70] sm:$0xff]
      %s2925 = scalar_lea.vmem %s7, 24
      %v2926 = vld [vmem:[%s2925] sm:$0xf]
      %v2928 = vsel %vm1572, %v2917, 0
      %v2931 = vsel %vm1572, %v2918, 0
      %v2934 = vsel %vm1572, %v2919, 0
      %v2937 = vsel %vm1572, %v2920, 0
      %v2940 = vsel %vm1572, %v2921, 0
      %v2943 = vsel %vm1572, %v2922, 0
      %v2946 = vsel %vm1572, %v2923, 0
      %v2949 = vsel %vm1572, %v2924, 0
      %v2952 = vsel %vm1589, %v2926, 0
      %2954 = vmatprep.subr.mxu0 0.0
      %2955 = vmatpush1.msra.mxu0 %v2952
      %2956 = vmatprep.subr.mxu0 0.0
      %2957 = vmatpush1.msra.mxu0 0.0
      %2958 = vmatprep.subr.mxu0 0.0
      %2959 = vmatpush1.msra.mxu0 0.0
      %2960 = vmatprep.subr.mxu0 0.0
      %2961 = vmatpush1.msra.mxu0 0.0
      %2962 = vmatprep.subr.mxu0 0.0
      %2963 = vmatpush1.msra.mxu0 0.0
      %2964 = vmatprep.subr.mxu0 0.0
      %2965 = vmatpush1.msra.mxu0 0.0
      %2966 = vmatprep.subr.mxu0 0.0
      %2967 = vmatpush1.msra.mxu0 0.0
      %2968 = vmatprep.subr.mxu0 0.0
      %2969 = vmatpush1.msra.mxu0 0.0
      %2970 = vmatprep.subr.mxu0 0.0
      %2971 = vmatpush1.msra.mxu0 0.0
      %2972 = vmatprep.subr.mxu0 0.0
      %2973 = vmatpush1.msra.mxu0 0.0
      %2974 = vmatprep.subr.mxu0 0.0
      %2975 = vmatpush1.msra.mxu0 0.0
      %2976 = vmatprep.subr.mxu0 0.0
      %2977 = vmatpush1.msra.mxu0 0.0
      %2978 = vmatprep.subr.mxu0 0.0
      %2979 = vmatpush1.msra.mxu0 0.0
      %2980 = vmatprep.subr.mxu0 0.0
      %2981 = vmatpush1.msra.mxu0 0.0
      %2982 = vmatprep.subr.mxu0 0.0
      %2983 = vmatpush1.msra.mxu0 0.0
      %2984 = vmatprep.subr.mxu0 0.0
      %2985 = vmatpush1.msra.mxu0 0.0
      %2986 = vmatprep.subr.mxu0 0.0
      %2987 = vmatpush1.msra.mxu0 0.0
      %2988 = vmatprep.subr.mxu0 0.0
      %2989 = vmatpush1.msra.mxu0 0.0
      %2990 = vmatprep.subr.mxu0 0.0
      %2991 = vmatpush1.msra.mxu0 0.0
      %2992 = vmatprep.subr.mxu0 0.0
      %2993 = vmatpush1.msra.mxu0 0.0
      %2994 = vmatprep.subr.mxu0 0.0
      %2995 = vmatpush1.msra.mxu0 0.0
      %2996 = vmatprep.subr.mxu0 0.0
      %2997 = vmatpush1.msra.mxu0 0.0
      %2998 = vmatprep.subr.mxu0 0.0
      %2999 = vmatpush1.msra.mxu0 0.0
      %3000 = vmatprep.subr.mxu0 0.0
      %3001 = vmatpush1.msra.mxu0 0.0
      %3002 = vmatprep.subr.mxu0 0.0
      %3003 = vmatpush1.msra.mxu0 0.0
      %3004 = vmatprep.subr.mxu0 0.0
      %3005 = vmatpush1.msra.mxu0 0.0
      %3006 = vmatprep.subr.mxu0 0.0
      %3007 = vmatpush1.msra.mxu0 0.0
      %3008 = vmatprep.subr.mxu0 0.0
      %3009 = vmatpush1.msra.mxu0 0.0
      %3010 = vmatprep.subr.mxu0 0.0
      %3011 = vmatpush1.msra.mxu0 0.0
      %3012 = vmatprep.subr.mxu0 0.0
      %3013 = vmatpush1.msra.mxu0 0.0
      %3014 = vmatprep.subr.mxu0 0.0
      %3015 = vmatpush1.msra.mxu0 0.0
      %3016 = vmatprep.subr.mxu0 0.0
      %3017 = vmatpush1.msra.mxu0 0.0
      %3018 = vmatprep.mubr.f32.mxu0 0.0
      %3019 = vmatmul.mubr.f32.gmra.mrb[0].mxu0 %v2928
      %v3020 = vpop.f32.mrb[0].mxu0
      %v3021 = vadd.f32 0.0, %v3020
      %v3022 = vpop.f32.mrb[0].mxu0
      %3023 = vmatprep.mubr.f32.mxu0 0.0
      %3024 = vmatmul.mubr.f32.gmra.mrb[0].mxu0 %v2931
      %v3025 = vpop.f32.mrb[0].mxu0
      %v3026 = vadd.f32 0.0, %v3025
      %v3027 = vpop.f32.mrb[0].mxu0
      %3028 = vmatprep.mubr.f32.mxu0 0.0
      %3029 = vmatmul.mubr.f32.gmra.mrb[0].mxu0 %v2934
      %v3030 = vpop.f32.mrb[0].mxu0
      %v3031 = vadd.f32 0.0, %v3030
      %v3032 = vpop.f32.mrb[0].mxu0
      %3033 = vmatprep.mubr.f32.mxu0 0.0
      %3034 = vmatmul.mubr.f32.gmra.mrb[0].mxu0 %v2937
      %v3035 = vpop.f32.mrb[0].mxu0
      %v3036 = vadd.f32 0.0, %v3035
      %v3037 = vpop.f32.mrb[0].mxu0
      %3038 = vmatprep.mubr.f32.mxu0 0.0
      %3039 = vmatmul.mubr.f32.gmra.mrb[0].mxu0 %v2940
      %v3040 = vpop.f32.mrb[0].mxu0
      %v3041 = vadd.f32 0.0, %v3040
      %v3042 = vpop.f32.mrb[0].mxu0
      %3043 = vmatprep.mubr.f32.mxu0 0.0
      %3044 = vmatmul.mubr.f32.gmra.mrb[0].mxu0 %v2943
      %v3045 = vpop.f32.mrb[0].mxu0
      %v3046 = vadd.f32 0.0, %v3045
      %v3047 = vpop.f32.mrb[0].mxu0
      %3048 = vmatprep.mubr.f32.mxu0 0.0
      %3049 = vmatmul.mubr.f32.gmra.mrb[0].mxu0 %v2946
      %v3050 = vpop.f32.mrb[0].mxu0
      %v3051 = vadd.f32 0.0, %v3050
      %v3052 = vpop.f32.mrb[0].mxu0
      %3053 = vmatprep.mubr.f32.mxu0 0.0
      %3054 = vmatmul.mubr.f32.gmra.mrb[0].mxu0 %v2949
      %v3055 = vpop.f32.mrb[0].mxu0
      %v3056 = vadd.f32 0.0, %v3055
      %v3057 = vpop.f32.mrb[0].mxu0
      %3058 = vdwg.mxu0
      %v3059 = vadd.f32 %v2908, %v3021
      %v3060 = vadd.f32 %v2909, %v3026
      %v3061 = vadd.f32 %v2910, %v3031
      %v3062 = vadd.f32 %v2911, %v3036
      %v3063 = vadd.f32 %v2912, %v3041
      %v3064 = vadd.f32 %v2913, %v3046
      %v3065 = vadd.f32 %v2914, %v3051
      %v3066 = vadd.f32 %v2915, %v3056
      %v3067 = vld [vmem:[%s2916 + $0x1] sm:$0xff]
      %v3068 = vld [vmem:[%s2916 + $0x11] sm:$0xff]
      %v3069 = vld [vmem:[%s2916 + $0x21] sm:$0xff]
      %v3070 = vld [vmem:[%s2916 + $0x31] sm:$0xff]
      %v3071 = vld [vmem:[%s2916 + $0x41] sm:$0xff]
      %v3072 = vld [vmem:[%s2916 + $0x51] sm:$0xff]
      %v3073 = vld [vmem:[%s2916 + $0x61] sm:$0xff]
      %v3074 = vld [vmem:[%s2916 + $0x71] sm:$0xff]
      %s3075 = scalar_lea.vmem %s7, 28
      %v3076 = vld [vmem:[%s3075] sm:$0xf]
      %v3078 = vsel %vm1572, %v3067, 0
      %v3081 = vsel %vm1572, %v3068, 0
      %v3084 = vsel %vm1572, %v3069, 0
      %v3087 = vsel %vm1572, %v3070, 0
      %v3090 = vsel %vm1572, %v3071, 0
      %v3093 = vsel %vm1572, %v3072, 0
      %v3096 = vsel %vm1572, %v3073, 0
      %v3099 = vsel %vm1572, %v3074, 0
      %v3102 = vsel %vm1589, %v3076, 0
      %3104 = vmatprep.subr.mxu0 0.0
      %3105 = vmatpush1.msra.mxu0 %v3102
      %3106 = vmatprep.subr.mxu0 0.0
      %3107 = vmatpush1.msra.mxu0 0.0
      %3108 = vmatprep.subr.mxu0 0.0
      %3109 = vmatpush1.msra.mxu0 0.0
      %3110 = vmatprep.subr.mxu0 0.0
      %3111 = vmatpush1.msra.mxu0 0.0
      %3112 = vmatprep.subr.mxu0 0.0
      %3113 = vmatpush1.msra.mxu0 0.0
      %3114 = vmatprep.subr.mxu0 0.0
      %3115 = vmatpush1.msra.mxu0 0.0
      %3116 = vmatprep.subr.mxu0 0.0
      %3117 = vmatpush1.msra.mxu0 0.0
      %3118 = vmatprep.subr.mxu0 0.0
      %3119 = vmatpush1.msra.mxu0 0.0
      %3120 = vmatprep.subr.mxu0 0.0
      %3121 = vmatpush1.msra.mxu0 0.0
      %3122 = vmatprep.subr.mxu0 0.0
      %3123 = vmatpush1.msra.mxu0 0.0
      %3124 = vmatprep.subr.mxu0 0.0
      %3125 = vmatpush1.msra.mxu0 0.0
      %3126 = vmatprep.subr.mxu0 0.0
      %3127 = vmatpush1.msra.mxu0 0.0
      %3128 = vmatprep.subr.mxu0 0.0
      %3129 = vmatpush1.msra.mxu0 0.0
      %3130 = vmatprep.subr.mxu0 0.0
      %3131 = vmatpush1.msra.mxu0 0.0
      %3132 = vmatprep.subr.mxu0 0.0
      %3133 = vmatpush1.msra.mxu0 0.0
      %3134 = vmatprep.subr.mxu0 0.0
      %3135 = vmatpush1.msra.mxu0 0.0
      %3136 = vmatprep.subr.mxu0 0.0
      %3137 = vmatpush1.msra.mxu0 0.0
      %3138 = vmatprep.subr.mxu0 0.0
      %3139 = vmatpush1.msra.mxu0 0.0
      %3140 = vmatprep.subr.mxu0 0.0
      %3141 = vmatpush1.msra.mxu0 0.0
      %3142 = vmatprep.subr.mxu0 0.0
      %3143 = vmatpush1.msra.mxu0 0.0
      %3144 = vmatprep.subr.mxu0 0.0
      %3145 = vmatpush1.msra.mxu0 0.0
      %3146 = vmatprep.subr.mxu0 0.0
      %3147 = vmatpush1.msra.mxu0 0.0
      %3148 = vmatprep.subr.mxu0 0.0
      %3149 = vmatpush1.msra.mxu0 0.0
      %3150 = vmatprep.subr.mxu0 0.0
      %3151 = vmatpush1.msra.mxu0 0.0
      %3152 = vmatprep.subr.mxu0 0.0
      %3153 = vmatpush1.msra.mxu0 0.0
      %3154 = vmatprep.subr.mxu0 0.0
      %3155 = vmatpush1.msra.mxu0 0.0
      %3156 = vmatprep.subr.mxu0 0.0
      %3157 = vmatpush1.msra.mxu0 0.0
      %3158 = vmatprep.subr.mxu0 0.0
      %3159 = vmatpush1.msra.mxu0 0.0
      %3160 = vmatprep.subr.mxu0 0.0
      %3161 = vmatpush1.msra.mxu0 0.0
      %3162 = vmatprep.subr.mxu0 0.0
      %3163 = vmatpush1.msra.mxu0 0.0
      %3164 = vmatprep.subr.mxu0 0.0
      %3165 = vmatpush1.msra.mxu0 0.0
      %3166 = vmatprep.subr.mxu0 0.0
      %3167 = vmatpush1.msra.mxu0 0.0
      %3168 = vmatprep.mubr.f32.mxu0 0.0
      %3169 = vmatmul.mubr.f32.gmra.mrb[0].mxu0 %v3078
      %v3170 = vpop.f32.mrb[0].mxu0
      %v3171 = vadd.f32 0.0, %v3170
      %v3172 = vpop.f32.mrb[0].mxu0
      %3173 = vmatprep.mubr.f32.mxu0 0.0
      %3174 = vmatmul.mubr.f32.gmra.mrb[0].mxu0 %v3081
      %v3175 = vpop.f32.mrb[0].mxu0
      %v3176 = vadd.f32 0.0, %v3175
      %v3177 = vpop.f32.mrb[0].mxu0
      %3178 = vmatprep.mubr.f32.mxu0 0.0
      %3179 = vmatmul.mubr.f32.gmra.mrb[0].mxu0 %v3084
      %v3180 = vpop.f32.mrb[0].mxu0
      %v3181 = vadd.f32 0.0, %v3180
      %v3182 = vpop.f32.mrb[0].mxu0
      %3183 = vmatprep.mubr.f32.mxu0 0.0
      %3184 = vmatmul.mubr.f32.gmra.mrb[0].mxu0 %v3087
      %v3185 = vpop.f32.mrb[0].mxu0
      %v3186 = vadd.f32 0.0, %v3185
      %v3187 = vpop.f32.mrb[0].mxu0
      %3188 = vmatprep.mubr.f32.mxu0 0.0
      %3189 = vmatmul.mubr.f32.gmra.mrb[0].mxu0 %v3090
      %v3190 = vpop.f32.mrb[0].mxu0
      %v3191 = vadd.f32 0.0, %v3190
      %v3192 = vpop.f32.mrb[0].mxu0
      %3193 = vmatprep.mubr.f32.mxu0 0.0
      %3194 = vmatmul.mubr.f32.gmra.mrb[0].mxu0 %v3093
      %v3195 = vpop.f32.mrb[0].mxu0
      %v3196 = vadd.f32 0.0, %v3195
      %v3197 = vpop.f32.mrb[0].mxu0
      %3198 = vmatprep.mubr.f32.mxu0 0.0
      %3199 = vmatmul.mubr.f32.gmra.mrb[0].mxu0 %v3096
      %v3200 = vpop.f32.mrb[0].mxu0
      %v3201 = vadd.f32 0.0, %v3200
      %v3202 = vpop.f32.mrb[0].mxu0
      %3203 = vmatprep.mubr.f32.mxu0 0.0
      %3204 = vmatmul.mubr.f32.gmra.mrb[0].mxu0 %v3099
      %v3205 = vpop.f32.mrb[0].mxu0
      %v3206 = vadd.f32 0.0, %v3205
      %v3207 = vpop.f32.mrb[0].mxu0
      %3208 = vdwg.mxu0
      %v3209 = vadd.f32 %v3059, %v3171
      %v3210 = vadd.f32 %v3060, %v3176
      %v3211 = vadd.f32 %v3061, %v3181
      %v3212 = vadd.f32 %v3062, %v3186
      %v3213 = vadd.f32 %v3063, %v3191
      %v3214 = vadd.f32 %v3064, %v3196
      %v3215 = vadd.f32 %v3065, %v3201
      %v3216 = vadd.f32 %v3066, %v3206
      %v3217 = vld [vmem:[%s2916 + $0x2] sm:$0xff]
      %v3218 = vld [vmem:[%s2916 + $0x12] sm:$0xff]
      %v3219 = vld [vmem:[%s2916 + $0x22] sm:$0xff]
      %v3220 = vld [vmem:[%s2916 + $0x32] sm:$0xff]
      %v3221 = vld [vmem:[%s2916 + $0x42] sm:$0xff]
      %v3222 = vld [vmem:[%s2916 + $0x52] sm:$0xff]
      %v3223 = vld [vmem:[%s2916 + $0x62] sm:$0xff]
      %v3224 = vld [vmem:[%s2916 + $0x72] sm:$0xff]
      %s3225 = scalar_lea.vmem %s7, 32
      %v3226 = vld [vmem:[%s3225] sm:$0xf]
      %v3228 = vsel %vm1572, %v3217, 0
      %v3231 = vsel %vm1572, %v3218, 0
      %v3234 = vsel %vm1572, %v3219, 0
      %v3237 = vsel %vm1572, %v3220, 0
      %v3240 = vsel %vm1572, %v3221, 0
      %v3243 = vsel %vm1572, %v3222, 0
      %v3246 = vsel %vm1572, %v3223, 0
      %v3249 = vsel %vm1572, %v3224, 0
      %v3252 = vsel %vm1589, %v3226, 0
      %3254 = vmatprep.subr.mxu0 0.0
      %3255 = vmatpush1.msra.mxu0 %v3252
      %3256 = vmatprep.subr.mxu0 0.0
      %3257 = vmatpush1.msra.mxu0 0.0
      %3258 = vmatprep.subr.mxu0 0.0
      %3259 = vmatpush1.msra.mxu0 0.0
      %3260 = vmatprep.subr.mxu0 0.0
      %3261 = vmatpush1.msra.mxu0 0.0
      %3262 = vmatprep.subr.mxu0 0.0
      %3263 = vmatpush1.msra.mxu0 0.0
      %3264 = vmatprep.subr.mxu0 0.0
      %3265 = vmatpush1.msra.mxu0 0.0
      %3266 = vmatprep.subr.mxu0 0.0
      %3267 = vmatpush1.msra.mxu0 0.0
      %3268 = vmatprep.subr.mxu0 0.0
      %3269 = vmatpush1.msra.mxu0 0.0
      %3270 = vmatprep.subr.mxu0 0.0
      %3271 = vmatpush1.msra.mxu0 0.0
      %3272 = vmatprep.subr.mxu0 0.0
      %3273 = vmatpush1.msra.mxu0 0.0
      %3274 = vmatprep.subr.mxu0 0.0
      %3275 = vmatpush1.msra.mxu0 0.0
      %3276 = vmatprep.subr.mxu0 0.0
      %3277 = vmatpush1.msra.mxu0 0.0
      %3278 = vmatprep.subr.mxu0 0.0
      %3279 = vmatpush1.msra.mxu0 0.0
      %3280 = vmatprep.subr.mxu0 0.0
      %3281 = vmatpush1.msra.mxu0 0.0
      %3282 = vmatprep.subr.mxu0 0.0
      %3283 = vmatpush1.msra.mxu0 0.0
      %3284 = vmatprep.subr.mxu0 0.0
      %3285 = vmatpush1.msra.mxu0 0.0
      %3286 = vmatprep.subr.mxu0 0.0
      %3287 = vmatpush1.msra.mxu0 0.0
      %3288 = vmatprep.subr.mxu0 0.0
      %3289 = vmatpush1.msra.mxu0 0.0
      %3290 = vmatprep.subr.mxu0 0.0
      %3291 = vmatpush1.msra.mxu0 0.0
      %3292 = vmatprep.subr.mxu0 0.0
      %3293 = vmatpush1.msra.mxu0 0.0
      %3294 = vmatprep.subr.mxu0 0.0
      %3295 = vmatpush1.msra.mxu0 0.0
      %3296 = vmatprep.subr.mxu0 0.0
      %3297 = vmatpush1.msra.mxu0 0.0
      %3298 = vmatprep.subr.mxu0 0.0
      %3299 = vmatpush1.msra.mxu0 0.0
      %3300 = vmatprep.subr.mxu0 0.0
      %3301 = vmatpush1.msra.mxu0 0.0
      %3302 = vmatprep.subr.mxu0 0.0
      %3303 = vmatpush1.msra.mxu0 0.0
      %3304 = vmatprep.subr.mxu0 0.0
      %3305 = vmatpush1.msra.mxu0 0.0
      %3306 = vmatprep.subr.mxu0 0.0
      %3307 = vmatpush1.msra.mxu0 0.0
      %3308 = vmatprep.subr.mxu0 0.0
      %3309 = vmatpush1.msra.mxu0 0.0
      %3310 = vmatprep.subr.mxu0 0.0
      %3311 = vmatpush1.msra.mxu0 0.0
      %3312 = vmatprep.subr.mxu0 0.0
      %3313 = vmatpush1.msra.mxu0 0.0
      %3314 = vmatprep.subr.mxu0 0.0
      %3315 = vmatpush1.msra.mxu0 0.0
      %3316 = vmatprep.subr.mxu0 0.0
      %3317 = vmatpush1.msra.mxu0 0.0
      %3318 = vmatprep.mubr.f32.mxu0 0.0
      %3319 = vmatmul.mubr.f32.gmra.mrb[0].mxu0 %v3228
      %v3320 = vpop.f32.mrb[0].mxu0
      %v3321 = vadd.f32 0.0, %v3320
      %v3322 = vpop.f32.mrb[0].mxu0
      %3323 = vmatprep.mubr.f32.mxu0 0.0
      %3324 = vmatmul.mubr.f32.gmra.mrb[0].mxu0 %v3231
      %v3325 = vpop.f32.mrb[0].mxu0
      %v3326 = vadd.f32 0.0, %v3325
      %v3327 = vpop.f32.mrb[0].mxu0
      %3328 = vmatprep.mubr.f32.mxu0 0.0
      %3329 = vmatmul.mubr.f32.gmra.mrb[0].mxu0 %v3234
      %v3330 = vpop.f32.mrb[0].mxu0
      %v3331 = vadd.f32 0.0, %v3330
      %v3332 = vpop.f32.mrb[0].mxu0
      %3333 = vmatprep.mubr.f32.mxu0 0.0
      %3334 = vmatmul.mubr.f32.gmra.mrb[0].mxu0 %v3237
      %v3335 = vpop.f32.mrb[0].mxu0
      %v3336 = vadd.f32 0.0, %v3335
      %v3337 = vpop.f32.mrb[0].mxu0
      %3338 = vmatprep.mubr.f32.mxu0 0.0
      %3339 = vmatmul.mubr.f32.gmra.mrb[0].mxu0 %v3240
      %v3340 = vpop.f32.mrb[0].mxu0
      %v3341 = vadd.f32 0.0, %v3340
      %v3342 = vpop.f32.mrb[0].mxu0
      %3343 = vmatprep.mubr.f32.mxu0 0.0
      %3344 = vmatmul.mubr.f32.gmra.mrb[0].mxu0 %v3243
      %v3345 = vpop.f32.mrb[0].mxu0
      %v3346 = vadd.f32 0.0, %v3345
      %v3347 = vpop.f32.mrb[0].mxu0
      %3348 = vmatprep.mubr.f32.mxu0 0.0
      %3349 = vmatmul.mubr.f32.gmra.mrb[0].mxu0 %v3246
      %v3350 = vpop.f32.mrb[0].mxu0
      %v3351 = vadd.f32 0.0, %v3350
      %v3352 = vpop.f32.mrb[0].mxu0
      %3353 = vmatprep.mubr.f32.mxu0 0.0
      %3354 = vmatmul.mubr.f32.gmra.mrb[0].mxu0 %v3249
      %v3355 = vpop.f32.mrb[0].mxu0
      %v3356 = vadd.f32 0.0, %v3355
      %v3357 = vpop.f32.mrb[0].mxu0
      %3358 = vdwg.mxu0
      %v3359 = vadd.f32 %v3209, %v3321
      %v3360 = vadd.f32 %v3210, %v3326
      %v3361 = vadd.f32 %v3211, %v3331
      %v3362 = vadd.f32 %v3212, %v3336
      %v3363 = vadd.f32 %v3213, %v3341
      %v3364 = vadd.f32 %v3214, %v3346
      %v3365 = vadd.f32 %v3215, %v3351
      %v3366 = vadd.f32 %v3216, %v3356
      %v3367 = vld [vmem:[%s8] sm:$0x1]
      %v3369 = vlaneseq
      %v3370 = vshrl.u32 %v3369, 7
      %v3371 = vsub.s32 0, %v3370
      %v3372 = vrot.slane %v3367, %v3371
      %v3374 = vmul.f32 %v3359, %v3372
      %v3375 = vmul.f32 %v3360, %v3372
      %v3376 = vmul.f32 %v3361, %v3372
      %v3377 = vmul.f32 %v3362, %v3372
      %v3378 = vmul.f32 %v3363, %v3372
      %v3379 = vmul.f32 %v3364, %v3372
      %v3380 = vmul.f32 %v3365, %v3372
      %v3381 = vmul.f32 %v3366, %v3372
      %v3382 = vld [vmem:[%s9] sm:$0x1]
      %v3384 = vlaneseq
      %v3385 = vshrl.u32 %v3384, 7
      %v3386 = vsub.s32 0, %v3385
      %v3387 = vrot.slane %v3382, %v3386
      %v3389 = vadd.f32 %v3374, %v3387
      %v3390 = vadd.f32 %v3375, %v3387
      %v3391 = vadd.f32 %v3376, %v3387
      %v3392 = vadd.f32 %v3377, %v3387
      %v3393 = vadd.f32 %v3378, %v3387
      %v3394 = vadd.f32 %v3379, %v3387
      %v3395 = vadd.f32 %v3380, %v3387
      %v3396 = vadd.f32 %v3381, %v3387
      %v3397 = vsub.f32 0.0, %v3389
      %v3398 = vsub.f32 0.0, %v3390
      %v3399 = vsub.f32 0.0, %v3391
      %v3400 = vsub.f32 0.0, %v3392
      %v3401 = vsub.f32 0.0, %v3393
      %v3402 = vsub.f32 0.0, %v3394
      %v3403 = vsub.f32 0.0, %v3395
      %v3404 = vsub.f32 0.0, %v3396
      %v3405 = vmul.f32 %v3397, 1.442695
      %v3406 = vpow.pop %v3405
      %v3407 = vmul.f32 %v3398, 1.442695
      %v3408 = vpow.pop %v3407
      %v3409 = vmul.f32 %v3399, 1.442695
      %v3410 = vpow.pop %v3409
      %v3411 = vmul.f32 %v3400, 1.442695
      %v3412 = vpow.pop %v3411
      %v3413 = vmul.f32 %v3401, 1.442695
      %v3414 = vpow.pop %v3413
      %v3415 = vmul.f32 %v3402, 1.442695
      %v3416 = vpow.pop %v3415
      %v3417 = vmul.f32 %v3403, 1.442695
      %v3418 = vpow.pop %v3417
      %v3419 = vmul.f32 %v3404, 1.442695
      %v3420 = vpow.pop %v3419
      %v3421 = vadd.f32 %v3406, 1.0
      %v3422 = vadd.f32 %v3408, 1.0
      %v3423 = vadd.f32 %v3410, 1.0
      %v3424 = vadd.f32 %v3412, 1.0
      %v3425 = vadd.f32 %v3414, 1.0
      %v3426 = vadd.f32 %v3416, 1.0
      %v3427 = vadd.f32 %v3418, 1.0
      %v3428 = vadd.f32 %v3420, 1.0
      %v3429 = vrcp.pop %v3421
      %v3430 = vmul.f32 1.0, %v3429
      %v3431 = vrcp.pop %v3422
      %v3432 = vmul.f32 1.0, %v3431
      %v3433 = vrcp.pop %v3423
      %v3434 = vmul.f32 1.0, %v3433
      %v3435 = vrcp.pop %v3424
      %v3436 = vmul.f32 1.0, %v3435
      %v3437 = vrcp.pop %v3425
      %v3438 = vmul.f32 1.0, %v3437
      %v3439 = vrcp.pop %v3426
      %v3440 = vmul.f32 1.0, %v3439
      %v3441 = vrcp.pop %v3427
      %v3442 = vmul.f32 1.0, %v3441
      %v3443 = vrcp.pop %v3428
      %v3444 = vmul.f32 1.0, %v3443
      %v3445 = vmul.f32 %v3389, %v3430
      %v3446 = vmul.f32 %v3390, %v3432
      %v3447 = vmul.f32 %v3391, %v3434
      %v3448 = vmul.f32 %v3392, %v3436
      %v3449 = vmul.f32 %v3393, %v3438
      %v3450 = vmul.f32 %v3394, %v3440
      %v3451 = vmul.f32 %v3395, %v3442
      %v3452 = vmul.f32 %v3396, %v3444
      %v3453 = vadd.f32 %v3445, %v1776
      %v3454 = vadd.f32 %v3446, %v1777
      %v3455 = vadd.f32 %v3447, %v1778
      %v3456 = vadd.f32 %v3448, %v1779
      %v3457 = vadd.f32 %v3449, %v1780
      %v3458 = vadd.f32 %v3450, %v1781
      %v3459 = vadd.f32 %v3451, %v1782
      %v3460 = vadd.f32 %v3452, %v1783
      %v3461 = vld [vmem:[%s10] sm:$0xf]
      %v3462 = vld [vmem:[%s11] sm:$0xf]
      %3463 = vrot.lane.b32.xlu0 %v1776, 124
      %v3464 = vpop.permute.xlu0 %3463
      %3465 = vrot.lane.b32.xlu0 %v1777, 124
      %v3466 = vpop.permute.xlu0 %3465
      %3467 = vrot.lane.b32.xlu0 %v1778, 124
      %v3468 = vpop.permute.xlu0 %3467
      %3469 = vrot.lane.b32.xlu0 %v1779, 124
      %v3470 = vpop.permute.xlu0 %3469
      %3471 = vrot.lane.b32.xlu0 %v1780, 124
      %v3472 = vpop.permute.xlu0 %3471
      %3473 = vrot.lane.b32.xlu0 %v1781, 124
      %v3474 = vpop.permute.xlu0 %3473
      %3475 = vrot.lane.b32.xlu0 %v1782, 124
      %v3476 = vpop.permute.xlu0 %3475
      %3477 = vrot.lane.b32.xlu0 %v1783, 124
      %v3478 = vpop.permute.xlu0 %3477
      %v3479 = vsel %vm1572, %v3464, 0
      %v3481 = vsel %vm1572, %v3466, 0
      %v3483 = vsel %vm1572, %v3468, 0
      %v3485 = vsel %vm1572, %v3470, 0
      %v3487 = vsel %vm1572, %v3472, 0
      %v3489 = vsel %vm1572, %v3474, 0
      %v3491 = vsel %vm1572, %v3476, 0
      %v3493 = vsel %vm1572, %v3478, 0
      %v3496 = vsel %vm1589, %v3462, 0
      %3498 = vmatprep.subr.mxu0 0.0
      %3499 = vmatpush1.msra.mxu0 %v3496
      %3500 = vmatprep.subr.mxu0 0.0
      %3501 = vmatpush1.msra.mxu0 0.0
      %3502 = vmatprep.subr.mxu0 0.0
      %3503 = vmatpush1.msra.mxu0 0.0
      %3504 = vmatprep.subr.mxu0 0.0
      %3505 = vmatpush1.msra.mxu0 0.0
      %3506 = vmatprep.subr.mxu0 0.0
      %3507 = vmatpush1.msra.mxu0 0.0
      %3508 = vmatprep.subr.mxu0 0.0
      %3509 = vmatpush1.msra.mxu0 0.0
      %3510 = vmatprep.subr.mxu0 0.0
      %3511 = vmatpush1.msra.mxu0 0.0
      %3512 = vmatprep.subr.mxu0 0.0
      %3513 = vmatpush1.msra.mxu0 0.0
      %3514 = vmatprep.subr.mxu0 0.0
      %3515 = vmatpush1.msra.mxu0 0.0
      %3516 = vmatprep.subr.mxu0 0.0
      %3517 = vmatpush1.msra.mxu0 0.0
      %3518 = vmatprep.subr.mxu0 0.0
      %3519 = vmatpush1.msra.mxu0 0.0
      %3520 = vmatprep.subr.mxu0 0.0
      %3521 = vmatpush1.msra.mxu0 0.0
      %3522 = vmatprep.subr.mxu0 0.0
      %3523 = vmatpush1.msra.mxu0 0.0
      %3524 = vmatprep.subr.mxu0 0.0
      %3525 = vmatpush1.msra.mxu0 0.0
      %3526 = vmatprep.subr.mxu0 0.0
      %3527 = vmatpush1.msra.mxu0 0.0
      %3528 = vmatprep.subr.mxu0 0.0
      %3529 = vmatpush1.msra.mxu0 0.0
      %3530 = vmatprep.subr.mxu0 0.0
      %3531 = vmatpush1.msra.mxu0 0.0
      %3532 = vmatprep.subr.mxu0 0.0
      %3533 = vmatpush1.msra.mxu0 0.0
      %3534 = vmatprep.subr.mxu0 0.0
      %3535 = vmatpush1.msra.mxu0 0.0
      %3536 = vmatprep.subr.mxu0 0.0
      %3537 = vmatpush1.msra.mxu0 0.0
      %3538 = vmatprep.subr.mxu0 0.0
      %3539 = vmatpush1.msra.mxu0 0.0
      %3540 = vmatprep.subr.mxu0 0.0
      %3541 = vmatpush1.msra.mxu0 0.0
      %3542 = vmatprep.subr.mxu0 0.0
      %3543 = vmatpush1.msra.mxu0 0.0
      %3544 = vmatprep.subr.mxu0 0.0
      %3545 = vmatpush1.msra.mxu0 0.0
      %3546 = vmatprep.subr.mxu0 0.0
      %3547 = vmatpush1.msra.mxu0 0.0
      %3548 = vmatprep.subr.mxu0 0.0
      %3549 = vmatpush1.msra.mxu0 0.0
      %3550 = vmatprep.subr.mxu0 0.0
      %3551 = vmatpush1.msra.mxu0 0.0
      %3552 = vmatprep.subr.mxu0 0.0
      %3553 = vmatpush1.msra.mxu0 0.0
      %3554 = vmatprep.subr.mxu0 0.0
      %3555 = vmatpush1.msra.mxu0 0.0
      %3556 = vmatprep.subr.mxu0 0.0
      %3557 = vmatpush1.msra.mxu0 0.0
      %3558 = vmatprep.subr.mxu0 0.0
      %3559 = vmatpush1.msra.mxu0 0.0
      %3560 = vmatprep.subr.mxu0 0.0
      %3561 = vmatpush1.msra.mxu0 0.0
      %3562 = vmatprep.mubr.f32.mxu0 0.0
      %3563 = vmatmul.mubr.f32.gmra.mrb[0].mxu0 %v3479
      %v3564 = vpop.f32.mrb[0].mxu0
      %v3565 = vadd.f32 0.0, %v3564
      %v3566 = vpop.f32.mrb[0].mxu0
      %3567 = vmatprep.mubr.f32.mxu0 0.0
      %3568 = vmatmul.mubr.f32.gmra.mrb[0].mxu0 %v3481
      %v3569 = vpop.f32.mrb[0].mxu0
      %v3570 = vadd.f32 0.0, %v3569
      %v3571 = vpop.f32.mrb[0].mxu0
      %3572 = vmatprep.mubr.f32.mxu0 0.0
      %3573 = vmatmul.mubr.f32.gmra.mrb[0].mxu0 %v3483
      %v3574 = vpop.f32.mrb[0].mxu0
      %v3575 = vadd.f32 0.0, %v3574
      %v3576 = vpop.f32.mrb[0].mxu0
      %3577 = vmatprep.mubr.f32.mxu0 0.0
      %3578 = vmatmul.mubr.f32.gmra.mrb[0].mxu0 %v3485
      %v3579 = vpop.f32.mrb[0].mxu0
      %v3580 = vadd.f32 0.0, %v3579
      %v3581 = vpop.f32.mrb[0].mxu0
      %3582 = vmatprep.mubr.f32.mxu0 0.0
      %3583 = vmatmul.mubr.f32.gmra.mrb[0].mxu0 %v3487
      %v3584 = vpop.f32.mrb[0].mxu0
      %v3585 = vadd.f32 0.0, %v3584
      %v3586 = vpop.f32.mrb[0].mxu0
      %3587 = vmatprep.mubr.f32.mxu0 0.0
      %3588 = vmatmul.mubr.f32.gmra.mrb[0].mxu0 %v3489
      %v3589 = vpop.f32.mrb[0].mxu0
      %v3590 = vadd.f32 0.0, %v3589
      %v3591 = vpop.f32.mrb[0].mxu0
      %3592 = vmatprep.mubr.f32.mxu0 0.0
      %3593 = vmatmul.mubr.f32.gmra.mrb[0].mxu0 %v3491
      %v3594 = vpop.f32.mrb[0].mxu0
      %v3595 = vadd.f32 0.0, %v3594
      %v3596 = vpop.f32.mrb[0].mxu0
      %3597 = vmatprep.mubr.f32.mxu0 0.0
      %3598 = vmatmul.mubr.f32.gmra.mrb[0].mxu0 %v3493
      %v3599 = vpop.f32.mrb[0].mxu0
      %v3600 = vadd.f32 0.0, %v3599
      %v3601 = vpop.f32.mrb[0].mxu0
      %3602 = vdwg.mxu0
      %v3604 = vsel %vm1572, %v3453, 0
      %v3607 = vsel %vm1572, %v3454, 0
      %v3610 = vsel %vm1572, %v3455, 0
      %v3613 = vsel %vm1572, %v3456, 0
      %v3616 = vsel %vm1572, %v3457, 0
      %v3619 = vsel %vm1572, %v3458, 0
      %v3622 = vsel %vm1572, %v3459, 0
      %v3625 = vsel %vm1572, %v3460, 0
      %v3628 = vsel %vm1589, %v3461, 0
      %3630 = vmatprep.subr.mxu0 0.0
      %3631 = vmatpush1.msra.mxu0 %v3628
      %3632 = vmatprep.subr.mxu0 0.0
      %3633 = vmatpush1.msra.mxu0 0.0
      %3634 = vmatprep.subr.mxu0 0.0
      %3635 = vmatpush1.msra.mxu0 0.0
      %3636 = vmatprep.subr.mxu0 0.0
      %3637 = vmatpush1.msra.mxu0 0.0
      %3638 = vmatprep.subr.mxu0 0.0
      %3639 = vmatpush1.msra.mxu0 0.0
      %3640 = vmatprep.subr.mxu0 0.0
      %3641 = vmatpush1.msra.mxu0 0.0
      %3642 = vmatprep.subr.mxu0 0.0
      %3643 = vmatpush1.msra.mxu0 0.0
      %3644 = vmatprep.subr.mxu0 0.0
      %3645 = vmatpush1.msra.mxu0 0.0
      %3646 = vmatprep.subr.mxu0 0.0
      %3647 = vmatpush1.msra.mxu0 0.0
      %3648 = vmatprep.subr.mxu0 0.0
      %3649 = vmatpush1.msra.mxu0 0.0
      %3650 = vmatprep.subr.mxu0 0.0
      %3651 = vmatpush1.msra.mxu0 0.0
      %3652 = vmatprep.subr.mxu0 0.0
      %3653 = vmatpush1.msra.mxu0 0.0
      %3654 = vmatprep.subr.mxu0 0.0
      %3655 = vmatpush1.msra.mxu0 0.0
      %3656 = vmatprep.subr.mxu0 0.0
      %3657 = vmatpush1.msra.mxu0 0.0
      %3658 = vmatprep.subr.mxu0 0.0
      %3659 = vmatpush1.msra.mxu0 0.0
      %3660 = vmatprep.subr.mxu0 0.0
      %3661 = vmatpush1.msra.mxu0 0.0
      %3662 = vmatprep.subr.mxu0 0.0
      %3663 = vmatpush1.msra.mxu0 0.0
      %3664 = vmatprep.subr.mxu0 0.0
      %3665 = vmatpush1.msra.mxu0 0.0
      %3666 = vmatprep.subr.mxu0 0.0
      %3667 = vmatpush1.msra.mxu0 0.0
      %3668 = vmatprep.subr.mxu0 0.0
      %3669 = vmatpush1.msra.mxu0 0.0
      %3670 = vmatprep.subr.mxu0 0.0
      %3671 = vmatpush1.msra.mxu0 0.0
      %3672 = vmatprep.subr.mxu0 0.0
      %3673 = vmatpush1.msra.mxu0 0.0
      %3674 = vmatprep.subr.mxu0 0.0
      %3675 = vmatpush1.msra.mxu0 0.0
      %3676 = vmatprep.subr.mxu0 0.0
      %3677 = vmatpush1.msra.mxu0 0.0
      %3678 = vmatprep.subr.mxu0 0.0
      %3679 = vmatpush1.msra.mxu0 0.0
      %3680 = vmatprep.subr.mxu0 0.0
      %3681 = vmatpush1.msra.mxu0 0.0
      %3682 = vmatprep.subr.mxu0 0.0
      %3683 = vmatpush1.msra.mxu0 0.0
      %3684 = vmatprep.subr.mxu0 0.0
      %3685 = vmatpush1.msra.mxu0 0.0
      %3686 = vmatprep.subr.mxu0 0.0
      %3687 = vmatpush1.msra.mxu0 0.0
      %3688 = vmatprep.subr.mxu0 0.0
      %3689 = vmatpush1.msra.mxu0 0.0
      %3690 = vmatprep.subr.mxu0 0.0
      %3691 = vmatpush1.msra.mxu0 0.0
      %3692 = vmatprep.subr.mxu0 0.0
      %3693 = vmatpush1.msra.mxu0 0.0
      %3694 = vmatprep.mubr.f32.mxu0 0.0
      %3695 = vmatmul.mubr.f32.gmra.mrb[0].mxu0 %v3604
      %v3696 = vpop.f32.mrb[0].mxu0
      %v3697 = vadd.f32 %v3565, %v3696
      %v3698 = vpop.f32.mrb[0].mxu0
      %3699 = vmatprep.mubr.f32.mxu0 0.0
      %3700 = vmatmul.mubr.f32.gmra.mrb[0].mxu0 %v3607
      %v3701 = vpop.f32.mrb[0].mxu0
      %v3702 = vadd.f32 %v3570, %v3701
      %v3703 = vpop.f32.mrb[0].mxu0
      %3704 = vmatprep.mubr.f32.mxu0 0.0
      %3705 = vmatmul.mubr.f32.gmra.mrb[0].mxu0 %v3610
      %v3706 = vpop.f32.mrb[0].mxu0
      %v3707 = vadd.f32 %v3575, %v3706
      %v3708 = vpop.f32.mrb[0].mxu0
      %3709 = vmatprep.mubr.f32.mxu0 0.0
      %3710 = vmatmul.mubr.f32.gmra.mrb[0].mxu0 %v3613
      %v3711 = vpop.f32.mrb[0].mxu0
      %v3712 = vadd.f32 %v3580, %v3711
      %v3713 = vpop.f32.mrb[0].mxu0
      %3714 = vmatprep.mubr.f32.mxu0 0.0
      %3715 = vmatmul.mubr.f32.gmra.mrb[0].mxu0 %v3616
      %v3716 = vpop.f32.mrb[0].mxu0
      %v3717 = vadd.f32 %v3585, %v3716
      %v3718 = vpop.f32.mrb[0].mxu0
      %3719 = vmatprep.mubr.f32.mxu0 0.0
      %3720 = vmatmul.mubr.f32.gmra.mrb[0].mxu0 %v3619
      %v3721 = vpop.f32.mrb[0].mxu0
      %v3722 = vadd.f32 %v3590, %v3721
      %v3723 = vpop.f32.mrb[0].mxu0
      %3724 = vmatprep.mubr.f32.mxu0 0.0
      %3725 = vmatmul.mubr.f32.gmra.mrb[0].mxu0 %v3622
      %v3726 = vpop.f32.mrb[0].mxu0
      %v3727 = vadd.f32 %v3595, %v3726
      %v3728 = vpop.f32.mrb[0].mxu0
      %3729 = vmatprep.mubr.f32.mxu0 0.0
      %3730 = vmatmul.mubr.f32.gmra.mrb[0].mxu0 %v3625
      %v3731 = vpop.f32.mrb[0].mxu0
      %v3732 = vadd.f32 %v3600, %v3731
      %v3733 = vpop.f32.mrb[0].mxu0
      %3734 = vdwg.mxu0
      %v3735 = vld [vmem:[%s12] sm:$0x1]
      %v3737 = vlaneseq
      %v3738 = vshrl.u32 %v3737, 7
      %v3739 = vsub.s32 0, %v3738
      %v3740 = vrot.slane %v3735, %v3739
      %v3742 = vmul.f32 %v3697, %v3740
      %v3743 = vmul.f32 %v3702, %v3740
      %v3744 = vmul.f32 %v3707, %v3740
      %v3745 = vmul.f32 %v3712, %v3740
      %v3746 = vmul.f32 %v3717, %v3740
      %v3747 = vmul.f32 %v3722, %v3740
      %v3748 = vmul.f32 %v3727, %v3740
      %v3749 = vmul.f32 %v3732, %v3740
      %v3750 = vld [vmem:[%s13] sm:$0x1]
      %v3752 = vlaneseq
      %v3753 = vshrl.u32 %v3752, 7
      %v3754 = vsub.s32 0, %v3753
      %v3755 = vrot.slane %v3750, %v3754
      %v3757 = vadd.f32 %v3742, %v3755
      %v3758 = vadd.f32 %v3743, %v3755
      %v3759 = vadd.f32 %v3744, %v3755
      %v3760 = vadd.f32 %v3745, %v3755
      %v3761 = vadd.f32 %v3746, %v3755
      %v3762 = vadd.f32 %v3747, %v3755
      %v3763 = vadd.f32 %v3748, %v3755
      %v3764 = vadd.f32 %v3749, %v3755
      %v3765 = vsub.f32 0.0, %v3757
      %v3766 = vsub.f32 0.0, %v3758
      %v3767 = vsub.f32 0.0, %v3759
      %v3768 = vsub.f32 0.0, %v3760
      %v3769 = vsub.f32 0.0, %v3761
      %v3770 = vsub.f32 0.0, %v3762
      %v3771 = vsub.f32 0.0, %v3763
      %v3772 = vsub.f32 0.0, %v3764
      %v3773 = vmul.f32 %v3765, 1.442695
      %v3774 = vpow.pop %v3773
      %v3775 = vmul.f32 %v3766, 1.442695
      %v3776 = vpow.pop %v3775
      %v3777 = vmul.f32 %v3767, 1.442695
      %v3778 = vpow.pop %v3777
      %v3779 = vmul.f32 %v3768, 1.442695
      %v3780 = vpow.pop %v3779
      %v3781 = vmul.f32 %v3769, 1.442695
      %v3782 = vpow.pop %v3781
      %v3783 = vmul.f32 %v3770, 1.442695
      %v3784 = vpow.pop %v3783
      %v3785 = vmul.f32 %v3771, 1.442695
      %v3786 = vpow.pop %v3785
      %v3787 = vmul.f32 %v3772, 1.442695
      %v3788 = vpow.pop %v3787
      %v3789 = vadd.f32 %v3774, 1.0
      %v3790 = vadd.f32 %v3776, 1.0
      %v3791 = vadd.f32 %v3778, 1.0
      %v3792 = vadd.f32 %v3780, 1.0
      %v3793 = vadd.f32 %v3782, 1.0
      %v3794 = vadd.f32 %v3784, 1.0
      %v3795 = vadd.f32 %v3786, 1.0
      %v3796 = vadd.f32 %v3788, 1.0
      %v3797 = vrcp.pop %v3789
      %v3798 = vmul.f32 1.0, %v3797
      %v3799 = vrcp.pop %v3790
      %v3800 = vmul.f32 1.0, %v3799
      %v3801 = vrcp.pop %v3791
      %v3802 = vmul.f32 1.0, %v3801
      %v3803 = vrcp.pop %v3792
      %v3804 = vmul.f32 1.0, %v3803
      %v3805 = vrcp.pop %v3793
      %v3806 = vmul.f32 1.0, %v3805
      %v3807 = vrcp.pop %v3794
      %v3808 = vmul.f32 1.0, %v3807
      %v3809 = vrcp.pop %v3795
      %v3810 = vmul.f32 1.0, %v3809
      %v3811 = vrcp.pop %v3796
      %v3812 = vmul.f32 1.0, %v3811
      %v3813 = vmul.f32 %v3757, %v3798
      %v3814 = vmul.f32 %v3758, %v3800
      %v3815 = vmul.f32 %v3759, %v3802
      %v3816 = vmul.f32 %v3760, %v3804
      %v3817 = vmul.f32 %v3761, %v3806
      %v3818 = vmul.f32 %v3762, %v3808
      %v3819 = vmul.f32 %v3763, %v3810
      %v3820 = vmul.f32 %v3764, %v3812
      %vm3821 = vcmask 64512
      %3822 = vst.msk [vmem:[%s467] sm:$0xff] %vm3821, %v3813
      %3823 = vst.msk [vmem:[%s467 + $0x8] sm:$0xff] %vm3821, %v3814
      %3824 = vst.msk [vmem:[%s467 + $0x10] sm:$0xff] %vm3821, %v3815
      %3825 = vst.msk [vmem:[%s467 + $0x18] sm:$0xff] %vm3821, %v3816
      %3826 = vst.msk [vmem:[%s467 + $0x20] sm:$0xff] %vm3821, %v3817
      %3827 = vst.msk [vmem:[%s467 + $0x28] sm:$0xff] %vm3821, %v3818
      %3828 = vst.msk [vmem:[%s467 + $0x30] sm:$0xff] %vm3821, %v3819
      %3829 = vst.msk [vmem:[%s467 + $0x38] sm:$0xff] %vm3821, %v3820
      %p3830 = scmp.lt.s32.totalorder %s25, 1
      %s3831 = scalar_select %p3830, %s25, 1
      %s3832 = smul.addr %s3831, 8
      %s3833 = smul.addr %s3832, 8
      %s3834 = scalar_lea.vmem %s14, %s3833
      // Predicated region
      $region77: #{tpu_custom_call.1} parent=75 // pred_check
        %p3835 = pneg %p342
      $region78: #{tpu_custom_call.1} parent=75 // pred_check_branch
        %3837 = sbr.rel (%p3835) target = $region80
      $region79: #{tpu_custom_call.1} parent=75 // pred_region
        _
      $region80: #{tpu_custom_call.1} parent=75 // pred_fallthru
        _
    $region76: #{tpu_custom_call.1} parent=5 // pred_fallthru
      _
    %p3838 = scmp.le.s32.totalorder 2, %s20
    // Predicated region
    $region81: #{tpu_custom_call.1} parent=5 // pred_check
      %p3839 = pneg %p3838
    $region82: #{tpu_custom_call.1} parent=5 // pred_check_branch
      %3841 = sbr.rel (%p3839) target = $region84
    $region83: #{tpu_custom_call.1} parent=5 // pred_region
      %s3842 = ssub.s32 %s20, 2
      // Predicated region
      $region85: #{tpu_custom_call.1} parent=83 // pred_check
        %p3843 = pneg %p348
      $region86: #{tpu_custom_call.1} parent=83 // pred_check_branch
        %3845 = sbr.rel (%p3843) target = $region88
      $region87: #{tpu_custom_call.1} parent=83 // pred_region
        %p3846 = scmp.lt.s32.totalorder %s26, 1
        %s3847 = scalar_select %p3846, %s26, 1
        %s3848 = smul.addr %s3847, 8
        %s3849 = smul.addr %s3848, 8
        %s3850 = scalar_lea.vmem %s14, %s3849
      $region88: #{tpu_custom_call.1} parent=83 // pred_fallthru
        _
    $region84: #{tpu_custom_call.1} parent=5 // pred_fallthru
      _
  $region6: #{tpu_custom_call.1} parent=0 // loop_footer
    %s24 = sadd.s32 1, %s20
  $region7: #{tpu_custom_call.1} parent=0 // loop_footer_branch
    %19 = sbr.rel target = $region3
  $region8: #{tpu_custom_call.1} parent=0 // loop_exit
    _

</llo_original>
